<compile_context>
chip_gen: v6e
topology: v6e:2x2x1
jax: 0.10.0
libtpu: 0.0.40
codegen_flags: <defaults>
</compile_context>

<pallas_src>
import jax
import jax.numpy as jnp
from jax.experimental import pallas as pl
from jax.experimental.pallas import tpu as pltpu


def _round_up(n, m):
    return ((n + m - 1) // m) * m


# ---------------------------------------------------------------------------
# Kernel
# ---------------------------------------------------------------------------
def critic_kernel(x_ref, w1_ref, b1_ref, w2_ref, b2_ref, w3_ref,
                  b3_ref, w4_ref, b4_ref, out_ref):
    # Resident weights (same block for every grid step -> DMA'd once per call).
    w1a = w1_ref[0:1, :]          # (1, H1P)  fc1 weights for input feature 0
    w1b = w1_ref[1:2, :]          # (1, H1P)  fc1 weights for input feature 1
    b1 = b1_ref[...]              # (1, H1P)
    w2 = w2_ref[...]              # (H1P, H2P) bf16
    b2 = b2_ref[...]              # (1, H2P)
    w3 = w3_ref[...]              # (1, H2P)  fc3 weight as a lane-dense row
    b3 = b3_ref[0]                # scalar (SMEM)
    b4 = b4_ref[0]                # scalar (SMEM)

    x = x_ref[...]                # (TS, 8): row s = state s's (4,2) input, row-major

    y = None
    # Static unroll over the 4 rows of each state (the torch (4,2) input).
    for j in range(4):
        # fc1 on the VPU: K=2 is pure MXU overhead -> two broadcast mults + add.
        h1 = jnp.maximum(
            x[:, 2 * j:2 * j + 1] * w1a
            + x[:, 2 * j + 1:2 * j + 2] * w1b
            + b1, 0.0)                                        # (TS, H1P) f32
        # fc2 on the MXU: bf16 operands, f32 accumulation.
        h2 = jnp.dot(h1.astype(jnp.bfloat16), w2,
                     preferred_element_type=jnp.float32) + b2
        h2 = jnp.maximum(h2, 0.0)                             # (TS, H2P) f32
        # fc3 fused with fc4: VPU multiply + XLU lane reduce instead of an
        # N=1 MXU matmul with a lane-sparse (.,1) result.
        z = jnp.sum(h2 * w3, axis=-1, keepdims=True) + b3     # (TS, 1)
        h3 = jnp.maximum(z, 0.0)
        contrib = w4_ref[j] * h3                              # SMEM scalar * (TS,1)
        y = contrib if y is None else y + contrib
    y = y + b4                                                # (TS, 1) critic values

    # Lane-dense, unmasked store: broadcast the per-state column across lanes.
    out_ref[...] = jnp.broadcast_to(y, out_ref.shape)


# ---------------------------------------------------------------------------
# Wrappers
# ---------------------------------------------------------------------------
def critic_forward_batched(x_states, kparams, *, states_per_block=128):
    """Evaluate the critic on S independent states. x_states: (S, 4, 2) -> (S,)."""
    S = x_states.shape[0]
    assert x_states.shape[1:] == (4, 2)
    ts = states_per_block
    assert ts % 8 == 0 and S % ts == 0

    w1k, b1k, w2k, b2k, w3k, b3k, w4k, b4k = kparams
    h1p = w1k.shape[1]
    h2p = w2k.shape[1]

    # Row s = state s's (4,2) input flattened row-major -> columns [2j, 2j+1].
    x2d = x_states.reshape(S, 8)

    smem = pltpu.MemorySpace.SMEM
    out = pl.pallas_call(
        critic_kernel,
        out_shape=jax.ShapeDtypeStruct((S, 128), jnp.float32),
        grid=(S // ts,),
        in_specs=[
            pl.BlockSpec((ts, 8), lambda i: (i, 0)),      # x: one block of states/step
            pl.BlockSpec((2, h1p), lambda i: (0, 0)),     # w1 (resident)
            pl.BlockSpec((1, h1p), lambda i: (0, 0)),     # b1 (resident)
            pl.BlockSpec((h1p, h2p), lambda i: (0, 0)),   # w2 bf16 (resident)
            pl.BlockSpec((1, h2p), lambda i: (0, 0)),     # b2 (resident)
            pl.BlockSpec((1, h2p), lambda i: (0, 0)),     # w3 row (resident)
            pl.BlockSpec(memory_space=smem),              # b3 scalar
            pl.BlockSpec(memory_space=smem),              # w4 (4 scalars)
            pl.BlockSpec(memory_space=smem),              # b4 scalar
        ],
        out_specs=pl.BlockSpec((ts, 128), lambda i: (i, 0)),
        compiler_params=pltpu.CompilerParams(
            dimension_semantics=("parallel",)),
    )(x2d, w1k, b1k, w2k, b2k, w3k, b3k, w4k, b4k)
    return out[:, 0]                                       # (S,)


def critic_forward(x, kparams):
    """Single-state forward matching CriticNetwork.forward: (4, 2) -> (1, 1)."""
    x_pad = jnp.zeros((8, 4, 2), x.dtype).at[0].set(x)     # pad batch to a tile
    y = critic_forward_batched(x_pad, kparams, states_per_block=8)
    return y[0].reshape(1, 1)


# ---------------------------------------------------------------------------
# Parameters (synthetic, matching the module's init scheme) + packing
# ---------------------------------------------------------------------------
def make_params(key, hidden1=400, hidden2=300, init_w=3e-4):
    """PyTorch-layout float32 params: weights (out,in), biases (out,)."""
    ks = jax.random.split(key, 8)

    def unif(k, shape, bound):
        return jax.random.uniform(k, shape, jnp.float32, minval=-bound, maxval=bound)

    w1 = unif(ks[0], (hidden1, 2), 1.0 / hidden1 ** 0.5)       # init_weight(f=hidden1)
    b1 = unif(ks[1], (hidden1,), 1.0 / 2.0 ** 0.5)             # default Linear bias
    w2 = unif(ks[2], (hidden2, hidden1), 1.0 / hidden2 ** 0.5) # init_weight(f=hidden2)
    b2 = unif(ks[3], (hidden2,), 1.0 / hidden1 ** 0.5)
    w3 = unif(ks[4], (1, hidden2), init_w)                     # uniform(-init_w, init_w)
    b3 = unif(ks[5], (1,), 1.0 / hidden2 ** 0.5)
    w4 = unif(ks[6], (1, 4), 0.5)                              # default init, fan_in=4
    b4 = unif(ks[7], (1,), 0.5)
    return (w1, b1, w2, b2, w3, b3, w4, b4)


def pack_kernel_params(tparams):
    """Transpose to (in,out), zero-pad hidden dims to lane multiples, bf16 w2."""
    w1, b1, w2, b2, w3, b3, w4, b4 = tparams
    h1, h2 = w1.shape[0], w2.shape[0]
    h1p, h2p = _round_up(h1, 128), _round_up(h2, 128)

    w1k = jnp.zeros((2, h1p), jnp.float32).at[:, :h1].set(w1.T)
    b1k = jnp.zeros((1, h1p), jnp.float32).at[:, :h1].set(b1[None, :])
    w2k = jnp.zeros((h1p, h2p), jnp.float32).at[:h1, :h2].set(w2.T).astype(jnp.bfloat16)
    b2k = jnp.zeros((1, h2p), jnp.float32).at[:, :h2].set(b2[None, :])
    w3k = jnp.zeros((1, h2p), jnp.float32).at[:, :h2].set(w3)
    b3k = b3.reshape(1)
    w4k = w4.reshape(4)
    b4k = b4.reshape(1)
    return (w1k, b1k, w2k, b2k, w3k, b3k, w4k, b4k)


# ---------------------------------------------------------------------------
# Pure-JAX reference reproducing the PyTorch forward
# ---------------------------------------------------------------------------
def reference_forward(x_states, tparams, *, quantize_w2):
    w1, b1, w2, b2, w3, b3, w4, b4 = tparams
    w2_use = w2.astype(jnp.bfloat16) if quantize_w2 else w2

    def one(xs):                                       # xs: (4, 2)
        h = jnp.maximum(xs @ w1.T + b1, 0.0)           # (4, H1)
        if quantize_w2:
            h2 = jnp.dot(h.astype(jnp.bfloat16), w2_use.T,
                         preferred_element_type=jnp.float32) + b2
        else:
            h2 = h @ w2_use.T + b2
        h2 = jnp.maximum(h2, 0.0)                      # (4, H2)
        y = jnp.maximum(h2 @ w3.T + b3, 0.0)           # (4, 1)
        y = y.reshape(1, 4)                            # torch reshape((1, 4))
        return (y @ w4.T + b4)[0, 0]                   # (1, 1) -> scalar

    return jax.vmap(one)(x_states)


if __name__ == "__main__":
    key = jax.random.PRNGKey(0)
    k_x, k_p = jax.random.split(key)

    S = 256                              # states batched into one pallas_call
    hidden1, hidden2 = 400, 300          # module defaults
    x_states = jax.random.normal(k_x, (S, 4, 2), jnp.float32)

    tparams = make_params(k_p, hidden1, hidden2)
    kparams = pack_kernel_params(tparams)

    # Batched path.
    out = critic_forward_batched(x_states, kparams, states_per_block=128)
    out = jax.block_until_ready(out)
    assert out.shape == (S,)

    ref_q = reference_forward(x_states, tparams, quantize_w2=True)   # same bf16 storage
    ref_f = reference_forward(x_states, tparams, quantize_w2=False)  # full f32 module math
    assert jnp.allclose(out, ref_q, atol=1e-3, rtol=1e-3), (out[:4], ref_q[:4])
    assert jnp.allclose(out, ref_f, atol=1e-2, rtol=1e-2), (out[:4], ref_f[:4])

    # Single-state path: exact module signature (4,2) -> (1,1).
    y1 = jax.block_until_ready(critic_forward(x_states[0], kparams))
    assert y1.shape == (1, 1)
    assert jnp.allclose(y1[0, 0], ref_q[0], atol=1e-3, rtol=1e-3), (y1, ref_q[0])

    print("KERNEL_OK")
</pallas_src>

<mosaic_0001>
module attributes {stable_mosaic.version = 11 : i64} {
  func.func @critic_kernel(%arg0: i32, %arg1: memref<128x8xf32, #tpu.memory_space<vmem>>, %arg2: memref<2x512xf32, #tpu.memory_space<vmem>>, %arg3: memref<1x512xf32, #tpu.memory_space<vmem>>, %arg4: memref<512x384xbf16, #tpu.memory_space<vmem>>, %arg5: memref<1x384xf32, #tpu.memory_space<vmem>>, %arg6: memref<1x384xf32, #tpu.memory_space<vmem>>, %arg7: memref<1xf32, #tpu.memory_space<smem>>, %arg8: memref<4xf32, #tpu.memory_space<smem>>, %arg9: memref<1xf32, #tpu.memory_space<smem>>, %arg10: memref<128x128xf32, #tpu.memory_space<vmem>>) attributes {dimension_semantics = [#tpu.dimension_semantics<parallel>], iteration_bounds = array<i64: 2>, scalar_prefetch = 0 : i64, scratch_operands = 0 : i64, tpu.core_type = #tpu.core_type<tc>, window_params = [{transform_indices = @transform_0, window_bounds = array<i64: 128, 8>}, {pipeline_mode = #tpu.pipeline_mode<synchronous>, transform_indices = @transform_1, window_bounds = array<i64: 2, 512>}, {pipeline_mode = #tpu.pipeline_mode<synchronous>, transform_indices = @transform_2, window_bounds = array<i64: 1, 512>}, {pipeline_mode = #tpu.pipeline_mode<synchronous>, transform_indices = @transform_3, window_bounds = array<i64: 512, 384>}, {pipeline_mode = #tpu.pipeline_mode<synchronous>, transform_indices = @transform_4, window_bounds = array<i64: 1, 384>}, {pipeline_mode = #tpu.pipeline_mode<synchronous>, transform_indices = @transform_5, window_bounds = array<i64: 1, 384>}, {transform_indices = @transform_6, window_bounds = array<i64: 1>}, {transform_indices = @transform_7, window_bounds = array<i64: 4>}, {transform_indices = @transform_8, window_bounds = array<i64: 1>}, {transform_indices = @transform_9, window_bounds = array<i64: 128, 128>}]} {
    %c0 = arith.constant 0 : index
    %c0_0 = arith.constant 0 : index
    %0 = vector.load %arg2[%c0, %c0_0] : memref<2x512xf32, #tpu.memory_space<vmem>>, vector<1x512xf32>
    %c1 = arith.constant 1 : index
    %c0_1 = arith.constant 0 : index
    %1 = vector.load %arg2[%c1, %c0_1] : memref<2x512xf32, #tpu.memory_space<vmem>>, vector<1x512xf32>
    %c0_2 = arith.constant 0 : index
    %c0_3 = arith.constant 0 : index
    %2 = vector.load %arg3[%c0_2, %c0_3] : memref<1x512xf32, #tpu.memory_space<vmem>>, vector<1x512xf32>
    %c0_4 = arith.constant 0 : index
    %c0_5 = arith.constant 0 : index
    %3 = vector.load %arg4[%c0_4, %c0_5] : memref<512x384xbf16, #tpu.memory_space<vmem>>, vector<512x384xbf16>
    %c0_6 = arith.constant 0 : index
    %c0_7 = arith.constant 0 : index
    %4 = vector.load %arg5[%c0_6, %c0_7] : memref<1x384xf32, #tpu.memory_space<vmem>>, vector<1x384xf32>
    %c0_8 = arith.constant 0 : index
    %c0_9 = arith.constant 0 : index
    %5 = vector.load %arg6[%c0_8, %c0_9] : memref<1x384xf32, #tpu.memory_space<vmem>>, vector<1x384xf32>
    %c0_10 = arith.constant 0 : index
    %6 = memref.load %arg7[%c0_10] : memref<1xf32, #tpu.memory_space<smem>>
    %c0_11 = arith.constant 0 : index
    %7 = memref.load %arg9[%c0_11] : memref<1xf32, #tpu.memory_space<smem>>
    %c0_12 = arith.constant 0 : index
    %c0_13 = arith.constant 0 : index
    %8 = vector.load %arg1[%c0_12, %c0_13] : memref<128x8xf32, #tpu.memory_space<vmem>>, vector<128x8xf32>
    %9 = vector.extract_strided_slice %8 {offsets = [0, 0], sizes = [128, 1], strides = [1, 1]} : vector<128x8xf32> to vector<128x1xf32>
    %10 = vector.broadcast %9 : vector<128x1xf32> to vector<128x512xf32>
    %11 = vector.broadcast %0 : vector<1x512xf32> to vector<128x512xf32>
    %12 = arith.mulf %10, %11 : vector<128x512xf32>
    %13 = vector.extract_strided_slice %8 {offsets = [0, 1], sizes = [128, 1], strides = [1, 1]} : vector<128x8xf32> to vector<128x1xf32>
    %14 = vector.broadcast %13 : vector<128x1xf32> to vector<128x512xf32>
    %15 = vector.broadcast %1 : vector<1x512xf32> to vector<128x512xf32>
    %16 = arith.mulf %14, %15 : vector<128x512xf32>
    %17 = arith.addf %12, %16 : vector<128x512xf32>
    %18 = vector.broadcast %2 : vector<1x512xf32> to vector<128x512xf32>
    %19 = arith.addf %17, %18 : vector<128x512xf32>
    %cst = arith.constant 0.000000e+00 : f32
    %20 = vector.broadcast %cst : f32 to vector<128x512xf32>
    %21 = arith.maximumf %19, %20 : vector<128x512xf32>
    %22 = arith.truncf %21 : vector<128x512xf32> to vector<128x512xbf16>
    %cst_14 = arith.constant dense<0.000000e+00> : vector<128x384xf32>
    %23 = tpu.matmul %22, %3, %cst_14 {dimension_numbers = #tpu.dot_dimension_numbers<[1], [0], [0], [1], [0, 0, 1, 1], [], []>} : vector<128x512xbf16>, vector<512x384xbf16>, vector<128x384xf32> -> vector<128x384xf32>
    %24 = vector.broadcast %4 : vector<1x384xf32> to vector<128x384xf32>
    %25 = arith.addf %23, %24 : vector<128x384xf32>
    %cst_15 = arith.constant 0.000000e+00 : f32
    %26 = vector.broadcast %cst_15 : f32 to vector<128x384xf32>
    %27 = arith.maximumf %25, %26 : vector<128x384xf32>
    %28 = vector.broadcast %5 : vector<1x384xf32> to vector<128x384xf32>
    %29 = arith.mulf %27, %28 : vector<128x384xf32>
    %cst_16 = arith.constant dense<0.000000e+00> : vector<128xf32>
    %30 = vector.multi_reduction <add>, %29, %cst_16 [1] : vector<128x384xf32> to vector<128xf32>
    %31 = vector.shape_cast %30 : vector<128xf32> to vector<128x1xf32>
    %32 = vector.broadcast %6 : f32 to vector<128x1xf32>
    %33 = arith.addf %31, %32 : vector<128x1xf32>
    %cst_17 = arith.constant 0.000000e+00 : f32
    %34 = vector.broadcast %cst_17 : f32 to vector<128x1xf32>
    %35 = arith.maximumf %33, %34 : vector<128x1xf32>
    %c0_18 = arith.constant 0 : index
    %36 = memref.load %arg8[%c0_18] : memref<4xf32, #tpu.memory_space<smem>>
    %37 = vector.broadcast %36 : f32 to vector<128x1xf32>
    %38 = arith.mulf %37, %35 : vector<128x1xf32>
    %39 = vector.extract_strided_slice %8 {offsets = [0, 2], sizes = [128, 1], strides = [1, 1]} : vector<128x8xf32> to vector<128x1xf32>
    %40 = vector.broadcast %39 : vector<128x1xf32> to vector<128x512xf32>
    %41 = vector.broadcast %0 : vector<1x512xf32> to vector<128x512xf32>
    %42 = arith.mulf %40, %41 : vector<128x512xf32>
    %43 = vector.extract_strided_slice %8 {offsets = [0, 3], sizes = [128, 1], strides = [1, 1]} : vector<128x8xf32> to vector<128x1xf32>
    %44 = vector.broadcast %43 : vector<128x1xf32> to vector<128x512xf32>
    %45 = vector.broadcast %1 : vector<1x512xf32> to vector<128x512xf32>
    %46 = arith.mulf %44, %45 : vector<128x512xf32>
    %47 = arith.addf %42, %46 : vector<128x512xf32>
    %48 = vector.broadcast %2 : vector<1x512xf32> to vector<128x512xf32>
    %49 = arith.addf %47, %48 : vector<128x512xf32>
    %cst_19 = arith.constant 0.000000e+00 : f32
    %50 = vector.broadcast %cst_19 : f32 to vector<128x512xf32>
    %51 = arith.maximumf %49, %50 : vector<128x512xf32>
    %52 = arith.truncf %51 : vector<128x512xf32> to vector<128x512xbf16>
    %cst_20 = arith.constant dense<0.000000e+00> : vector<128x384xf32>
    %53 = tpu.matmul %52, %3, %cst_20 {dimension_numbers = #tpu.dot_dimension_numbers<[1], [0], [0], [1], [0, 0, 1, 1], [], []>} : vector<128x512xbf16>, vector<512x384xbf16>, vector<128x384xf32> -> vector<128x384xf32>
    %54 = vector.broadcast %4 : vector<1x384xf32> to vector<128x384xf32>
    %55 = arith.addf %53, %54 : vector<128x384xf32>
    %cst_21 = arith.constant 0.000000e+00 : f32
    %56 = vector.broadcast %cst_21 : f32 to vector<128x384xf32>
    %57 = arith.maximumf %55, %56 : vector<128x384xf32>
    %58 = vector.broadcast %5 : vector<1x384xf32> to vector<128x384xf32>
    %59 = arith.mulf %57, %58 : vector<128x384xf32>
    %cst_22 = arith.constant dense<0.000000e+00> : vector<128xf32>
    %60 = vector.multi_reduction <add>, %59, %cst_22 [1] : vector<128x384xf32> to vector<128xf32>
    %61 = vector.shape_cast %60 : vector<128xf32> to vector<128x1xf32>
    %62 = vector.broadcast %6 : f32 to vector<128x1xf32>
    %63 = arith.addf %61, %62 : vector<128x1xf32>
    %cst_23 = arith.constant 0.000000e+00 : f32
    %64 = vector.broadcast %cst_23 : f32 to vector<128x1xf32>
    %65 = arith.maximumf %63, %64 : vector<128x1xf32>
    %c1_24 = arith.constant 1 : index
    %66 = memref.load %arg8[%c1_24] : memref<4xf32, #tpu.memory_space<smem>>
    %67 = vector.broadcast %66 : f32 to vector<128x1xf32>
    %68 = arith.mulf %67, %65 : vector<128x1xf32>
    %69 = arith.addf %38, %68 : vector<128x1xf32>
    %70 = vector.extract_strided_slice %8 {offsets = [0, 4], sizes = [128, 1], strides = [1, 1]} : vector<128x8xf32> to vector<128x1xf32>
    %71 = vector.broadcast %70 : vector<128x1xf32> to vector<128x512xf32>
    %72 = vector.broadcast %0 : vector<1x512xf32> to vector<128x512xf32>
    %73 = arith.mulf %71, %72 : vector<128x512xf32>
    %74 = vector.extract_strided_slice %8 {offsets = [0, 5], sizes = [128, 1], strides = [1, 1]} : vector<128x8xf32> to vector<128x1xf32>
    %75 = vector.broadcast %74 : vector<128x1xf32> to vector<128x512xf32>
    %76 = vector.broadcast %1 : vector<1x512xf32> to vector<128x512xf32>
    %77 = arith.mulf %75, %76 : vector<128x512xf32>
    %78 = arith.addf %73, %77 : vector<128x512xf32>
    %79 = vector.broadcast %2 : vector<1x512xf32> to vector<128x512xf32>
    %80 = arith.addf %78, %79 : vector<128x512xf32>
    %cst_25 = arith.constant 0.000000e+00 : f32
    %81 = vector.broadcast %cst_25 : f32 to vector<128x512xf32>
    %82 = arith.maximumf %80, %81 : vector<128x512xf32>
    %83 = arith.truncf %82 : vector<128x512xf32> to vector<128x512xbf16>
    %cst_26 = arith.constant dense<0.000000e+00> : vector<128x384xf32>
    %84 = tpu.matmul %83, %3, %cst_26 {dimension_numbers = #tpu.dot_dimension_numbers<[1], [0], [0], [1], [0, 0, 1, 1], [], []>} : vector<128x512xbf16>, vector<512x384xbf16>, vector<128x384xf32> -> vector<128x384xf32>
    %85 = vector.broadcast %4 : vector<1x384xf32> to vector<128x384xf32>
    %86 = arith.addf %84, %85 : vector<128x384xf32>
    %cst_27 = arith.constant 0.000000e+00 : f32
    %87 = vector.broadcast %cst_27 : f32 to vector<128x384xf32>
    %88 = arith.maximumf %86, %87 : vector<128x384xf32>
    %89 = vector.broadcast %5 : vector<1x384xf32> to vector<128x384xf32>
    %90 = arith.mulf %88, %89 : vector<128x384xf32>
    %cst_28 = arith.constant dense<0.000000e+00> : vector<128xf32>
    %91 = vector.multi_reduction <add>, %90, %cst_28 [1] : vector<128x384xf32> to vector<128xf32>
    %92 = vector.shape_cast %91 : vector<128xf32> to vector<128x1xf32>
    %93 = vector.broadcast %6 : f32 to vector<128x1xf32>
    %94 = arith.addf %92, %93 : vector<128x1xf32>
    %cst_29 = arith.constant 0.000000e+00 : f32
    %95 = vector.broadcast %cst_29 : f32 to vector<128x1xf32>
    %96 = arith.maximumf %94, %95 : vector<128x1xf32>
    %c2 = arith.constant 2 : index
    %97 = memref.load %arg8[%c2] : memref<4xf32, #tpu.memory_space<smem>>
    %98 = vector.broadcast %97 : f32 to vector<128x1xf32>
    %99 = arith.mulf %98, %96 : vector<128x1xf32>
    %100 = arith.addf %69, %99 : vector<128x1xf32>
    %101 = vector.extract_strided_slice %8 {offsets = [0, 6], sizes = [128, 1], strides = [1, 1]} : vector<128x8xf32> to vector<128x1xf32>
    %102 = vector.broadcast %101 : vector<128x1xf32> to vector<128x512xf32>
    %103 = vector.broadcast %0 : vector<1x512xf32> to vector<128x512xf32>
    %104 = arith.mulf %102, %103 : vector<128x512xf32>
    %105 = vector.extract_strided_slice %8 {offsets = [0, 7], sizes = [128, 1], strides = [1, 1]} : vector<128x8xf32> to vector<128x1xf32>
    %106 = vector.broadcast %105 : vector<128x1xf32> to vector<128x512xf32>
    %107 = vector.broadcast %1 : vector<1x512xf32> to vector<128x512xf32>
    %108 = arith.mulf %106, %107 : vector<128x512xf32>
    %109 = arith.addf %104, %108 : vector<128x512xf32>
    %110 = vector.broadcast %2 : vector<1x512xf32> to vector<128x512xf32>
    %111 = arith.addf %109, %110 : vector<128x512xf32>
    %cst_30 = arith.constant 0.000000e+00 : f32
    %112 = vector.broadcast %cst_30 : f32 to vector<128x512xf32>
    %113 = arith.maximumf %111, %112 : vector<128x512xf32>
    %114 = arith.truncf %113 : vector<128x512xf32> to vector<128x512xbf16>
    %cst_31 = arith.constant dense<0.000000e+00> : vector<128x384xf32>
    %115 = tpu.matmul %114, %3, %cst_31 {dimension_numbers = #tpu.dot_dimension_numbers<[1], [0], [0], [1], [0, 0, 1, 1], [], []>} : vector<128x512xbf16>, vector<512x384xbf16>, vector<128x384xf32> -> vector<128x384xf32>
    %116 = vector.broadcast %4 : vector<1x384xf32> to vector<128x384xf32>
    %117 = arith.addf %115, %116 : vector<128x384xf32>
    %cst_32 = arith.constant 0.000000e+00 : f32
    %118 = vector.broadcast %cst_32 : f32 to vector<128x384xf32>
    %119 = arith.maximumf %117, %118 : vector<128x384xf32>
    %120 = vector.broadcast %5 : vector<1x384xf32> to vector<128x384xf32>
    %121 = arith.mulf %119, %120 : vector<128x384xf32>
    %cst_33 = arith.constant dense<0.000000e+00> : vector<128xf32>
    %122 = vector.multi_reduction <add>, %121, %cst_33 [1] : vector<128x384xf32> to vector<128xf32>
    %123 = vector.shape_cast %122 : vector<128xf32> to vector<128x1xf32>
    %124 = vector.broadcast %6 : f32 to vector<128x1xf32>
    %125 = arith.addf %123, %124 : vector<128x1xf32>
    %cst_34 = arith.constant 0.000000e+00 : f32
    %126 = vector.broadcast %cst_34 : f32 to vector<128x1xf32>
    %127 = arith.maximumf %125, %126 : vector<128x1xf32>
    %c3 = arith.constant 3 : index
    %128 = memref.load %arg8[%c3] : memref<4xf32, #tpu.memory_space<smem>>
    %129 = vector.broadcast %128 : f32 to vector<128x1xf32>
    %130 = arith.mulf %129, %127 : vector<128x1xf32>
    %131 = arith.addf %100, %130 : vector<128x1xf32>
    %132 = vector.broadcast %7 : f32 to vector<128x1xf32>
    %133 = arith.addf %131, %132 : vector<128x1xf32>
    %134 = vector.shape_cast %133 : vector<128x1xf32> to vector<128x1xf32>
    %135 = vector.broadcast %134 : vector<128x1xf32> to vector<128x128xf32>
    %c0_35 = arith.constant 0 : index
    %c0_36 = arith.constant 0 : index
    %136 = vector.load %arg10[%c0_35, %c0_36] : memref<128x128xf32, #tpu.memory_space<vmem>>, vector<128x128xf32>
    tpu.vector_store %arg10[%c0_35, %c0_36], %135 {strides = array<i32>} : memref<128x128xf32, #tpu.memory_space<vmem>>, vector<128x128xf32>,
    return
  }
  func.func @transform_0(%arg0: i32) -> (i32, i32) {
    %c0_i32 = arith.constant 0 : i32
    %c0_i32_0 = arith.constant 0 : i32
    return %arg0, %c0_i32 : i32, i32
  }
  func.func @transform_1(%arg0: i32) -> (i32, i32) {
    %c0_i32 = arith.constant 0 : i32
    %c0_i32_0 = arith.constant 0 : i32
    %c0_i32_1 = arith.constant 0 : i32
    return %c0_i32, %c0_i32_0 : i32, i32
  }
  func.func @transform_2(%arg0: i32) -> (i32, i32) {
    %c0_i32 = arith.constant 0 : i32
    %c0_i32_0 = arith.constant 0 : i32
    %c0_i32_1 = arith.constant 0 : i32
    return %c0_i32, %c0_i32_0 : i32, i32
  }
  func.func @transform_3(%arg0: i32) -> (i32, i32) {
    %c0_i32 = arith.constant 0 : i32
    %c0_i32_0 = arith.constant 0 : i32
    %c0_i32_1 = arith.constant 0 : i32
    return %c0_i32, %c0_i32_0 : i32, i32
  }
  func.func @transform_4(%arg0: i32) -> (i32, i32) {
    %c0_i32 = arith.constant 0 : i32
    %c0_i32_0 = arith.constant 0 : i32
    %c0_i32_1 = arith.constant 0 : i32
    return %c0_i32, %c0_i32_0 : i32, i32
  }
  func.func @transform_5(%arg0: i32) -> (i32, i32) {
    %c0_i32 = arith.constant 0 : i32
    %c0_i32_0 = arith.constant 0 : i32
    %c0_i32_1 = arith.constant 0 : i32
    return %c0_i32, %c0_i32_0 : i32, i32
  }
  func.func @transform_6(%arg0: i32) -> i32 {
    %c0_i32 = arith.constant 0 : i32
    %c0_i32_0 = arith.constant 0 : i32
    return %c0_i32 : i32
  }
  func.func @transform_7(%arg0: i32) -> i32 {
    %c0_i32 = arith.constant 0 : i32
    %c0_i32_0 = arith.constant 0 : i32
    return %c0_i32 : i32
  }
  func.func @transform_8(%arg0: i32) -> i32 {
    %c0_i32 = arith.constant 0 : i32
    %c0_i32_0 = arith.constant 0 : i32
    return %c0_i32 : i32
  }
  func.func @transform_9(%arg0: i32) -> (i32, i32) {
    %c0_i32 = arith.constant 0 : i32
    %c0_i32_0 = arith.constant 0 : i32
    return %arg0, %c0_i32 : i32, i32
  }
}

</mosaic_0001>

<llo_original>
// kernel: tpu_custom_call.1
$region0: #{tpu_custom_call.1}
  #allocation0 [shape = 'u32[]', space=smem, size = 0x4, offset = 0x4, fixed_abs, tag = 'smem constant byte address 0x4 - core index']
  #allocation1 [shape = 'u32[144,128]{1,0:T(1,128)}', space=vmem, size = 0x12000, scoped, tag = 'internal scratch']
  #allocation2 [shape = 'f32[1]{0:T(128)S(6)}', space=smem, size = 0x200, scoped, tag = 'scoped memory for tpu_custom_call.1']
  #allocation3 [shape = 'f32[1]{0:T(128)S(6)}', space=smem, size = 0x200, scoped, tag = 'scoped memory for tpu_custom_call.1']
  %s0 = inlined_call_operand.vmem [shape: f32[256,8], index: 0, kind: input, shape index: {}]
  %s1 = inlined_call_operand.vmem [shape: f32[2,512], index: 1, kind: input, shape index: {}]
  %s2 = inlined_call_operand.vmem [shape: f32[1,512], index: 2, kind: input, shape index: {}]
  %s3 = inlined_call_operand.hbm [shape: bf16[512,384], index: 3, kind: input, shape index: {}]
  %s4 = inlined_call_operand.vmem [shape: f32[1,384], index: 4, kind: input, shape index: {}]
  %s5 = inlined_call_operand.vmem [shape: f32[1,384], index: 5, kind: input, shape index: {}]
  %s6 = inlined_call_operand.<no memory space> [shape: f32[1], index: 6, kind: input, shape index: {}]
  %s7 = inlined_call_operand.vmem [shape: f32[4], index: 7, kind: input, shape index: {}]
  %s8 = inlined_call_operand.<no memory space> [shape: f32[1], index: 8, kind: input, shape index: {}]
  %s9 = inlined_call_operand.hbm [shape: f32[256,128], index: 9, kind: output, shape index: {}]
  %s10 = sld [smem:[#allocation0]]
  $region77: #{tpu_custom_call.1} parent=0
    _
  %s12 = ssub.s32 1, %s10
  %s13 = scalar_select 0, %s12, %s10
  %14 = sst [smem:[#allocation2]] %s6
  %15 = sst [smem:[#allocation3]] %s8
  $region1: #{tpu_custom_call.1} parent=0
    #allocation4 [shape = 'u8[393216]{0}', space=vmem, size = 0x60000, scoped, tag = 'input window, operand 3, single buffered']
    #allocation5 [shape = 's32[2]{0}', space=sflag, size = 0x8, scoped, tag = 'scoped memory for tpu_custom_call.1']
    #allocation6 [shape = 's32[2]{0}', space=sflag, size = 0x8, scoped, tag = 'scoped memory for tpu_custom_call.1']
    #allocation7 [shape = 's32[2]{0}', space=sflag, size = 0x8, scoped, tag = 'scoped memory for tpu_custom_call.1']
    #allocation8 [shape = 'u8[512]{0}', space=smem, size = 0x200, scoped, tag = 'input window, operand 7, single buffered']
    #allocation9 [shape = 'u8[131072]{0}', space=vmem, size = 0x20000, scoped, tag = 'output window, operand 0']
    %16 = vsyncpa [#allocation5], 0
    %17 = vsyncpa [#allocation7], 0
    %18 = vsyncpa [#allocation6], 0
    %s19 = scalar_lea.sflag [#allocation6], 1
    %20 = vsyncpa %s19, 0
    loop: start=0, step=1, limit=4
    $region2: #{tpu_custom_call.1} parent=1 // loop_pre_header
      _
    $region3: #{tpu_custom_call.1} parent=1 // loop_header
      %s22 = sphi 0, %s26
      %p23 = scmp.ge.s32.totalorder %s22, 4
      %s32 = sphi 0, %s34
      %s35 = sphi 0, %s32
      %s36 = sphi 0, %s35
      %s52 = sphi 0, %s36
      %s56 = sphi 0, %s56
      %s58 = sphi 0, %s56
      %s59 = sphi 0, %s58
      %s73 = sphi 0, %s59
      %s77 = sphi 0, %s77
      %s79 = sphi 0, %s77
      %s80 = sphi 0, %s79
      %s94 = sphi 0, %s80
      %s98 = sphi 0, %s98
      %s100 = sphi 0, %s98
      %s101 = sphi 0, %s100
      %s115 = sphi 0, %s101
      %s119 = sphi 0, %s119
      %s121 = sphi 0, %s119
      %s122 = sphi 0, %s121
      %s136 = sphi 0, %s122
      %s140 = sphi 0, %s140
      %s142 = sphi 0, %s140
      %s143 = sphi 0, %s142
      %s157 = sphi 0, %s143
      %s161 = sphi 0, %s161
      %s163 = sphi 0, %s161
      %s164 = sphi 0, %s163
      %s178 = sphi 0, %s164
      %s182 = sphi 0, %s182
      %s184 = sphi 0, %s182
      %s185 = sphi 0, %s184
      %s199 = sphi 0, %s185
      %s203 = sphi 0, %s203
      %s205 = sphi 0, %s203
      %s206 = sphi 0, %s205
      %s220 = sphi 0, %s206
      %s226 = sphi 0, %s228
      %s229 = sphi 0, %s226
      %s230 = sphi 0, %s229
      %s246 = sphi 0, %s230
    $region4: #{tpu_custom_call.1} parent=1 // loop_header_branch
      %25 = sbr.rel (%p23) target = $region8
    $region5: #{tpu_custom_call.1} parent=1 // loop_body
      %s27 = ssub.s32 %s22, 1
      %s28 = ssub.s32 %s22, 2
      %s29 = sadd.s32 %s22, 1
      %s30 = ssub.s32 %s22, %s29
      %p31 = scmp.eq.s32.totalorder %s30, 0
      %s33 = sadd.s32 %s32, 1
      %s34 = scalar_select %p31, %s32, %s33
      %p37 = pneg %p31
      %p38 = scmp.eq.s32.totalorder %s22, 1
      %p39 = por %p37, %p38
      %p40 = scmp.ne.s32.totalorder %s32, %s35
      %p41 = scmp.eq.s32.totalorder %s22, 0
      %p42 = por %p40, %p41
      %p43 = scmp.ne.s32.totalorder %s32, %s35
      %p44 = scmp.eq.s32.totalorder %s27, 1
      %p45 = por %p43, %p44
      %p46 = scmp.ne.s32.totalorder %s35, %s36
      %p47 = scmp.eq.s32.totalorder %s27, 0
      %p48 = por %p46, %p47
      %p49 = scmp.ne.s32.totalorder %s35, %s36
      %p50 = scmp.eq.s32.totalorder %s28, 1
      %p51 = por %p49, %p50
      %p53 = scmp.ne.s32.totalorder %s36, %s52
      %p54 = scmp.eq.s32.totalorder %s28, 0
      %p55 = por %p53, %p54
      %s57 = sadd.s32 %s56, 1
      %p60 = scmp.eq.s32.totalorder %s22, 1
      %p61 = scmp.ne.s32.totalorder %s56, %s58
      %p62 = scmp.eq.s32.totalorder %s22, 0
      %p63 = por %p61, %p62
      %p64 = scmp.ne.s32.totalorder %s56, %s58
      %p65 = scmp.eq.s32.totalorder %s27, 1
      %p66 = por %p64, %p65
      %p67 = scmp.ne.s32.totalorder %s58, %s59
      %p68 = scmp.eq.s32.totalorder %s27, 0
      %p69 = por %p67, %p68
      %p70 = scmp.ne.s32.totalorder %s58, %s59
      %p71 = scmp.eq.s32.totalorder %s28, 1
      %p72 = por %p70, %p71
      %p74 = scmp.ne.s32.totalorder %s59, %s73
      %p75 = scmp.eq.s32.totalorder %s28, 0
      %p76 = por %p74, %p75
      %s78 = sadd.s32 %s77, 1
      %p81 = scmp.eq.s32.totalorder %s22, 1
      %p82 = scmp.ne.s32.totalorder %s77, %s79
      %p83 = scmp.eq.s32.totalorder %s22, 0
      %p84 = por %p82, %p83
      %p85 = scmp.ne.s32.totalorder %s77, %s79
      %p86 = scmp.eq.s32.totalorder %s27, 1
      %p87 = por %p85, %p86
      %p88 = scmp.ne.s32.totalorder %s79, %s80
      %p89 = scmp.eq.s32.totalorder %s27, 0
      %p90 = por %p88, %p89
      %p91 = scmp.ne.s32.totalorder %s79, %s80
      %p92 = scmp.eq.s32.totalorder %s28, 1
      %p93 = por %p91, %p92
      %p95 = scmp.ne.s32.totalorder %s80, %s94
      %p96 = scmp.eq.s32.totalorder %s28, 0
      %p97 = por %p95, %p96
      %s99 = sadd.s32 %s98, 1
      %p102 = scmp.eq.s32.totalorder %s22, 1
      %p103 = scmp.ne.s32.totalorder %s98, %s100
      %p104 = scmp.eq.s32.totalorder %s22, 0
      %p105 = por %p103, %p104
      %p106 = scmp.ne.s32.totalorder %s98, %s100
      %p107 = scmp.eq.s32.totalorder %s27, 1
      %p108 = por %p106, %p107
      %p109 = scmp.ne.s32.totalorder %s100, %s101
      %p110 = scmp.eq.s32.totalorder %s27, 0
      %p111 = por %p109, %p110
      %p112 = scmp.ne.s32.totalorder %s100, %s101
      %p113 = scmp.eq.s32.totalorder %s28, 1
      %p114 = por %p112, %p113
      %p116 = scmp.ne.s32.totalorder %s101, %s115
      %p117 = scmp.eq.s32.totalorder %s28, 0
      %p118 = por %p116, %p117
      %s120 = sadd.s32 %s119, 1
      %p123 = scmp.eq.s32.totalorder %s22, 1
      %p124 = scmp.ne.s32.totalorder %s119, %s121
      %p125 = scmp.eq.s32.totalorder %s22, 0
      %p126 = por %p124, %p125
      %p127 = scmp.ne.s32.totalorder %s119, %s121
      %p128 = scmp.eq.s32.totalorder %s27, 1
      %p129 = por %p127, %p128
      %p130 = scmp.ne.s32.totalorder %s121, %s122
      %p131 = scmp.eq.s32.totalorder %s27, 0
      %p132 = por %p130, %p131
      %p133 = scmp.ne.s32.totalorder %s121, %s122
      %p134 = scmp.eq.s32.totalorder %s28, 1
      %p135 = por %p133, %p134
      %p137 = scmp.ne.s32.totalorder %s122, %s136
      %p138 = scmp.eq.s32.totalorder %s28, 0
      %p139 = por %p137, %p138
      %s141 = sadd.s32 %s140, 1
      %p144 = scmp.eq.s32.totalorder %s22, 1
      %p145 = scmp.ne.s32.totalorder %s140, %s142
      %p146 = scmp.eq.s32.totalorder %s22, 0
      %p147 = por %p145, %p146
      %p148 = scmp.ne.s32.totalorder %s140, %s142
      %p149 = scmp.eq.s32.totalorder %s27, 1
      %p150 = por %p148, %p149
      %p151 = scmp.ne.s32.totalorder %s142, %s143
      %p152 = scmp.eq.s32.totalorder %s27, 0
      %p153 = por %p151, %p152
      %p154 = scmp.ne.s32.totalorder %s142, %s143
      %p155 = scmp.eq.s32.totalorder %s28, 1
      %p156 = por %p154, %p155
      %p158 = scmp.ne.s32.totalorder %s143, %s157
      %p159 = scmp.eq.s32.totalorder %s28, 0
      %p160 = por %p158, %p159
      %s162 = sadd.s32 %s161, 1
      %p165 = scmp.eq.s32.totalorder %s22, 1
      %p166 = scmp.ne.s32.totalorder %s161, %s163
      %p167 = scmp.eq.s32.totalorder %s22, 0
      %p168 = por %p166, %p167
      %p169 = scmp.ne.s32.totalorder %s161, %s163
      %p170 = scmp.eq.s32.totalorder %s27, 1
      %p171 = por %p169, %p170
      %p172 = scmp.ne.s32.totalorder %s163, %s164
      %p173 = scmp.eq.s32.totalorder %s27, 0
      %p174 = por %p172, %p173
      %p175 = scmp.ne.s32.totalorder %s163, %s164
      %p176 = scmp.eq.s32.totalorder %s28, 1
      %p177 = por %p175, %p176
      %p179 = scmp.ne.s32.totalorder %s164, %s178
      %p180 = scmp.eq.s32.totalorder %s28, 0
      %p181 = por %p179, %p180
      %s183 = sadd.s32 %s182, 1
      %p186 = scmp.eq.s32.totalorder %s22, 1
      %p187 = scmp.ne.s32.totalorder %s182, %s184
      %p188 = scmp.eq.s32.totalorder %s22, 0
      %p189 = por %p187, %p188
      %p190 = scmp.ne.s32.totalorder %s182, %s184
      %p191 = scmp.eq.s32.totalorder %s27, 1
      %p192 = por %p190, %p191
      %p193 = scmp.ne.s32.totalorder %s184, %s185
      %p194 = scmp.eq.s32.totalorder %s27, 0
      %p195 = por %p193, %p194
      %p196 = scmp.ne.s32.totalorder %s184, %s185
      %p197 = scmp.eq.s32.totalorder %s28, 1
      %p198 = por %p196, %p197
      %p200 = scmp.ne.s32.totalorder %s185, %s199
      %p201 = scmp.eq.s32.totalorder %s28, 0
      %p202 = por %p200, %p201
      %s204 = sadd.s32 %s203, 1
      %p207 = scmp.eq.s32.totalorder %s22, 1
      %p208 = scmp.ne.s32.totalorder %s203, %s205
      %p209 = scmp.eq.s32.totalorder %s22, 0
      %p210 = por %p208, %p209
      %p211 = scmp.ne.s32.totalorder %s203, %s205
      %p212 = scmp.eq.s32.totalorder %s27, 1
      %p213 = por %p211, %p212
      %p214 = scmp.ne.s32.totalorder %s205, %s206
      %p215 = scmp.eq.s32.totalorder %s27, 0
      %p216 = por %p214, %p215
      %p217 = scmp.ne.s32.totalorder %s205, %s206
      %p218 = scmp.eq.s32.totalorder %s28, 1
      %p219 = por %p217, %p218
      %p221 = scmp.ne.s32.totalorder %s206, %s220
      %p222 = scmp.eq.s32.totalorder %s28, 0
      %p223 = por %p221, %p222
      %s224 = ssub.s32 %s22, %s29
      %p225 = scmp.eq.s32.totalorder %s224, 0
      %s227 = sadd.s32 %s226, 1
      %s228 = scalar_select %p225, %s226, %s227
      %p231 = pneg %p225
      %p232 = scmp.eq.s32.totalorder %s22, 1
      %p233 = por %p231, %p232
      %p234 = scmp.ne.s32.totalorder %s226, %s229
      %p235 = scmp.eq.s32.totalorder %s22, 0
      %p236 = por %p234, %p235
      %p237 = scmp.ne.s32.totalorder %s226, %s229
      %p238 = scmp.eq.s32.totalorder %s27, 1
      %p239 = por %p237, %p238
      %p240 = scmp.ne.s32.totalorder %s229, %s230
      %p241 = scmp.eq.s32.totalorder %s27, 0
      %p242 = por %p240, %p241
      %p243 = scmp.ne.s32.totalorder %s229, %s230
      %p244 = scmp.eq.s32.totalorder %s28, 1
      %p245 = por %p243, %p244
      %p247 = scmp.ne.s32.totalorder %s230, %s246
      %p248 = scmp.eq.s32.totalorder %s28, 0
      %p249 = por %p247, %p248
      %p250 = scmp.le.s32.totalorder 1, %s22
      %p251 = scmp.lt.s32.totalorder %s22, 3
      %p252 = pnand %p250, %p251
      %p253 = pneg %p252
      // Predicated region
      $region9: #{tpu_custom_call.1} parent=5 // pred_check
        _
      $region10: #{tpu_custom_call.1} parent=5 // pred_check_branch
        %255 = sbr.rel (%p252) target = $region12
      $region11: #{tpu_custom_call.1} parent=5 // pred_region
        %s256 = ssub.s32 %s22, 1
        // Predicated region
        $region13: #{tpu_custom_call.1} parent=11 // pred_check
          %p257 = pneg %p69
        $region14: #{tpu_custom_call.1} parent=11 // pred_check_branch
          %259 = sbr.rel (%p257) target = $region16
        $region15: #{tpu_custom_call.1} parent=11 // pred_region
          _
        $region16: #{tpu_custom_call.1} parent=11 // pred_fallthru
          _
        // Predicated region
        $region17: #{tpu_custom_call.1} parent=11 // pred_check
          %p260 = pneg %p90
        $region18: #{tpu_custom_call.1} parent=11 // pred_check_branch
          %262 = sbr.rel (%p260) target = $region20
        $region19: #{tpu_custom_call.1} parent=11 // pred_region
          _
        $region20: #{tpu_custom_call.1} parent=11 // pred_fallthru
          _
        // Predicated region
        $region21: #{tpu_custom_call.1} parent=11 // pred_check
          %p263 = pneg %p111
        $region22: #{tpu_custom_call.1} parent=11 // pred_check_branch
          %265 = sbr.rel (%p263) target = $region24
        $region23: #{tpu_custom_call.1} parent=11 // pred_region
          %s267 = ssub.s32 12288, 12288
          %268 = vsyncadd [#allocation5], %s267
          %s269 = sshll.u32 [#allocation4], 4
          %s270 = int_to_ptr.vmem [resolvable:$true] %s269
          %275 = dma.hbm_to_vmem [thread:$0]  %s3, 12288, %s270, [#allocation5], 192, 192, 12
        $region24: #{tpu_custom_call.1} parent=11 // pred_fallthru
          _
        // Predicated region
        $region25: #{tpu_custom_call.1} parent=11 // pred_check
          %p276 = pneg %p132
        $region26: #{tpu_custom_call.1} parent=11 // pred_check_branch
          %278 = sbr.rel (%p276) target = $region28
        $region27: #{tpu_custom_call.1} parent=11 // pred_region
          _
        $region28: #{tpu_custom_call.1} parent=11 // pred_fallthru
          _
        // Predicated region
        $region29: #{tpu_custom_call.1} parent=11 // pred_check
          %p279 = pneg %p153
        $region30: #{tpu_custom_call.1} parent=11 // pred_check_branch
          %281 = sbr.rel (%p279) target = $region32
        $region31: #{tpu_custom_call.1} parent=11 // pred_region
          _
        $region32: #{tpu_custom_call.1} parent=11 // pred_fallthru
          _
        // Predicated region
        $region33: #{tpu_custom_call.1} parent=11 // pred_check
          %p282 = pneg %p174
        $region34: #{tpu_custom_call.1} parent=11 // pred_check_branch
          %284 = sbr.rel (%p282) target = $region36
        $region35: #{tpu_custom_call.1} parent=11 // pred_region
          _
        $region36: #{tpu_custom_call.1} parent=11 // pred_fallthru
          _
        // Predicated region
        $region37: #{tpu_custom_call.1} parent=11 // pred_check
          %p285 = pneg %p195
        $region38: #{tpu_custom_call.1} parent=11 // pred_check_branch
          %287 = sbr.rel (%p285) target = $region40
        $region39: #{tpu_custom_call.1} parent=11 // pred_region
          %s289 = ssub.s32 16, 16
          %290 = vsyncadd [#allocation7], %s289
          %s292 = sshll.u32 %s7, 4
          %s293 = int_to_ptr.vmem [resolvable:$true] %s292
          %295 = dma.vmem_to_smem %s293, 16, [#allocation8], [#allocation7]
        $region40: #{tpu_custom_call.1} parent=11 // pred_fallthru
          _
        // Predicated region
        $region41: #{tpu_custom_call.1} parent=11 // pred_check
          %p296 = pneg %p216
        $region42: #{tpu_custom_call.1} parent=11 // pred_check_branch
          %298 = sbr.rel (%p296) target = $region44
        $region43: #{tpu_custom_call.1} parent=11 // pred_region
          _
        $region44: #{tpu_custom_call.1} parent=11 // pred_fallthru
          _
      $region12: #{tpu_custom_call.1} parent=5 // pred_fallthru
        _
      %p299 = scmp.lt.s32.totalorder %s22, 2
      // Predicated region
      $region45: #{tpu_custom_call.1} parent=5 // pred_check
        %p300 = pneg %p299
      $region46: #{tpu_custom_call.1} parent=5 // pred_check_branch
        %302 = sbr.rel (%p300) target = $region48
      $region47: #{tpu_custom_call.1} parent=5 // pred_region
        // Predicated region
        $region49: #{tpu_custom_call.1} parent=47 // pred_check
          %p303 = pneg %p42
        $region50: #{tpu_custom_call.1} parent=47 // pred_check_branch
          %305 = sbr.rel (%p303) target = $region52
        $region51: #{tpu_custom_call.1} parent=47 // pred_region
          %s306 = smul.u32 16, %s22
          %p307 = scmp.lt.s32.totalorder %s306, 31
          %s308 = scalar_select %p307, %s306, 31
          %s309 = smul.addr %s308, 8
          %s310 = scalar_lea.vmem %s0, %s309
          %s311 = smul.u32 16, %s22
        $region52: #{tpu_custom_call.1} parent=47 // pred_fallthru
          _
      $region48: #{tpu_custom_call.1} parent=5 // pred_fallthru
        _
      %p312 = scmp.le.s32.totalorder 1, %s22
      %p313 = scmp.lt.s32.totalorder %s22, 3
      %p314 = pnand %p312, %p313
      %p315 = pneg %p314
      // Predicated region
      $region53: #{tpu_custom_call.1} parent=5 // pred_check
        _
      $region54: #{tpu_custom_call.1} parent=5 // pred_check_branch
        %317 = sbr.rel (%p314) target = $region56
      $region55: #{tpu_custom_call.1} parent=5 // pred_region
        %s318 = ssub.s32 %s22, 1
        // Predicated region
        $region57: #{tpu_custom_call.1} parent=55 // pred_check
          %p319 = pneg %p111
        $region58: #{tpu_custom_call.1} parent=55 // pred_check_branch
          %321 = sbr.rel (%p319) target = $region60
        $region59: #{tpu_custom_call.1} parent=55 // pred_region
          %322 = dma.done [#allocation5], 12288
        $region60: #{tpu_custom_call.1} parent=55 // pred_fallthru
          _
        // Predicated region
        $region61: #{tpu_custom_call.1} parent=55 // pred_check
          %p323 = pneg %p195
        $region62: #{tpu_custom_call.1} parent=55 // pred_check_branch
          %325 = sbr.rel (%p323) target = $region64
        $region63: #{tpu_custom_call.1} parent=55 // pred_region
          %326 = dma.done [#allocation7], 16
        $region64: #{tpu_custom_call.1} parent=55 // pred_fallthru
          _
        %327 = sfence
        %s328 = smul.u32 16, %s27
        %p329 = scmp.lt.s32.totalorder %s328, 31
        %s330 = scalar_select %p329, %s328, 31
        %s331 = smul.addr %s330, 8
        %s332 = scalar_lea.vmem %s0, %s331
        %p333 = pneg %p48
        %p334 = pneg %p45
        %p335 = pneg %p69
        %p336 = pneg %p66
        %p337 = pneg %p90
        %p338 = pneg %p87
        %p339 = pneg %p111
        %p340 = pneg %p108
        %p341 = pneg %p132
        %p342 = pneg %p129
        %p343 = pneg %p153
        %p344 = pneg %p150
        %p345 = pneg %p174
        %p346 = pneg %p171
        %p347 = pneg %p195
        %p348 = pneg %p192
        %p349 = pneg %p216
        %p350 = pneg %p213
        %p351 = pneg %p242
        %p352 = pneg %p239
        %s353 = sand.u32 %s229, 1
        %s354 = scalar_lea.sflag [#allocation6], %s353
        %s355 = sand.u32 %s229, 1
        %s356 = smul.addr %s355, 128
        %s357 = scalar_lea.vmem [#allocation9], %s356
        %s358 = smul.u32 16, %s27
        %p359 = scmp.lt.s32.totalorder %s358, 31
        %s360 = scalar_select %p359, %s358, 31
        %s361 = smul.addr %s360, 8
        %s362 = scalar_lea.vmem %s0, %s361
        %s363 = smul.u32 16, %s27
        %s364 = smul.u32 16, %s27
        %v366 = vld [vmem:[%s1] ss:$2 sm:$0xf]
        %s367 = scalar_lea.vmem %s1, 1
        %v368 = vld [vmem:[%s367] ss:$2 sm:$0xf]
        %v369 = vld [vmem:[%s2] sm:$0xf]
        %v370 = vld [vmem:[#allocation4] sm:$0xff]
        %v371 = vld [vmem:[#allocation4 + $0x8] sm:$0xf]
        %v372 = vld [vmem:[#allocation4 + $0xc] sm:$0xff]
        %v373 = vld [vmem:[#allocation4 + $0x14] sm:$0xf]
        %v374 = vld [vmem:[#allocation4 + $0x18] sm:$0xff]
        %v375 = vld [vmem:[#allocation4 + $0x20] sm:$0xf]
        %v376 = vld [vmem:[#allocation4 + $0x24] sm:$0xff]
        %v377 = vld [vmem:[#allocation4 + $0x2c] sm:$0xf]
        %v378 = vld [vmem:[#allocation4 + $0x30] sm:$0xff]
        %v379 = vld [vmem:[#allocation4 + $0x38] sm:$0xf]
        %v380 = vld [vmem:[#allocation4 + $0x3c] sm:$0xff]
        %v381 = vld [vmem:[#allocation4 + $0x44] sm:$0xf]
        %v382 = vld [vmem:[#allocation4 + $0x48] sm:$0xff]
        %v383 = vld [vmem:[#allocation4 + $0x50] sm:$0xf]
        %v384 = vld [vmem:[#allocation4 + $0x54] sm:$0xff]
        %v385 = vld [vmem:[#allocation4 + $0x5c] sm:$0xf]
        %v386 = vld [vmem:[#allocation4 + $0x60] sm:$0xff]
        %v387 = vld [vmem:[#allocation4 + $0x68] sm:$0xf]
        %v388 = vld [vmem:[#allocation4 + $0x6c] sm:$0xff]
        %v389 = vld [vmem:[#allocation4 + $0x74] sm:$0xf]
        %v390 = vld [vmem:[#allocation4 + $0x78] sm:$0xff]
        %v391 = vld [vmem:[#allocation4 + $0x80] sm:$0xf]
        %v392 = vld [vmem:[#allocation4 + $0x84] sm:$0xff]
        %v393 = vld [vmem:[#allocation4 + $0x8c] sm:$0xf]
        %v394 = vld [vmem:[#allocation4 + $0x90] sm:$0xff]
        %v395 = vld [vmem:[#allocation4 + $0x98] sm:$0xf]
        %v396 = vld [vmem:[#allocation4 + $0x9c] sm:$0xff]
        %v397 = vld [vmem:[#allocation4 + $0xa4] sm:$0xf]
        %v398 = vld [vmem:[#allocation4 + $0xa8] sm:$0xff]
        %v399 = vld [vmem:[#allocation4 + $0xb0] sm:$0xf]
        %v400 = vld [vmem:[#allocation4 + $0xb4] sm:$0xff]
        %v401 = vld [vmem:[#allocation4 + $0xbc] sm:$0xf]
        %v402 = vld [vmem:[#allocation4 + $0xc0] sm:$0xff]
        %v403 = vld [vmem:[#allocation4 + $0xc8] sm:$0xf]
        %v404 = vld [vmem:[#allocation4 + $0xcc] sm:$0xff]
        %v405 = vld [vmem:[#allocation4 + $0xd4] sm:$0xf]
        %v406 = vld [vmem:[#allocation4 + $0xd8] sm:$0xff]
        %v407 = vld [vmem:[#allocation4 + $0xe0] sm:$0xf]
        %v408 = vld [vmem:[#allocation4 + $0xe4] sm:$0xff]
        %v409 = vld [vmem:[#allocation4 + $0xec] sm:$0xf]
        %v410 = vld [vmem:[#allocation4 + $0xf0] sm:$0xff]
        %v411 = vld [vmem:[#allocation4 + $0xf8] sm:$0xf]
        %v412 = vld [vmem:[#allocation4 + $0xfc] sm:$0xff]
        %v413 = vld [vmem:[#allocation4 + $0x104] sm:$0xf]
        %v414 = vld [vmem:[#allocation4 + $0x108] sm:$0xff]
        %v415 = vld [vmem:[#allocation4 + $0x110] sm:$0xf]
        %v416 = vld [vmem:[#allocation4 + $0x114] sm:$0xff]
        %v417 = vld [vmem:[#allocation4 + $0x11c] sm:$0xf]
        %v418 = vld [vmem:[#allocation4 + $0x120] sm:$0xff]
        %v419 = vld [vmem:[#allocation4 + $0x128] sm:$0xf]
        %v420 = vld [vmem:[#allocation4 + $0x12c] sm:$0xff]
        %v421 = vld [vmem:[#allocation4 + $0x134] sm:$0xf]
        %v422 = vld [vmem:[#allocation4 + $0x138] sm:$0xff]
        %v423 = vld [vmem:[#allocation4 + $0x140] sm:$0xf]
        %v424 = vld [vmem:[#allocation4 + $0x144] sm:$0xff]
        %v425 = vld [vmem:[#allocation4 + $0x14c] sm:$0xf]
        %v426 = vld [vmem:[#allocation4 + $0x150] sm:$0xff]
        %v427 = vld [vmem:[#allocation4 + $0x158] sm:$0xf]
        %v428 = vld [vmem:[#allocation4 + $0x15c] sm:$0xff]
        %v429 = vld [vmem:[#allocation4 + $0x164] sm:$0xf]
        %v430 = vld [vmem:[#allocation4 + $0x168] sm:$0xff]
        %v431 = vld [vmem:[#allocation4 + $0x170] sm:$0xf]
        %v432 = vld [vmem:[#allocation4 + $0x174] sm:$0xff]
        %v433 = vld [vmem:[#allocation4 + $0x17c] sm:$0xf]
        %v434 = vld [vmem:[#allocation4 + $0x180] sm:$0xff]
        %v435 = vld [vmem:[#allocation4 + $0x188] sm:$0xf]
        %v436 = vld [vmem:[#allocation4 + $0x18c] sm:$0xff]
        %v437 = vld [vmem:[#allocation4 + $0x194] sm:$0xf]
        %v438 = vld [vmem:[#allocation4 + $0x198] sm:$0xff]
        %v439 = vld [vmem:[#allocation4 + $0x1a0] sm:$0xf]
        %v440 = vld [vmem:[#allocation4 + $0x1a4] sm:$0xff]
        %v441 = vld [vmem:[#allocation4 + $0x1ac] sm:$0xf]
        %v442 = vld [vmem:[#allocation4 + $0x1b0] sm:$0xff]
        %v443 = vld [vmem:[#allocation4 + $0x1b8] sm:$0xf]
        %v444 = vld [vmem:[#allocation4 + $0x1bc] sm:$0xff]
        %v445 = vld [vmem:[#allocation4 + $0x1c4] sm:$0xf]
        %v446 = vld [vmem:[#allocation4 + $0x1c8] sm:$0xff]
        %v447 = vld [vmem:[#allocation4 + $0x1d0] sm:$0xf]
        %v448 = vld [vmem:[#allocation4 + $0x1d4] sm:$0xff]
        %v449 = vld [vmem:[#allocation4 + $0x1dc] sm:$0xf]
        %v450 = vld [vmem:[#allocation4 + $0x1e0] sm:$0xff]
        %v451 = vld [vmem:[#allocation4 + $0x1e8] sm:$0xf]
        %v452 = vld [vmem:[#allocation4 + $0x1ec] sm:$0xff]
        %v453 = vld [vmem:[#allocation4 + $0x1f4] sm:$0xf]
        %v454 = vld [vmem:[#allocation4 + $0x1f8] sm:$0xff]
        %v455 = vld [vmem:[#allocation4 + $0x200] sm:$0xf]
        %v456 = vld [vmem:[#allocation4 + $0x204] sm:$0xff]
        %v457 = vld [vmem:[#allocation4 + $0x20c] sm:$0xf]
        %v458 = vld [vmem:[#allocation4 + $0x210] sm:$0xff]
        %v459 = vld [vmem:[#allocation4 + $0x218] sm:$0xf]
        %v460 = vld [vmem:[#allocation4 + $0x21c] sm:$0xff]
        %v461 = vld [vmem:[#allocation4 + $0x224] sm:$0xf]
        %v462 = vld [vmem:[#allocation4 + $0x228] sm:$0xff]
        %v463 = vld [vmem:[#allocation4 + $0x230] sm:$0xf]
        %v464 = vld [vmem:[#allocation4 + $0x234] sm:$0xff]
        %v465 = vld [vmem:[#allocation4 + $0x23c] sm:$0xf]
        %v466 = vld [vmem:[#allocation4 + $0x240] sm:$0xff]
        %v467 = vld [vmem:[#allocation4 + $0x248] sm:$0xf]
        %v468 = vld [vmem:[#allocation4 + $0x24c] sm:$0xff]
        %v469 = vld [vmem:[#allocation4 + $0x254] sm:$0xf]
        %v470 = vld [vmem:[#allocation4 + $0x258] sm:$0xff]
        %v471 = vld [vmem:[#allocation4 + $0x260] sm:$0xf]
        %v472 = vld [vmem:[#allocation4 + $0x264] sm:$0xff]
        %v473 = vld [vmem:[#allocation4 + $0x26c] sm:$0xf]
        %v474 = vld [vmem:[#allocation4 + $0x270] sm:$0xff]
        %v475 = vld [vmem:[#allocation4 + $0x278] sm:$0xf]
        %v476 = vld [vmem:[#allocation4 + $0x27c] sm:$0xff]
        %v477 = vld [vmem:[#allocation4 + $0x284] sm:$0xf]
        %v478 = vld [vmem:[#allocation4 + $0x288] sm:$0xff]
        %v479 = vld [vmem:[#allocation4 + $0x290] sm:$0xf]
        %v480 = vld [vmem:[#allocation4 + $0x294] sm:$0xff]
        %v481 = vld [vmem:[#allocation4 + $0x29c] sm:$0xf]
        %v482 = vld [vmem:[#allocation4 + $0x2a0] sm:$0xff]
        %v483 = vld [vmem:[#allocation4 + $0x2a8] sm:$0xf]
        %v484 = vld [vmem:[#allocation4 + $0x2ac] sm:$0xff]
        %v485 = vld [vmem:[#allocation4 + $0x2b4] sm:$0xf]
        %v486 = vld [vmem:[#allocation4 + $0x2b8] sm:$0xff]
        %v487 = vld [vmem:[#allocation4 + $0x2c0] sm:$0xf]
        %v488 = vld [vmem:[#allocation4 + $0x2c4] sm:$0xff]
        %v489 = vld [vmem:[#allocation4 + $0x2cc] sm:$0xf]
        %v490 = vld [vmem:[#allocation4 + $0x2d0] sm:$0xff]
        %v491 = vld [vmem:[#allocation4 + $0x2d8] sm:$0xf]
        %v492 = vld [vmem:[#allocation4 + $0x2dc] sm:$0xff]
        %v493 = vld [vmem:[#allocation4 + $0x2e4] sm:$0xf]
        %v494 = vld [vmem:[#allocation4 + $0x2e8] sm:$0xff]
        %v495 = vld [vmem:[#allocation4 + $0x2f0] sm:$0xf]
        %v496 = vld [vmem:[#allocation4 + $0x2f4] sm:$0xff]
        %v497 = vld [vmem:[#allocation4 + $0x2fc] sm:$0xf]
        %v498 = vld [vmem:[%s4] sm:$0x7]
        %v499 = vld [vmem:[%s5] sm:$0x7]
        %s500 = sld [smem:[#allocation2]]
        %s501 = sld [smem:[#allocation3]]
        %v502 = vld [vmem:[%s362] sm:$0xff]
        %v503 = vld [vmem:[%s362 + $0x8] sm:$0xff]
        %v504 = vld [vmem:[%s362 + $0x10] sm:$0xff]
        %v505 = vld [vmem:[%s362 + $0x18] sm:$0xff]
        %v506 = vld [vmem:[%s362 + $0x20] sm:$0xff]
        %v507 = vld [vmem:[%s362 + $0x28] sm:$0xff]
        %v508 = vld [vmem:[%s362 + $0x30] sm:$0xff]
        %v509 = vld [vmem:[%s362 + $0x38] sm:$0xff]
        %v510 = vld [vmem:[%s362 + $0x40] sm:$0xff]
        %v511 = vld [vmem:[%s362 + $0x48] sm:$0xff]
        %v512 = vld [vmem:[%s362 + $0x50] sm:$0xff]
        %v513 = vld [vmem:[%s362 + $0x58] sm:$0xff]
        %v514 = vld [vmem:[%s362 + $0x60] sm:$0xff]
        %v515 = vld [vmem:[%s362 + $0x68] sm:$0xff]
        %v516 = vld [vmem:[%s362 + $0x70] sm:$0xff]
        %v517 = vld [vmem:[%s362 + $0x78] sm:$0xff]
        %519 = vset.pattern.permute.xlu0 0
        %520 = vperm.xlu0 %519, %v502
        %v521 = vpop.permute.xlu0 %520
        %524 = vset.pattern.permute.xlu0 0
        %525 = vperm.xlu0 %524, %v503
        %v526 = vpop.permute.xlu0 %525
        %529 = vset.pattern.permute.xlu0 0
        %530 = vperm.xlu0 %529, %v504
        %v531 = vpop.permute.xlu0 %530
        %534 = vset.pattern.permute.xlu0 0
        %535 = vperm.xlu0 %534, %v505
        %v536 = vpop.permute.xlu0 %535
        %539 = vset.pattern.permute.xlu0 0
        %540 = vperm.xlu0 %539, %v506
        %v541 = vpop.permute.xlu0 %540
        %544 = vset.pattern.permute.xlu0 0
        %545 = vperm.xlu0 %544, %v507
        %v546 = vpop.permute.xlu0 %545
        %549 = vset.pattern.permute.xlu0 0
        %550 = vperm.xlu0 %549, %v508
        %v551 = vpop.permute.xlu0 %550
        %554 = vset.pattern.permute.xlu0 0
        %555 = vperm.xlu0 %554, %v509
        %v556 = vpop.permute.xlu0 %555
        %559 = vset.pattern.permute.xlu0 0
        %560 = vperm.xlu0 %559, %v510
        %v561 = vpop.permute.xlu0 %560
        %564 = vset.pattern.permute.xlu0 0
        %565 = vperm.xlu0 %564, %v511
        %v566 = vpop.permute.xlu0 %565
        %569 = vset.pattern.permute.xlu0 0
        %570 = vperm.xlu0 %569, %v512
        %v571 = vpop.permute.xlu0 %570
        %574 = vset.pattern.permute.xlu0 0
        %575 = vperm.xlu0 %574, %v513
        %v576 = vpop.permute.xlu0 %575
        %579 = vset.pattern.permute.xlu0 0
        %580 = vperm.xlu0 %579, %v514
        %v581 = vpop.permute.xlu0 %580
        %584 = vset.pattern.permute.xlu0 0
        %585 = vperm.xlu0 %584, %v515
        %v586 = vpop.permute.xlu0 %585
        %589 = vset.pattern.permute.xlu0 0
        %590 = vperm.xlu0 %589, %v516
        %v591 = vpop.permute.xlu0 %590
        %594 = vset.pattern.permute.xlu0 0
        %595 = vperm.xlu0 %594, %v517
        %v596 = vpop.permute.xlu0 %595
        %v599 = vlaneseq
        %v600 = vshrl.u32 %v599, 7
        %v601 = vsub.s32 0, %v600
        %v602 = vrot.slane %v366, %v601
        %v603 = vlaneseq
        %v604 = vshrl.u32 %v603, 7
        %v605 = vsub.s32 1, %v604
        %v606 = vrot.slane %v366, %v605
        %v607 = vlaneseq
        %v608 = vshrl.u32 %v607, 7
        %v609 = vsub.s32 2, %v608
        %v610 = vrot.slane %v366, %v609
        %v611 = vlaneseq
        %v612 = vshrl.u32 %v611, 7
        %v613 = vsub.s32 3, %v612
        %v614 = vrot.slane %v366, %v613
        %v619 = vmul.f32 %v521, %v602
        %v620 = vmul.f32 %v521, %v606
        %v621 = vmul.f32 %v521, %v610
        %v622 = vmul.f32 %v521, %v614
        %v623 = vmul.f32 %v526, %v602
        %v624 = vmul.f32 %v526, %v606
        %v625 = vmul.f32 %v526, %v610
        %v626 = vmul.f32 %v526, %v614
        %v627 = vmul.f32 %v531, %v602
        %v628 = vmul.f32 %v531, %v606
        %v629 = vmul.f32 %v531, %v610
        %v630 = vmul.f32 %v531, %v614
        %v631 = vmul.f32 %v536, %v602
        %v632 = vmul.f32 %v536, %v606
        %v633 = vmul.f32 %v536, %v610
        %v634 = vmul.f32 %v536, %v614
        %v635 = vmul.f32 %v541, %v602
        %v636 = vmul.f32 %v541, %v606
        %v637 = vmul.f32 %v541, %v610
        %v638 = vmul.f32 %v541, %v614
        %v639 = vmul.f32 %v546, %v602
        %v640 = vmul.f32 %v546, %v606
        %v641 = vmul.f32 %v546, %v610
        %v642 = vmul.f32 %v546, %v614
        %v643 = vmul.f32 %v551, %v602
        %v644 = vmul.f32 %v551, %v606
        %v645 = vmul.f32 %v551, %v610
        %v646 = vmul.f32 %v551, %v614
        %v647 = vmul.f32 %v556, %v602
        %v648 = vmul.f32 %v556, %v606
        %v649 = vmul.f32 %v556, %v610
        %v650 = vmul.f32 %v556, %v614
        %v651 = vmul.f32 %v561, %v602
        %v652 = vmul.f32 %v561, %v606
        %v653 = vmul.f32 %v561, %v610
        %v654 = vmul.f32 %v561, %v614
        %v655 = vmul.f32 %v566, %v602
        %v656 = vmul.f32 %v566, %v606
        %v657 = vmul.f32 %v566, %v610
        %v658 = vmul.f32 %v566, %v614
        %v659 = vmul.f32 %v571, %v602
        %v660 = vmul.f32 %v571, %v606
        %v661 = vmul.f32 %v571, %v610
        %v662 = vmul.f32 %v571, %v614
        %v663 = vmul.f32 %v576, %v602
        %v664 = vmul.f32 %v576, %v606
        %v665 = vmul.f32 %v576, %v610
        %v666 = vmul.f32 %v576, %v614
        %v667 = vmul.f32 %v581, %v602
        %v668 = vmul.f32 %v581, %v606
        %v669 = vmul.f32 %v581, %v610
        %v670 = vmul.f32 %v581, %v614
        %v671 = vmul.f32 %v586, %v602
        %v672 = vmul.f32 %v586, %v606
        %v673 = vmul.f32 %v586, %v610
        %v674 = vmul.f32 %v586, %v614
        %v675 = vmul.f32 %v591, %v602
        %v676 = vmul.f32 %v591, %v606
        %v677 = vmul.f32 %v591, %v610
        %v678 = vmul.f32 %v591, %v614
        %v679 = vmul.f32 %v596, %v602
        %v680 = vmul.f32 %v596, %v606
        %v681 = vmul.f32 %v596, %v610
        %v682 = vmul.f32 %v596, %v614
        %683 = vset.pattern.permute.xlu0 1
        %684 = vperm.xlu0 %683, %v502
        %v685 = vpop.permute.xlu0 %684
        %687 = vset.pattern.permute.xlu0 1
        %688 = vperm.xlu0 %687, %v503
        %v689 = vpop.permute.xlu0 %688
        %691 = vset.pattern.permute.xlu0 1
        %692 = vperm.xlu0 %691, %v504
        %v693 = vpop.permute.xlu0 %692
        %695 = vset.pattern.permute.xlu0 1
        %696 = vperm.xlu0 %695, %v505
        %v697 = vpop.permute.xlu0 %696
        %699 = vset.pattern.permute.xlu0 1
        %700 = vperm.xlu0 %699, %v506
        %v701 = vpop.permute.xlu0 %700
        %703 = vset.pattern.permute.xlu0 1
        %704 = vperm.xlu0 %703, %v507
        %v705 = vpop.permute.xlu0 %704
        %707 = vset.pattern.permute.xlu0 1
        %708 = vperm.xlu0 %707, %v508
        %v709 = vpop.permute.xlu0 %708
        %711 = vset.pattern.permute.xlu0 1
        %712 = vperm.xlu0 %711, %v509
        %v713 = vpop.permute.xlu0 %712
        %715 = vset.pattern.permute.xlu0 1
        %716 = vperm.xlu0 %715, %v510
        %v717 = vpop.permute.xlu0 %716
        %719 = vset.pattern.permute.xlu0 1
        %720 = vperm.xlu0 %719, %v511
        %v721 = vpop.permute.xlu0 %720
        %723 = vset.pattern.permute.xlu0 1
        %724 = vperm.xlu0 %723, %v512
        %v725 = vpop.permute.xlu0 %724
        %727 = vset.pattern.permute.xlu0 1
        %728 = vperm.xlu0 %727, %v513
        %v729 = vpop.permute.xlu0 %728
        %731 = vset.pattern.permute.xlu0 1
        %732 = vperm.xlu0 %731, %v514
        %v733 = vpop.permute.xlu0 %732
        %735 = vset.pattern.permute.xlu0 1
        %736 = vperm.xlu0 %735, %v515
        %v737 = vpop.permute.xlu0 %736
        %739 = vset.pattern.permute.xlu0 1
        %740 = vperm.xlu0 %739, %v516
        %v741 = vpop.permute.xlu0 %740
        %743 = vset.pattern.permute.xlu0 1
        %744 = vperm.xlu0 %743, %v517
        %v745 = vpop.permute.xlu0 %744
        %v748 = vlaneseq
        %v749 = vshrl.u32 %v748, 7
        %v750 = vsub.s32 0, %v749
        %v751 = vrot.slane %v368, %v750
        %v752 = vlaneseq
        %v753 = vshrl.u32 %v752, 7
        %v754 = vsub.s32 1, %v753
        %v755 = vrot.slane %v368, %v754
        %v756 = vlaneseq
        %v757 = vshrl.u32 %v756, 7
        %v758 = vsub.s32 2, %v757
        %v759 = vrot.slane %v368, %v758
        %v760 = vlaneseq
        %v761 = vshrl.u32 %v760, 7
        %v762 = vsub.s32 3, %v761
        %v763 = vrot.slane %v368, %v762
        %v768 = vmul.f32 %v685, %v751
        %v769 = vmul.f32 %v685, %v755
        %v770 = vmul.f32 %v685, %v759
        %v771 = vmul.f32 %v685, %v763
        %v772 = vmul.f32 %v689, %v751
        %v773 = vmul.f32 %v689, %v755
        %v774 = vmul.f32 %v689, %v759
        %v775 = vmul.f32 %v689, %v763
        %v776 = vmul.f32 %v693, %v751
        %v777 = vmul.f32 %v693, %v755
        %v778 = vmul.f32 %v693, %v759
        %v779 = vmul.f32 %v693, %v763
        %v780 = vmul.f32 %v697, %v751
        %v781 = vmul.f32 %v697, %v755
        %v782 = vmul.f32 %v697, %v759
        %v783 = vmul.f32 %v697, %v763
        %v784 = vmul.f32 %v701, %v751
        %v785 = vmul.f32 %v701, %v755
        %v786 = vmul.f32 %v701, %v759
        %v787 = vmul.f32 %v701, %v763
        %v788 = vmul.f32 %v705, %v751
        %v789 = vmul.f32 %v705, %v755
        %v790 = vmul.f32 %v705, %v759
        %v791 = vmul.f32 %v705, %v763
        %v792 = vmul.f32 %v709, %v751
        %v793 = vmul.f32 %v709, %v755
        %v794 = vmul.f32 %v709, %v759
        %v795 = vmul.f32 %v709, %v763
        %v796 = vmul.f32 %v713, %v751
        %v797 = vmul.f32 %v713, %v755
        %v798 = vmul.f32 %v713, %v759
        %v799 = vmul.f32 %v713, %v763
        %v800 = vmul.f32 %v717, %v751
        %v801 = vmul.f32 %v717, %v755
        %v802 = vmul.f32 %v717, %v759
        %v803 = vmul.f32 %v717, %v763
        %v804 = vmul.f32 %v721, %v751
        %v805 = vmul.f32 %v721, %v755
        %v806 = vmul.f32 %v721, %v759
        %v807 = vmul.f32 %v721, %v763
        %v808 = vmul.f32 %v725, %v751
        %v809 = vmul.f32 %v725, %v755
        %v810 = vmul.f32 %v725, %v759
        %v811 = vmul.f32 %v725, %v763
        %v812 = vmul.f32 %v729, %v751
        %v813 = vmul.f32 %v729, %v755
        %v814 = vmul.f32 %v729, %v759
        %v815 = vmul.f32 %v729, %v763
        %v816 = vmul.f32 %v733, %v751
        %v817 = vmul.f32 %v733, %v755
        %v818 = vmul.f32 %v733, %v759
        %v819 = vmul.f32 %v733, %v763
        %v820 = vmul.f32 %v737, %v751
        %v821 = vmul.f32 %v737, %v755
        %v822 = vmul.f32 %v737, %v759
        %v823 = vmul.f32 %v737, %v763
        %v824 = vmul.f32 %v741, %v751
        %v825 = vmul.f32 %v741, %v755
        %v826 = vmul.f32 %v741, %v759
        %v827 = vmul.f32 %v741, %v763
        %v828 = vmul.f32 %v745, %v751
        %v829 = vmul.f32 %v745, %v755
        %v830 = vmul.f32 %v745, %v759
        %v831 = vmul.f32 %v745, %v763
        %v832 = vadd.f32 %v619, %v768
        %v833 = vadd.f32 %v620, %v769
        %v834 = vadd.f32 %v621, %v770
        %v835 = vadd.f32 %v622, %v771
        %v836 = vadd.f32 %v623, %v772
        %v837 = vadd.f32 %v624, %v773
        %v838 = vadd.f32 %v625, %v774
        %v839 = vadd.f32 %v626, %v775
        %v840 = vadd.f32 %v627, %v776
        %v841 = vadd.f32 %v628, %v777
        %v842 = vadd.f32 %v629, %v778
        %v843 = vadd.f32 %v630, %v779
        %v844 = vadd.f32 %v631, %v780
        %v845 = vadd.f32 %v632, %v781
        %v846 = vadd.f32 %v633, %v782
        %v847 = vadd.f32 %v634, %v783
        %v848 = vadd.f32 %v635, %v784
        %v849 = vadd.f32 %v636, %v785
        %v850 = vadd.f32 %v637, %v786
        %v851 = vadd.f32 %v638, %v787
        %v852 = vadd.f32 %v639, %v788
        %v853 = vadd.f32 %v640, %v789
        %v854 = vadd.f32 %v641, %v790
        %v855 = vadd.f32 %v642, %v791
        %v856 = vadd.f32 %v643, %v792
        %v857 = vadd.f32 %v644, %v793
        %v858 = vadd.f32 %v645, %v794
        %v859 = vadd.f32 %v646, %v795
        %v860 = vadd.f32 %v647, %v796
        %v861 = vadd.f32 %v648, %v797
        %v862 = vadd.f32 %v649, %v798
        %v863 = vadd.f32 %v650, %v799
        %v864 = vadd.f32 %v651, %v800
        %v865 = vadd.f32 %v652, %v801
        %v866 = vadd.f32 %v653, %v802
        %v867 = vadd.f32 %v654, %v803
        %v868 = vadd.f32 %v655, %v804
        %v869 = vadd.f32 %v656, %v805
        %v870 = vadd.f32 %v657, %v806
        %v871 = vadd.f32 %v658, %v807
        %v872 = vadd.f32 %v659, %v808
        %v873 = vadd.f32 %v660, %v809
        %v874 = vadd.f32 %v661, %v810
        %v875 = vadd.f32 %v662, %v811
        %v876 = vadd.f32 %v663, %v812
        %v877 = vadd.f32 %v664, %v813
        %v878 = vadd.f32 %v665, %v814
        %v879 = vadd.f32 %v666, %v815
        %v880 = vadd.f32 %v667, %v816
        %v881 = vadd.f32 %v668, %v817
        %v882 = vadd.f32 %v669, %v818
        %v883 = vadd.f32 %v670, %v819
        %v884 = vadd.f32 %v671, %v820
        %v885 = vadd.f32 %v672, %v821
        %v886 = vadd.f32 %v673, %v822
        %v887 = vadd.f32 %v674, %v823
        %v888 = vadd.f32 %v675, %v824
        %v889 = vadd.f32 %v676, %v825
        %v890 = vadd.f32 %v677, %v826
        %v891 = vadd.f32 %v678, %v827
        %v892 = vadd.f32 %v679, %v828
        %v893 = vadd.f32 %v680, %v829
        %v894 = vadd.f32 %v681, %v830
        %v895 = vadd.f32 %v682, %v831
        %v897 = vlaneseq
        %v898 = vshrl.u32 %v897, 7
        %v899 = vsub.s32 0, %v898
        %v900 = vrot.slane %v369, %v899
        %v901 = vlaneseq
        %v902 = vshrl.u32 %v901, 7
        %v903 = vsub.s32 1, %v902
        %v904 = vrot.slane %v369, %v903
        %v905 = vlaneseq
        %v906 = vshrl.u32 %v905, 7
        %v907 = vsub.s32 2, %v906
        %v908 = vrot.slane %v369, %v907
        %v909 = vlaneseq
        %v910 = vshrl.u32 %v909, 7
        %v911 = vsub.s32 3, %v910
        %v912 = vrot.slane %v369, %v911
        %v917 = vadd.f32 %v832, %v900
        %v918 = vadd.f32 %v833, %v904
        %v919 = vadd.f32 %v834, %v908
        %v920 = vadd.f32 %v835, %v912
        %v921 = vadd.f32 %v836, %v900
        %v922 = vadd.f32 %v837, %v904
        %v923 = vadd.f32 %v838, %v908
        %v924 = vadd.f32 %v839, %v912
        %v925 = vadd.f32 %v840, %v900
        %v926 = vadd.f32 %v841, %v904
        %v927 = vadd.f32 %v842, %v908
        %v928 = vadd.f32 %v843, %v912
        %v929 = vadd.f32 %v844, %v900
        %v930 = vadd.f32 %v845, %v904
        %v931 = vadd.f32 %v846, %v908
        %v932 = vadd.f32 %v847, %v912
        %v933 = vadd.f32 %v848, %v900
        %v934 = vadd.f32 %v849, %v904
        %v935 = vadd.f32 %v850, %v908
        %v936 = vadd.f32 %v851, %v912
        %v937 = vadd.f32 %v852, %v900
        %v938 = vadd.f32 %v853, %v904
        %v939 = vadd.f32 %v854, %v908
        %v940 = vadd.f32 %v855, %v912
        %v941 = vadd.f32 %v856, %v900
        %v942 = vadd.f32 %v857, %v904
        %v943 = vadd.f32 %v858, %v908
        %v944 = vadd.f32 %v859, %v912
        %v945 = vadd.f32 %v860, %v900
        %v946 = vadd.f32 %v861, %v904
        %v947 = vadd.f32 %v862, %v908
        %v948 = vadd.f32 %v863, %v912
        %v949 = vadd.f32 %v864, %v900
        %v950 = vadd.f32 %v865, %v904
        %v951 = vadd.f32 %v866, %v908
        %v952 = vadd.f32 %v867, %v912
        %v953 = vadd.f32 %v868, %v900
        %v954 = vadd.f32 %v869, %v904
        %v955 = vadd.f32 %v870, %v908
        %v956 = vadd.f32 %v871, %v912
        %v957 = vadd.f32 %v872, %v900
        %v958 = vadd.f32 %v873, %v904
        %v959 = vadd.f32 %v874, %v908
        %v960 = vadd.f32 %v875, %v912
        %v961 = vadd.f32 %v876, %v900
        %v962 = vadd.f32 %v877, %v904
        %v963 = vadd.f32 %v878, %v908
        %v964 = vadd.f32 %v879, %v912
        %v965 = vadd.f32 %v880, %v900
        %v966 = vadd.f32 %v881, %v904
        %v967 = vadd.f32 %v882, %v908
        %v968 = vadd.f32 %v883, %v912
        %v969 = vadd.f32 %v884, %v900
        %v970 = vadd.f32 %v885, %v904
        %v971 = vadd.f32 %v886, %v908
        %v972 = vadd.f32 %v887, %v912
        %v973 = vadd.f32 %v888, %v900
        %v974 = vadd.f32 %v889, %v904
        %v975 = vadd.f32 %v890, %v908
        %v976 = vadd.f32 %v891, %v912
        %v977 = vadd.f32 %v892, %v900
        %v978 = vadd.f32 %v893, %v904
        %v979 = vadd.f32 %v894, %v908
        %v980 = vadd.f32 %v895, %v912
        %v981 = vmax.f32 %v917, 0.0
        %v982 = vmax.f32 %v918, 0.0
        %v983 = vmax.f32 %v919, 0.0
        %v984 = vmax.f32 %v920, 0.0
        %v985 = vmax.f32 %v921, 0.0
        %v986 = vmax.f32 %v922, 0.0
        %v987 = vmax.f32 %v923, 0.0
        %v988 = vmax.f32 %v924, 0.0
        %v989 = vmax.f32 %v925, 0.0
        %v990 = vmax.f32 %v926, 0.0
        %v991 = vmax.f32 %v927, 0.0
        %v992 = vmax.f32 %v928, 0.0
        %v993 = vmax.f32 %v929, 0.0
        %v994 = vmax.f32 %v930, 0.0
        %v995 = vmax.f32 %v931, 0.0
        %v996 = vmax.f32 %v932, 0.0
        %v997 = vmax.f32 %v933, 0.0
        %v998 = vmax.f32 %v934, 0.0
        %v999 = vmax.f32 %v935, 0.0
        %v1000 = vmax.f32 %v936, 0.0
        %v1001 = vmax.f32 %v937, 0.0
        %v1002 = vmax.f32 %v938, 0.0
        %v1003 = vmax.f32 %v939, 0.0
        %v1004 = vmax.f32 %v940, 0.0
        %v1005 = vmax.f32 %v941, 0.0
        %v1006 = vmax.f32 %v942, 0.0
        %v1007 = vmax.f32 %v943, 0.0
        %v1008 = vmax.f32 %v944, 0.0
        %v1009 = vmax.f32 %v945, 0.0
        %v1010 = vmax.f32 %v946, 0.0
        %v1011 = vmax.f32 %v947, 0.0
        %v1012 = vmax.f32 %v948, 0.0
        %v1013 = vmax.f32 %v949, 0.0
        %v1014 = vmax.f32 %v950, 0.0
        %v1015 = vmax.f32 %v951, 0.0
        %v1016 = vmax.f32 %v952, 0.0
        %v1017 = vmax.f32 %v953, 0.0
        %v1018 = vmax.f32 %v954, 0.0
        %v1019 = vmax.f32 %v955, 0.0
        %v1020 = vmax.f32 %v956, 0.0
        %v1021 = vmax.f32 %v957, 0.0
        %v1022 = vmax.f32 %v958, 0.0
        %v1023 = vmax.f32 %v959, 0.0
        %v1024 = vmax.f32 %v960, 0.0
        %v1025 = vmax.f32 %v961, 0.0
        %v1026 = vmax.f32 %v962, 0.0
        %v1027 = vmax.f32 %v963, 0.0
        %v1028 = vmax.f32 %v964, 0.0
        %v1029 = vmax.f32 %v965, 0.0
        %v1030 = vmax.f32 %v966, 0.0
        %v1031 = vmax.f32 %v967, 0.0
        %v1032 = vmax.f32 %v968, 0.0
        %v1033 = vmax.f32 %v969, 0.0
        %v1034 = vmax.f32 %v970, 0.0
        %v1035 = vmax.f32 %v971, 0.0
        %v1036 = vmax.f32 %v972, 0.0
        %v1037 = vmax.f32 %v973, 0.0
        %v1038 = vmax.f32 %v974, 0.0
        %v1039 = vmax.f32 %v975, 0.0
        %v1040 = vmax.f32 %v976, 0.0
        %v1041 = vmax.f32 %v977, 0.0
        %v1042 = vmax.f32 %v978, 0.0
        %v1043 = vmax.f32 %v979, 0.0
        %v1044 = vmax.f32 %v980, 0.0
        %v1045 = vpack.c.bf16 %v985, %v981
        %v1046 = vpack.c.bf16 %v986, %v982
        %v1047 = vpack.c.bf16 %v987, %v983
        %v1048 = vpack.c.bf16 %v988, %v984
        %v1049 = vpack.c.bf16 %v993, %v989
        %v1050 = vpack.c.bf16 %v994, %v990
        %v1051 = vpack.c.bf16 %v995, %v991
        %v1052 = vpack.c.bf16 %v996, %v992
        %v1053 = vpack.c.bf16 %v1001, %v997
        %v1054 = vpack.c.bf16 %v1002, %v998
        %v1055 = vpack.c.bf16 %v1003, %v999
        %v1056 = vpack.c.bf16 %v1004, %v1000
        %v1057 = vpack.c.bf16 %v1009, %v1005
        %v1058 = vpack.c.bf16 %v1010, %v1006
        %v1059 = vpack.c.bf16 %v1011, %v1007
        %v1060 = vpack.c.bf16 %v1012, %v1008
        %v1061 = vpack.c.bf16 %v1017, %v1013
        %v1062 = vpack.c.bf16 %v1018, %v1014
        %v1063 = vpack.c.bf16 %v1019, %v1015
        %v1064 = vpack.c.bf16 %v1020, %v1016
        %v1065 = vpack.c.bf16 %v1025, %v1021
        %v1066 = vpack.c.bf16 %v1026, %v1022
        %v1067 = vpack.c.bf16 %v1027, %v1023
        %v1068 = vpack.c.bf16 %v1028, %v1024
        %v1069 = vpack.c.bf16 %v1033, %v1029
        %v1070 = vpack.c.bf16 %v1034, %v1030
        %v1071 = vpack.c.bf16 %v1035, %v1031
        %v1072 = vpack.c.bf16 %v1036, %v1032
        %v1073 = vpack.c.bf16 %v1041, %v1037
        %v1074 = vpack.c.bf16 %v1042, %v1038
        %v1075 = vpack.c.bf16 %v1043, %v1039
        %v1076 = vpack.c.bf16 %v1044, %v1040
        %v1078 = vlaneseq
        %v1079 = vshrl.u32 %v1078, 7
        %v1080 = vsub.s32 0, %v1079
        %v1081 = vrot.slane %v498, %v1080
        %v1082 = vlaneseq
        %v1083 = vshrl.u32 %v1082, 7
        %v1084 = vsub.s32 1, %v1083
        %v1085 = vrot.slane %v498, %v1084
        %v1086 = vlaneseq
        %v1087 = vshrl.u32 %v1086, 7
        %v1088 = vsub.s32 2, %v1087
        %v1089 = vrot.slane %v498, %v1088
        %v1221 = vunpack.c.l.b16 %v370
        %v1222 = vunpack.c.h.b16 %v370
        %v1223 = vunpack.c.l.b16 %v371
        %v1224 = vunpack.c.l.b16 %v372
        %v1225 = vunpack.c.h.b16 %v372
        %v1226 = vunpack.c.l.b16 %v373
        %v1227 = vunpack.c.l.b16 %v374
        %v1228 = vunpack.c.h.b16 %v374
        %v1229 = vunpack.c.l.b16 %v375
        %v1230 = vunpack.c.l.b16 %v376
        %v1231 = vunpack.c.h.b16 %v376
        %v1232 = vunpack.c.l.b16 %v377
        %v1233 = vunpack.c.l.b16 %v378
        %v1234 = vunpack.c.h.b16 %v378
        %v1235 = vunpack.c.l.b16 %v379
        %v1236 = vunpack.c.l.b16 %v380
        %v1237 = vunpack.c.h.b16 %v380
        %v1238 = vunpack.c.l.b16 %v381
        %v1239 = vunpack.c.l.b16 %v382
        %v1240 = vunpack.c.h.b16 %v382
        %v1241 = vunpack.c.l.b16 %v383
        %v1242 = vunpack.c.l.b16 %v384
        %v1243 = vunpack.c.h.b16 %v384
        %v1244 = vunpack.c.l.b16 %v385
        %v1245 = vunpack.c.l.b16 %v386
        %v1246 = vunpack.c.h.b16 %v386
        %v1247 = vunpack.c.l.b16 %v387
        %v1248 = vunpack.c.l.b16 %v388
        %v1249 = vunpack.c.h.b16 %v388
        %v1250 = vunpack.c.l.b16 %v389
        %v1251 = vunpack.c.l.b16 %v390
        %v1252 = vunpack.c.h.b16 %v390
        %v1253 = vunpack.c.l.b16 %v391
        %v1254 = vunpack.c.l.b16 %v392
        %v1255 = vunpack.c.h.b16 %v392
        %v1256 = vunpack.c.l.b16 %v393
        %v1257 = vunpack.c.l.b16 %v394
        %v1258 = vunpack.c.h.b16 %v394
        %v1259 = vunpack.c.l.b16 %v395
        %v1260 = vunpack.c.l.b16 %v396
        %v1261 = vunpack.c.h.b16 %v396
        %v1262 = vunpack.c.l.b16 %v397
        %v1263 = vunpack.c.l.b16 %v398
        %v1264 = vunpack.c.h.b16 %v398
        %v1265 = vunpack.c.l.b16 %v399
        %v1266 = vunpack.c.l.b16 %v400
        %v1267 = vunpack.c.h.b16 %v400
        %v1268 = vunpack.c.l.b16 %v401
        %v1269 = vunpack.c.l.b16 %v402
        %v1270 = vunpack.c.h.b16 %v402
        %v1271 = vunpack.c.l.b16 %v403
        %v1272 = vunpack.c.l.b16 %v404
        %v1273 = vunpack.c.h.b16 %v404
        %v1274 = vunpack.c.l.b16 %v405
        %v1275 = vunpack.c.l.b16 %v406
        %v1276 = vunpack.c.h.b16 %v406
        %v1277 = vunpack.c.l.b16 %v407
        %v1278 = vunpack.c.l.b16 %v408
        %v1279 = vunpack.c.h.b16 %v408
        %v1280 = vunpack.c.l.b16 %v409
        %v1281 = vunpack.c.l.b16 %v410
        %v1282 = vunpack.c.h.b16 %v410
        %v1283 = vunpack.c.l.b16 %v411
        %v1284 = vunpack.c.l.b16 %v412
        %v1285 = vunpack.c.h.b16 %v412
        %v1286 = vunpack.c.l.b16 %v413
        %v1287 = vunpack.c.l.b16 %v414
        %v1288 = vunpack.c.h.b16 %v414
        %v1289 = vunpack.c.l.b16 %v415
        %v1290 = vunpack.c.l.b16 %v416
        %v1291 = vunpack.c.h.b16 %v416
        %v1292 = vunpack.c.l.b16 %v417
        %v1293 = vunpack.c.l.b16 %v418
        %v1294 = vunpack.c.h.b16 %v418
        %v1295 = vunpack.c.l.b16 %v419
        %v1296 = vunpack.c.l.b16 %v420
        %v1297 = vunpack.c.h.b16 %v420
        %v1298 = vunpack.c.l.b16 %v421
        %v1299 = vunpack.c.l.b16 %v422
        %v1300 = vunpack.c.h.b16 %v422
        %v1301 = vunpack.c.l.b16 %v423
        %v1302 = vunpack.c.l.b16 %v424
        %v1303 = vunpack.c.h.b16 %v424
        %v1304 = vunpack.c.l.b16 %v425
        %v1305 = vunpack.c.l.b16 %v426
        %v1306 = vunpack.c.h.b16 %v426
        %v1307 = vunpack.c.l.b16 %v427
        %v1308 = vunpack.c.l.b16 %v428
        %v1309 = vunpack.c.h.b16 %v428
        %v1310 = vunpack.c.l.b16 %v429
        %v1311 = vunpack.c.l.b16 %v430
        %v1312 = vunpack.c.h.b16 %v430
        %v1313 = vunpack.c.l.b16 %v431
        %v1314 = vunpack.c.l.b16 %v432
        %v1315 = vunpack.c.h.b16 %v432
        %v1316 = vunpack.c.l.b16 %v433
        %v1317 = vunpack.c.l.b16 %v434
        %v1318 = vunpack.c.h.b16 %v434
        %v1319 = vunpack.c.l.b16 %v435
        %v1320 = vunpack.c.l.b16 %v436
        %v1321 = vunpack.c.h.b16 %v436
        %v1322 = vunpack.c.l.b16 %v437
        %v1323 = vunpack.c.l.b16 %v438
        %v1324 = vunpack.c.h.b16 %v438
        %v1325 = vunpack.c.l.b16 %v439
        %v1326 = vunpack.c.l.b16 %v440
        %v1327 = vunpack.c.h.b16 %v440
        %v1328 = vunpack.c.l.b16 %v441
        %v1329 = vunpack.c.l.b16 %v442
        %v1330 = vunpack.c.h.b16 %v442
        %v1331 = vunpack.c.l.b16 %v443
        %v1332 = vunpack.c.l.b16 %v444
        %v1333 = vunpack.c.h.b16 %v444
        %v1334 = vunpack.c.l.b16 %v445
        %v1335 = vunpack.c.l.b16 %v446
        %v1336 = vunpack.c.h.b16 %v446
        %v1337 = vunpack.c.l.b16 %v447
        %v1338 = vunpack.c.l.b16 %v448
        %v1339 = vunpack.c.h.b16 %v448
        %v1340 = vunpack.c.l.b16 %v449
        %v1341 = vunpack.c.l.b16 %v450
        %v1342 = vunpack.c.h.b16 %v450
        %v1343 = vunpack.c.l.b16 %v451
        %v1344 = vunpack.c.l.b16 %v452
        %v1345 = vunpack.c.h.b16 %v452
        %v1346 = vunpack.c.l.b16 %v453
        %v1347 = vunpack.c.l.b16 %v454
        %v1348 = vunpack.c.h.b16 %v454
        %v1349 = vunpack.c.l.b16 %v455
        %v1350 = vunpack.c.l.b16 %v456
        %v1351 = vunpack.c.h.b16 %v456
        %v1352 = vunpack.c.l.b16 %v457
        %v1353 = vunpack.c.l.b16 %v458
        %v1354 = vunpack.c.h.b16 %v458
        %v1355 = vunpack.c.l.b16 %v459
        %v1356 = vunpack.c.l.b16 %v460
        %v1357 = vunpack.c.h.b16 %v460
        %v1358 = vunpack.c.l.b16 %v461
        %v1359 = vunpack.c.l.b16 %v462
        %v1360 = vunpack.c.h.b16 %v462
        %v1361 = vunpack.c.l.b16 %v463
        %v1362 = vunpack.c.l.b16 %v464
        %v1363 = vunpack.c.h.b16 %v464
        %v1364 = vunpack.c.l.b16 %v465
        %v1365 = vunpack.c.l.b16 %v466
        %v1366 = vunpack.c.h.b16 %v466
        %v1367 = vunpack.c.l.b16 %v467
        %v1368 = vunpack.c.l.b16 %v468
        %v1369 = vunpack.c.h.b16 %v468
        %v1370 = vunpack.c.l.b16 %v469
        %v1371 = vunpack.c.l.b16 %v470
        %v1372 = vunpack.c.h.b16 %v470
        %v1373 = vunpack.c.l.b16 %v471
        %v1374 = vunpack.c.l.b16 %v472
        %v1375 = vunpack.c.h.b16 %v472
        %v1376 = vunpack.c.l.b16 %v473
        %v1377 = vunpack.c.l.b16 %v474
        %v1378 = vunpack.c.h.b16 %v474
        %v1379 = vunpack.c.l.b16 %v475
        %v1380 = vunpack.c.l.b16 %v476
        %v1381 = vunpack.c.h.b16 %v476
        %v1382 = vunpack.c.l.b16 %v477
        %v1383 = vunpack.c.l.b16 %v478
        %v1384 = vunpack.c.h.b16 %v478
        %v1385 = vunpack.c.l.b16 %v479
        %v1386 = vunpack.c.l.b16 %v480
        %v1387 = vunpack.c.h.b16 %v480
        %v1388 = vunpack.c.l.b16 %v481
        %v1389 = vunpack.c.l.b16 %v482
        %v1390 = vunpack.c.h.b16 %v482
        %v1391 = vunpack.c.l.b16 %v483
        %v1392 = vunpack.c.l.b16 %v484
        %v1393 = vunpack.c.h.b16 %v484
        %v1394 = vunpack.c.l.b16 %v485
        %v1395 = vunpack.c.l.b16 %v486
        %v1396 = vunpack.c.h.b16 %v486
        %v1397 = vunpack.c.l.b16 %v487
        %v1398 = vunpack.c.l.b16 %v488
        %v1399 = vunpack.c.h.b16 %v488
        %v1400 = vunpack.c.l.b16 %v489
        %v1401 = vunpack.c.l.b16 %v490
        %v1402 = vunpack.c.h.b16 %v490
        %v1403 = vunpack.c.l.b16 %v491
        %v1404 = vunpack.c.l.b16 %v492
        %v1405 = vunpack.c.h.b16 %v492
        %v1406 = vunpack.c.l.b16 %v493
        %v1407 = vunpack.c.l.b16 %v494
        %v1408 = vunpack.c.h.b16 %v494
        %v1409 = vunpack.c.l.b16 %v495
        %v1410 = vunpack.c.l.b16 %v496
        %v1411 = vunpack.c.h.b16 %v496
        %v1412 = vunpack.c.l.b16 %v497
        %v1413 = vpack.c.b16 %v1224, %v1221
        %v1414 = vpack.c.b16 %v1225, %v1222
        %v1415 = vpack.c.b16 %v1226, %v1223
        %v1416 = vpack.c.b16 %v1230, %v1227
        %v1417 = vpack.c.b16 %v1231, %v1228
        %v1418 = vpack.c.b16 %v1232, %v1229
        %v1419 = vpack.c.b16 %v1236, %v1233
        %v1420 = vpack.c.b16 %v1237, %v1234
        %v1421 = vpack.c.b16 %v1238, %v1235
        %v1422 = vpack.c.b16 %v1242, %v1239
        %v1423 = vpack.c.b16 %v1243, %v1240
        %v1424 = vpack.c.b16 %v1244, %v1241
        %v1425 = vpack.c.b16 %v1248, %v1245
        %v1426 = vpack.c.b16 %v1249, %v1246
        %v1427 = vpack.c.b16 %v1250, %v1247
        %v1428 = vpack.c.b16 %v1254, %v1251
        %v1429 = vpack.c.b16 %v1255, %v1252
        %v1430 = vpack.c.b16 %v1256, %v1253
        %v1431 = vpack.c.b16 %v1260, %v1257
        %v1432 = vpack.c.b16 %v1261, %v1258
        %v1433 = vpack.c.b16 %v1262, %v1259
        %v1434 = vpack.c.b16 %v1266, %v1263
        %v1435 = vpack.c.b16 %v1267, %v1264
        %v1436 = vpack.c.b16 %v1268, %v1265
        %v1437 = vpack.c.b16 %v1272, %v1269
        %v1438 = vpack.c.b16 %v1273, %v1270
        %v1439 = vpack.c.b16 %v1274, %v1271
        %v1440 = vpack.c.b16 %v1278, %v1275
        %v1441 = vpack.c.b16 %v1279, %v1276
        %v1442 = vpack.c.b16 %v1280, %v1277
        %v1443 = vpack.c.b16 %v1284, %v1281
        %v1444 = vpack.c.b16 %v1285, %v1282
        %v1445 = vpack.c.b16 %v1286, %v1283
        %v1446 = vpack.c.b16 %v1290, %v1287
        %v1447 = vpack.c.b16 %v1291, %v1288
        %v1448 = vpack.c.b16 %v1292, %v1289
        %v1449 = vpack.c.b16 %v1296, %v1293
        %v1450 = vpack.c.b16 %v1297, %v1294
        %v1451 = vpack.c.b16 %v1298, %v1295
        %v1452 = vpack.c.b16 %v1302, %v1299
        %v1453 = vpack.c.b16 %v1303, %v1300
        %v1454 = vpack.c.b16 %v1304, %v1301
        %v1455 = vpack.c.b16 %v1308, %v1305
        %v1456 = vpack.c.b16 %v1309, %v1306
        %v1457 = vpack.c.b16 %v1310, %v1307
        %v1458 = vpack.c.b16 %v1314, %v1311
        %v1459 = vpack.c.b16 %v1315, %v1312
        %v1460 = vpack.c.b16 %v1316, %v1313
        %v1461 = vpack.c.b16 %v1320, %v1317
        %v1462 = vpack.c.b16 %v1321, %v1318
        %v1463 = vpack.c.b16 %v1322, %v1319
        %v1464 = vpack.c.b16 %v1326, %v1323
        %v1465 = vpack.c.b16 %v1327, %v1324
        %v1466 = vpack.c.b16 %v1328, %v1325
        %v1467 = vpack.c.b16 %v1332, %v1329
        %v1468 = vpack.c.b16 %v1333, %v1330
        %v1469 = vpack.c.b16 %v1334, %v1331
        %v1470 = vpack.c.b16 %v1338, %v1335
        %v1471 = vpack.c.b16 %v1339, %v1336
        %v1472 = vpack.c.b16 %v1340, %v1337
        %v1473 = vpack.c.b16 %v1344, %v1341
        %v1474 = vpack.c.b16 %v1345, %v1342
        %v1475 = vpack.c.b16 %v1346, %v1343
        %v1476 = vpack.c.b16 %v1350, %v1347
        %v1477 = vpack.c.b16 %v1351, %v1348
        %v1478 = vpack.c.b16 %v1352, %v1349
        %v1479 = vpack.c.b16 %v1356, %v1353
        %v1480 = vpack.c.b16 %v1357, %v1354
        %v1481 = vpack.c.b16 %v1358, %v1355
        %v1482 = vpack.c.b16 %v1362, %v1359
        %v1483 = vpack.c.b16 %v1363, %v1360
        %v1484 = vpack.c.b16 %v1364, %v1361
        %v1485 = vpack.c.b16 %v1368, %v1365
        %v1486 = vpack.c.b16 %v1369, %v1366
        %v1487 = vpack.c.b16 %v1370, %v1367
        %v1488 = vpack.c.b16 %v1374, %v1371
        %v1489 = vpack.c.b16 %v1375, %v1372
        %v1490 = vpack.c.b16 %v1376, %v1373
        %v1491 = vpack.c.b16 %v1380, %v1377
        %v1492 = vpack.c.b16 %v1381, %v1378
        %v1493 = vpack.c.b16 %v1382, %v1379
        %v1494 = vpack.c.b16 %v1386, %v1383
        %v1495 = vpack.c.b16 %v1387, %v1384
        %v1496 = vpack.c.b16 %v1388, %v1385
        %v1497 = vpack.c.b16 %v1392, %v1389
        %v1498 = vpack.c.b16 %v1393, %v1390
        %v1499 = vpack.c.b16 %v1394, %v1391
        %v1500 = vpack.c.b16 %v1398, %v1395
        %v1501 = vpack.c.b16 %v1399, %v1396
        %v1502 = vpack.c.b16 %v1400, %v1397
        %v1503 = vpack.c.b16 %v1404, %v1401
        %v1504 = vpack.c.b16 %v1405, %v1402
        %v1505 = vpack.c.b16 %v1406, %v1403
        %v1506 = vpack.c.b16 %v1410, %v1407
        %v1507 = vpack.c.b16 %v1411, %v1408
        %v1508 = vpack.c.b16 %v1412, %v1409
        %1605 = vmatprep.subr.bf16.mxu0 %v1435
        %1606 = vmatpush1.bf16.msra.mxu0 %v1434
        %1607 = vmatprep.subr.bf16.mxu0 %v1432
        %1608 = vmatpush1.bf16.msra.mxu0 %v1431
        %1609 = vmatprep.subr.bf16.mxu0 %v1429
        %1610 = vmatpush1.bf16.msra.mxu0 %v1428
        %1611 = vmatprep.subr.bf16.mxu0 %v1426
        %1612 = vmatpush1.bf16.msra.mxu0 %v1425
        %1613 = vmatprep.subr.bf16.mxu0 %v1423
        %1614 = vmatpush1.bf16.msra.mxu0 %v1422
        %1615 = vmatprep.subr.bf16.mxu0 %v1420
        %1616 = vmatpush1.bf16.msra.mxu0 %v1419
        %1617 = vmatprep.subr.bf16.mxu0 %v1417
        %1618 = vmatpush1.bf16.msra.mxu0 %v1416
        %1619 = vmatprep.subr.bf16.mxu0 %v1414
        %1620 = vmatpush1.bf16.msra.mxu0 %v1413
        %1621 = vmatprep.subr.bf16.mxu0 %v1459
        %1622 = vmatpush2.bf16.msra.mxu0 %v1458
        %1623 = vmatprep.subr.bf16.mxu0 %v1456
        %1624 = vmatpush2.bf16.msra.mxu0 %v1455
        %1625 = vmatprep.subr.bf16.mxu0 %v1453
        %1626 = vmatpush2.bf16.msra.mxu0 %v1452
        %1627 = vmatprep.subr.bf16.mxu0 %v1450
        %1628 = vmatpush2.bf16.msra.mxu0 %v1449
        %1629 = vmatprep.subr.bf16.mxu0 %v1447
        %1630 = vmatpush2.bf16.msra.mxu0 %v1446
        %1631 = vmatprep.subr.bf16.mxu0 %v1444
        %1632 = vmatpush2.bf16.msra.mxu0 %v1443
        %1633 = vmatprep.subr.bf16.mxu0 %v1441
        %1634 = vmatpush2.bf16.msra.mxu0 %v1440
        %1635 = vmatprep.subr.bf16.mxu0 %v1438
        %1636 = vmatpush2.bf16.msra.mxu0 %v1437
        %1637 = vmatprep.mubr.bf16.mxu0 %v1046
        %1638 = vmatmul.mubr.bf16.gmra.mxu0 %v1045
        %v1639 = vpop.f32.mrf.mxu0
        %v1640 = vadd.f32 %v1081, %v1639
        %v1641 = vpop.f32.mrf.mxu0
        %v1642 = vadd.f32 %v1085, %v1641
        %v1643 = vpop.f32.mrf.mxu0
        %v1644 = vadd.f32 %v1081, %v1643
        %v1645 = vpop.f32.mrf.mxu0
        %v1646 = vadd.f32 %v1085, %v1645
        %1647 = vmatprep.mubr.bf16.mxu0 %v1050
        %1648 = vmatmul.mubr.bf16.gmra.mxu0 %v1049
        %v1649 = vpop.f32.mrf.mxu0
        %v1650 = vadd.f32 %v1081, %v1649
        %v1651 = vpop.f32.mrf.mxu0
        %v1652 = vadd.f32 %v1085, %v1651
        %v1653 = vpop.f32.mrf.mxu0
        %v1654 = vadd.f32 %v1081, %v1653
        %v1655 = vpop.f32.mrf.mxu0
        %v1656 = vadd.f32 %v1085, %v1655
        %1657 = vmatprep.mubr.bf16.mxu0 %v1054
        %1658 = vmatmul.mubr.bf16.gmra.mxu0 %v1053
        %v1659 = vpop.f32.mrf.mxu0
        %v1660 = vadd.f32 %v1081, %v1659
        %v1661 = vpop.f32.mrf.mxu0
        %v1662 = vadd.f32 %v1085, %v1661
        %v1663 = vpop.f32.mrf.mxu0
        %v1664 = vadd.f32 %v1081, %v1663
        %v1665 = vpop.f32.mrf.mxu0
        %v1666 = vadd.f32 %v1085, %v1665
        %1667 = vmatprep.mubr.bf16.mxu0 %v1058
        %1668 = vmatmul.mubr.bf16.gmra.mxu0 %v1057
        %v1669 = vpop.f32.mrf.mxu0
        %v1670 = vadd.f32 %v1081, %v1669
        %v1671 = vpop.f32.mrf.mxu0
        %v1672 = vadd.f32 %v1085, %v1671
        %v1673 = vpop.f32.mrf.mxu0
        %v1674 = vadd.f32 %v1081, %v1673
        %v1675 = vpop.f32.mrf.mxu0
        %v1676 = vadd.f32 %v1085, %v1675
        %1677 = vmatprep.mubr.bf16.mxu0 %v1062
        %1678 = vmatmul.mubr.bf16.gmra.mxu0 %v1061
        %v1679 = vpop.f32.mrf.mxu0
        %v1680 = vadd.f32 %v1081, %v1679
        %v1681 = vpop.f32.mrf.mxu0
        %v1682 = vadd.f32 %v1085, %v1681
        %v1683 = vpop.f32.mrf.mxu0
        %v1684 = vadd.f32 %v1081, %v1683
        %v1685 = vpop.f32.mrf.mxu0
        %v1686 = vadd.f32 %v1085, %v1685
        %1687 = vmatprep.mubr.bf16.mxu0 %v1066
        %1688 = vmatmul.mubr.bf16.gmra.mxu0 %v1065
        %v1689 = vpop.f32.mrf.mxu0
        %v1690 = vadd.f32 %v1081, %v1689
        %v1691 = vpop.f32.mrf.mxu0
        %v1692 = vadd.f32 %v1085, %v1691
        %v1693 = vpop.f32.mrf.mxu0
        %v1694 = vadd.f32 %v1081, %v1693
        %v1695 = vpop.f32.mrf.mxu0
        %v1696 = vadd.f32 %v1085, %v1695
        %1697 = vmatprep.mubr.bf16.mxu0 %v1070
        %1698 = vmatmul.mubr.bf16.gmra.mxu0 %v1069
        %v1699 = vpop.f32.mrf.mxu0
        %v1700 = vadd.f32 %v1081, %v1699
        %v1701 = vpop.f32.mrf.mxu0
        %v1702 = vadd.f32 %v1085, %v1701
        %v1703 = vpop.f32.mrf.mxu0
        %v1704 = vadd.f32 %v1081, %v1703
        %v1705 = vpop.f32.mrf.mxu0
        %v1706 = vadd.f32 %v1085, %v1705
        %1707 = vmatprep.mubr.bf16.mxu0 %v1074
        %1708 = vmatmul.mubr.bf16.gmra.mxu0 %v1073
        %v1709 = vpop.f32.mrf.mxu0
        %v1710 = vadd.f32 %v1081, %v1709
        %v1711 = vpop.f32.mrf.mxu0
        %v1712 = vadd.f32 %v1085, %v1711
        %v1713 = vpop.f32.mrf.mxu0
        %v1714 = vadd.f32 %v1081, %v1713
        %v1715 = vpop.f32.mrf.mxu0
        %v1716 = vadd.f32 %v1085, %v1715
        %1717 = vdwg.mxu0
        %1718 = vmatprep.subr.bf16.mxu0 %v1483
        %1719 = vmatpush1.bf16.msra.mxu0 %v1482
        %1720 = vmatprep.subr.bf16.mxu0 %v1480
        %1721 = vmatpush1.bf16.msra.mxu0 %v1479
        %1722 = vmatprep.subr.bf16.mxu0 %v1477
        %1723 = vmatpush1.bf16.msra.mxu0 %v1476
        %1724 = vmatprep.subr.bf16.mxu0 %v1474
        %1725 = vmatpush1.bf16.msra.mxu0 %v1473
        %1726 = vmatprep.subr.bf16.mxu0 %v1471
        %1727 = vmatpush1.bf16.msra.mxu0 %v1470
        %1728 = vmatprep.subr.bf16.mxu0 %v1468
        %1729 = vmatpush1.bf16.msra.mxu0 %v1467
        %1730 = vmatprep.subr.bf16.mxu0 %v1465
        %1731 = vmatpush1.bf16.msra.mxu0 %v1464
        %1732 = vmatprep.subr.bf16.mxu0 %v1462
        %1733 = vmatpush1.bf16.msra.mxu0 %v1461
        %1734 = vmatprep.subr.bf16.mxu0 %v1507
        %1735 = vmatpush2.bf16.msra.mxu0 %v1506
        %1736 = vmatprep.subr.bf16.mxu0 %v1504
        %1737 = vmatpush2.bf16.msra.mxu0 %v1503
        %1738 = vmatprep.subr.bf16.mxu0 %v1501
        %1739 = vmatpush2.bf16.msra.mxu0 %v1500
        %1740 = vmatprep.subr.bf16.mxu0 %v1498
        %1741 = vmatpush2.bf16.msra.mxu0 %v1497
        %1742 = vmatprep.subr.bf16.mxu0 %v1495
        %1743 = vmatpush2.bf16.msra.mxu0 %v1494
        %1744 = vmatprep.subr.bf16.mxu0 %v1492
        %1745 = vmatpush2.bf16.msra.mxu0 %v1491
        %1746 = vmatprep.subr.bf16.mxu0 %v1489
        %1747 = vmatpush2.bf16.msra.mxu0 %v1488
        %1748 = vmatprep.subr.bf16.mxu0 %v1486
        %1749 = vmatpush2.bf16.msra.mxu0 %v1485
        %1750 = vmatprep.mubr.bf16.mxu0 %v1048
        %1751 = vmatmul.mubr.bf16.gmra.mxu0 %v1047
        %v1752 = vpop.f32.mrf.mxu0
        %v1753 = vadd.f32 %v1640, %v1752
        %v1754 = vpop.f32.mrf.mxu0
        %v1755 = vadd.f32 %v1642, %v1754
        %v1756 = vpop.f32.mrf.mxu0
        %v1757 = vadd.f32 %v1644, %v1756
        %v1758 = vpop.f32.mrf.mxu0
        %v1759 = vadd.f32 %v1646, %v1758
        %1760 = vmatprep.mubr.bf16.mxu0 %v1052
        %1761 = vmatmul.mubr.bf16.gmra.mxu0 %v1051
        %v1762 = vpop.f32.mrf.mxu0
        %v1763 = vadd.f32 %v1650, %v1762
        %v1764 = vpop.f32.mrf.mxu0
        %v1765 = vadd.f32 %v1652, %v1764
        %v1766 = vpop.f32.mrf.mxu0
        %v1767 = vadd.f32 %v1654, %v1766
        %v1768 = vpop.f32.mrf.mxu0
        %v1769 = vadd.f32 %v1656, %v1768
        %1770 = vmatprep.mubr.bf16.mxu0 %v1056
        %1771 = vmatmul.mubr.bf16.gmra.mxu0 %v1055
        %v1772 = vpop.f32.mrf.mxu0
        %v1773 = vadd.f32 %v1660, %v1772
        %v1774 = vpop.f32.mrf.mxu0
        %v1775 = vadd.f32 %v1662, %v1774
        %v1776 = vpop.f32.mrf.mxu0
        %v1777 = vadd.f32 %v1664, %v1776
        %v1778 = vpop.f32.mrf.mxu0
        %v1779 = vadd.f32 %v1666, %v1778
        %1780 = vmatprep.mubr.bf16.mxu0 %v1060
        %1781 = vmatmul.mubr.bf16.gmra.mxu0 %v1059
        %v1782 = vpop.f32.mrf.mxu0
        %v1783 = vadd.f32 %v1670, %v1782
        %v1784 = vpop.f32.mrf.mxu0
        %v1785 = vadd.f32 %v1672, %v1784
        %v1786 = vpop.f32.mrf.mxu0
        %v1787 = vadd.f32 %v1674, %v1786
        %v1788 = vpop.f32.mrf.mxu0
        %v1789 = vadd.f32 %v1676, %v1788
        %1790 = vmatprep.mubr.bf16.mxu0 %v1064
        %1791 = vmatmul.mubr.bf16.gmra.mxu0 %v1063
        %v1792 = vpop.f32.mrf.mxu0
        %v1793 = vadd.f32 %v1680, %v1792
        %v1794 = vpop.f32.mrf.mxu0
        %v1795 = vadd.f32 %v1682, %v1794
        %v1796 = vpop.f32.mrf.mxu0
        %v1797 = vadd.f32 %v1684, %v1796
        %v1798 = vpop.f32.mrf.mxu0
        %v1799 = vadd.f32 %v1686, %v1798
        %1800 = vmatprep.mubr.bf16.mxu0 %v1068
        %1801 = vmatmul.mubr.bf16.gmra.mxu0 %v1067
        %v1802 = vpop.f32.mrf.mxu0
        %v1803 = vadd.f32 %v1690, %v1802
        %v1804 = vpop.f32.mrf.mxu0
        %v1805 = vadd.f32 %v1692, %v1804
        %v1806 = vpop.f32.mrf.mxu0
        %v1807 = vadd.f32 %v1694, %v1806
        %v1808 = vpop.f32.mrf.mxu0
        %v1809 = vadd.f32 %v1696, %v1808
        %1810 = vmatprep.mubr.bf16.mxu0 %v1072
        %1811 = vmatmul.mubr.bf16.gmra.mxu0 %v1071
        %v1812 = vpop.f32.mrf.mxu0
        %v1813 = vadd.f32 %v1700, %v1812
        %v1814 = vpop.f32.mrf.mxu0
        %v1815 = vadd.f32 %v1702, %v1814
        %v1816 = vpop.f32.mrf.mxu0
        %v1817 = vadd.f32 %v1704, %v1816
        %v1818 = vpop.f32.mrf.mxu0
        %v1819 = vadd.f32 %v1706, %v1818
        %1820 = vmatprep.mubr.bf16.mxu0 %v1076
        %1821 = vmatmul.mubr.bf16.gmra.mxu0 %v1075
        %v1822 = vpop.f32.mrf.mxu0
        %v1823 = vadd.f32 %v1710, %v1822
        %v1824 = vpop.f32.mrf.mxu0
        %v1825 = vadd.f32 %v1712, %v1824
        %v1826 = vpop.f32.mrf.mxu0
        %v1827 = vadd.f32 %v1714, %v1826
        %v1828 = vpop.f32.mrf.mxu0
        %v1829 = vadd.f32 %v1716, %v1828
        %1830 = vdwg.mxu0
        %1831 = vmatprep.subr.bf16.mxu0 0
        %1832 = vmatpush1.bf16.msra.mxu0 %v1436
        %1833 = vmatprep.subr.bf16.mxu0 0
        %1834 = vmatpush1.bf16.msra.mxu0 %v1433
        %1835 = vmatprep.subr.bf16.mxu0 0
        %1836 = vmatpush1.bf16.msra.mxu0 %v1430
        %1837 = vmatprep.subr.bf16.mxu0 0
        %1838 = vmatpush1.bf16.msra.mxu0 %v1427
        %1839 = vmatprep.subr.bf16.mxu0 0
        %1840 = vmatpush1.bf16.msra.mxu0 %v1424
        %1841 = vmatprep.subr.bf16.mxu0 0
        %1842 = vmatpush1.bf16.msra.mxu0 %v1421
        %1843 = vmatprep.subr.bf16.mxu0 0
        %1844 = vmatpush1.bf16.msra.mxu0 %v1418
        %1845 = vmatprep.subr.bf16.mxu0 0
        %1846 = vmatpush1.bf16.msra.mxu0 %v1415
        %1847 = vmatprep.subr.bf16.mxu0 0
        %1848 = vmatpush2.bf16.msra.mxu0 %v1460
        %1849 = vmatprep.subr.bf16.mxu0 0
        %1850 = vmatpush2.bf16.msra.mxu0 %v1457
        %1851 = vmatprep.subr.bf16.mxu0 0
        %1852 = vmatpush2.bf16.msra.mxu0 %v1454
        %1853 = vmatprep.subr.bf16.mxu0 0
        %1854 = vmatpush2.bf16.msra.mxu0 %v1451
        %1855 = vmatprep.subr.bf16.mxu0 0
        %1856 = vmatpush2.bf16.msra.mxu0 %v1448
        %1857 = vmatprep.subr.bf16.mxu0 0
        %1858 = vmatpush2.bf16.msra.mxu0 %v1445
        %1859 = vmatprep.subr.bf16.mxu0 0
        %1860 = vmatpush2.bf16.msra.mxu0 %v1442
        %1861 = vmatprep.subr.bf16.mxu0 0
        %1862 = vmatpush2.bf16.msra.mxu0 %v1439
        %1863 = vmatprep.mubr.bf16.mxu0 %v1046
        %1864 = vmatmul.mubr.bf16.gmra.mxu0 %v1045
        %v1865 = vpop.f32.mrf.mxu0
        %v1866 = vadd.f32 %v1089, %v1865
        %v1867 = vpop.f32.mrf.mxu0
        %v1868 = vpop.f32.mrf.mxu0
        %v1869 = vadd.f32 %v1089, %v1868
        %v1870 = vpop.f32.mrf.mxu0
        %1871 = vmatprep.mubr.bf16.mxu0 %v1050
        %1872 = vmatmul.mubr.bf16.gmra.mxu0 %v1049
        %v1873 = vpop.f32.mrf.mxu0
        %v1874 = vadd.f32 %v1089, %v1873
        %v1875 = vpop.f32.mrf.mxu0
        %v1876 = vpop.f32.mrf.mxu0
        %v1877 = vadd.f32 %v1089, %v1876
        %v1878 = vpop.f32.mrf.mxu0
        %1879 = vmatprep.mubr.bf16.mxu0 %v1054
        %1880 = vmatmul.mubr.bf16.gmra.mxu0 %v1053
        %v1881 = vpop.f32.mrf.mxu0
        %v1882 = vadd.f32 %v1089, %v1881
        %v1883 = vpop.f32.mrf.mxu0
        %v1884 = vpop.f32.mrf.mxu0
        %v1885 = vadd.f32 %v1089, %v1884
        %v1886 = vpop.f32.mrf.mxu0
        %1887 = vmatprep.mubr.bf16.mxu0 %v1058
        %1888 = vmatmul.mubr.bf16.gmra.mxu0 %v1057
        %v1889 = vpop.f32.mrf.mxu0
        %v1890 = vadd.f32 %v1089, %v1889
        %v1891 = vpop.f32.mrf.mxu0
        %v1892 = vpop.f32.mrf.mxu0
        %v1893 = vadd.f32 %v1089, %v1892
        %v1894 = vpop.f32.mrf.mxu0
        %1895 = vmatprep.mubr.bf16.mxu0 %v1062
        %1896 = vmatmul.mubr.bf16.gmra.mxu0 %v1061
        %v1897 = vpop.f32.mrf.mxu0
        %v1898 = vadd.f32 %v1089, %v1897
        %v1899 = vpop.f32.mrf.mxu0
        %v1900 = vpop.f32.mrf.mxu0
        %v1901 = vadd.f32 %v1089, %v1900
        %v1902 = vpop.f32.mrf.mxu0
        %1903 = vmatprep.mubr.bf16.mxu0 %v1066
        %1904 = vmatmul.mubr.bf16.gmra.mxu0 %v1065
        %v1905 = vpop.f32.mrf.mxu0
        %v1906 = vadd.f32 %v1089, %v1905
        %v1907 = vpop.f32.mrf.mxu0
        %v1908 = vpop.f32.mrf.mxu0
        %v1909 = vadd.f32 %v1089, %v1908
        %v1910 = vpop.f32.mrf.mxu0
        %1911 = vmatprep.mubr.bf16.mxu0 %v1070
        %1912 = vmatmul.mubr.bf16.gmra.mxu0 %v1069
        %v1913 = vpop.f32.mrf.mxu0
        %v1914 = vadd.f32 %v1089, %v1913
        %v1915 = vpop.f32.mrf.mxu0
        %v1916 = vpop.f32.mrf.mxu0
        %v1917 = vadd.f32 %v1089, %v1916
        %v1918 = vpop.f32.mrf.mxu0
        %1919 = vmatprep.mubr.bf16.mxu0 %v1074
        %1920 = vmatmul.mubr.bf16.gmra.mxu0 %v1073
        %v1921 = vpop.f32.mrf.mxu0
        %v1922 = vadd.f32 %v1089, %v1921
        %v1923 = vpop.f32.mrf.mxu0
        %v1924 = vpop.f32.mrf.mxu0
        %v1925 = vadd.f32 %v1089, %v1924
        %v1926 = vpop.f32.mrf.mxu0
        %1927 = vdwg.mxu0
        %1928 = vmatprep.subr.bf16.mxu0 0
        %1929 = vmatpush1.bf16.msra.mxu0 %v1484
        %1930 = vmatprep.subr.bf16.mxu0 0
        %1931 = vmatpush1.bf16.msra.mxu0 %v1481
        %1932 = vmatprep.subr.bf16.mxu0 0
        %1933 = vmatpush1.bf16.msra.mxu0 %v1478
        %1934 = vmatprep.subr.bf16.mxu0 0
        %1935 = vmatpush1.bf16.msra.mxu0 %v1475
        %1936 = vmatprep.subr.bf16.mxu0 0
        %1937 = vmatpush1.bf16.msra.mxu0 %v1472
        %1938 = vmatprep.subr.bf16.mxu0 0
        %1939 = vmatpush1.bf16.msra.mxu0 %v1469
        %1940 = vmatprep.subr.bf16.mxu0 0
        %1941 = vmatpush1.bf16.msra.mxu0 %v1466
        %1942 = vmatprep.subr.bf16.mxu0 0
        %1943 = vmatpush1.bf16.msra.mxu0 %v1463
        %1944 = vmatprep.subr.bf16.mxu0 0
        %1945 = vmatpush2.bf16.msra.mxu0 %v1508
        %1946 = vmatprep.subr.bf16.mxu0 0
        %1947 = vmatpush2.bf16.msra.mxu0 %v1505
        %1948 = vmatprep.subr.bf16.mxu0 0
        %1949 = vmatpush2.bf16.msra.mxu0 %v1502
        %1950 = vmatprep.subr.bf16.mxu0 0
        %1951 = vmatpush2.bf16.msra.mxu0 %v1499
        %1952 = vmatprep.subr.bf16.mxu0 0
        %1953 = vmatpush2.bf16.msra.mxu0 %v1496
        %1954 = vmatprep.subr.bf16.mxu0 0
        %1955 = vmatpush2.bf16.msra.mxu0 %v1493
        %1956 = vmatprep.subr.bf16.mxu0 0
        %1957 = vmatpush2.bf16.msra.mxu0 %v1490
        %1958 = vmatprep.subr.bf16.mxu0 0
        %1959 = vmatpush2.bf16.msra.mxu0 %v1487
        %1960 = vmatprep.mubr.bf16.mxu0 %v1048
        %1961 = vmatmul.mubr.bf16.gmra.mxu0 %v1047
        %v1962 = vpop.f32.mrf.mxu0
        %v1963 = vadd.f32 %v1866, %v1962
        %v1964 = vpop.f32.mrf.mxu0
        %v1965 = vpop.f32.mrf.mxu0
        %v1966 = vadd.f32 %v1869, %v1965
        %v1967 = vpop.f32.mrf.mxu0
        %1968 = vmatprep.mubr.bf16.mxu0 %v1052
        %1969 = vmatmul.mubr.bf16.gmra.mxu0 %v1051
        %v1970 = vpop.f32.mrf.mxu0
        %v1971 = vadd.f32 %v1874, %v1970
        %v1972 = vpop.f32.mrf.mxu0
        %v1973 = vpop.f32.mrf.mxu0
        %v1974 = vadd.f32 %v1877, %v1973
        %v1975 = vpop.f32.mrf.mxu0
        %1976 = vmatprep.mubr.bf16.mxu0 %v1056
        %1977 = vmatmul.mubr.bf16.gmra.mxu0 %v1055
        %v1978 = vpop.f32.mrf.mxu0
        %v1979 = vadd.f32 %v1882, %v1978
        %v1980 = vpop.f32.mrf.mxu0
        %v1981 = vpop.f32.mrf.mxu0
        %v1982 = vadd.f32 %v1885, %v1981
        %v1983 = vpop.f32.mrf.mxu0
        %1984 = vmatprep.mubr.bf16.mxu0 %v1060
        %1985 = vmatmul.mubr.bf16.gmra.mxu0 %v1059
        %v1986 = vpop.f32.mrf.mxu0
        %v1987 = vadd.f32 %v1890, %v1986
        %v1988 = vpop.f32.mrf.mxu0
        %v1989 = vpop.f32.mrf.mxu0
        %v1990 = vadd.f32 %v1893, %v1989
        %v1991 = vpop.f32.mrf.mxu0
        %1992 = vmatprep.mubr.bf16.mxu0 %v1064
        %1993 = vmatmul.mubr.bf16.gmra.mxu0 %v1063
        %v1994 = vpop.f32.mrf.mxu0
        %v1995 = vadd.f32 %v1898, %v1994
        %v1996 = vpop.f32.mrf.mxu0
        %v1997 = vpop.f32.mrf.mxu0
        %v1998 = vadd.f32 %v1901, %v1997
        %v1999 = vpop.f32.mrf.mxu0
        %2000 = vmatprep.mubr.bf16.mxu0 %v1068
        %2001 = vmatmul.mubr.bf16.gmra.mxu0 %v1067
        %v2002 = vpop.f32.mrf.mxu0
        %v2003 = vadd.f32 %v1906, %v2002
        %v2004 = vpop.f32.mrf.mxu0
        %v2005 = vpop.f32.mrf.mxu0
        %v2006 = vadd.f32 %v1909, %v2005
        %v2007 = vpop.f32.mrf.mxu0
        %2008 = vmatprep.mubr.bf16.mxu0 %v1072
        %2009 = vmatmul.mubr.bf16.gmra.mxu0 %v1071
        %v2010 = vpop.f32.mrf.mxu0
        %v2011 = vadd.f32 %v1914, %v2010
        %v2012 = vpop.f32.mrf.mxu0
        %v2013 = vpop.f32.mrf.mxu0
        %v2014 = vadd.f32 %v1917, %v2013
        %v2015 = vpop.f32.mrf.mxu0
        %2016 = vmatprep.mubr.bf16.mxu0 %v1076
        %2017 = vmatmul.mubr.bf16.gmra.mxu0 %v1075
        %v2018 = vpop.f32.mrf.mxu0
        %v2019 = vadd.f32 %v1922, %v2018
        %v2020 = vpop.f32.mrf.mxu0
        %v2021 = vpop.f32.mrf.mxu0
        %v2022 = vadd.f32 %v1925, %v2021
        %v2023 = vpop.f32.mrf.mxu0
        %2024 = vdwg.mxu0
        %v2025 = vmax.f32 %v1753, 0.0
        %v2026 = vmax.f32 %v1755, 0.0
        %v2027 = vmax.f32 %v1963, 0.0
        %v2028 = vmax.f32 %v1757, 0.0
        %v2029 = vmax.f32 %v1759, 0.0
        %v2030 = vmax.f32 %v1966, 0.0
        %v2031 = vmax.f32 %v1763, 0.0
        %v2032 = vmax.f32 %v1765, 0.0
        %v2033 = vmax.f32 %v1971, 0.0
        %v2034 = vmax.f32 %v1767, 0.0
        %v2035 = vmax.f32 %v1769, 0.0
        %v2036 = vmax.f32 %v1974, 0.0
        %v2037 = vmax.f32 %v1773, 0.0
        %v2038 = vmax.f32 %v1775, 0.0
        %v2039 = vmax.f32 %v1979, 0.0
        %v2040 = vmax.f32 %v1777, 0.0
        %v2041 = vmax.f32 %v1779, 0.0
        %v2042 = vmax.f32 %v1982, 0.0
        %v2043 = vmax.f32 %v1783, 0.0
        %v2044 = vmax.f32 %v1785, 0.0
        %v2045 = vmax.f32 %v1987, 0.0
        %v2046 = vmax.f32 %v1787, 0.0
        %v2047 = vmax.f32 %v1789, 0.0
        %v2048 = vmax.f32 %v1990, 0.0
        %v2049 = vmax.f32 %v1793, 0.0
        %v2050 = vmax.f32 %v1795, 0.0
        %v2051 = vmax.f32 %v1995, 0.0
        %v2052 = vmax.f32 %v1797, 0.0
        %v2053 = vmax.f32 %v1799, 0.0
        %v2054 = vmax.f32 %v1998, 0.0
        %v2055 = vmax.f32 %v1803, 0.0
        %v2056 = vmax.f32 %v1805, 0.0
        %v2057 = vmax.f32 %v2003, 0.0
        %v2058 = vmax.f32 %v1807, 0.0
        %v2059 = vmax.f32 %v1809, 0.0
        %v2060 = vmax.f32 %v2006, 0.0
        %v2061 = vmax.f32 %v1813, 0.0
        %v2062 = vmax.f32 %v1815, 0.0
        %v2063 = vmax.f32 %v2011, 0.0
        %v2064 = vmax.f32 %v1817, 0.0
        %v2065 = vmax.f32 %v1819, 0.0
        %v2066 = vmax.f32 %v2014, 0.0
        %v2067 = vmax.f32 %v1823, 0.0
        %v2068 = vmax.f32 %v1825, 0.0
        %v2069 = vmax.f32 %v2019, 0.0
        %v2070 = vmax.f32 %v1827, 0.0
        %v2071 = vmax.f32 %v1829, 0.0
        %v2072 = vmax.f32 %v2022, 0.0
        %v2074 = vlaneseq
        %v2075 = vshrl.u32 %v2074, 7
        %v2076 = vsub.s32 0, %v2075
        %v2077 = vrot.slane %v499, %v2076
        %v2078 = vlaneseq
        %v2079 = vshrl.u32 %v2078, 7
        %v2080 = vsub.s32 1, %v2079
        %v2081 = vrot.slane %v499, %v2080
        %v2082 = vlaneseq
        %v2083 = vshrl.u32 %v2082, 7
        %v2084 = vsub.s32 2, %v2083
        %v2085 = vrot.slane %v499, %v2084
        %v2089 = vmul.f32 %v2025, %v2077
        %v2090 = vmul.f32 %v2026, %v2081
        %v2091 = vmul.f32 %v2027, %v2085
        %v2092 = vmul.f32 %v2028, %v2077
        %v2093 = vmul.f32 %v2029, %v2081
        %v2094 = vmul.f32 %v2030, %v2085
        %v2095 = vmul.f32 %v2031, %v2077
        %v2096 = vmul.f32 %v2032, %v2081
        %v2097 = vmul.f32 %v2033, %v2085
        %v2098 = vmul.f32 %v2034, %v2077
        %v2099 = vmul.f32 %v2035, %v2081
        %v2100 = vmul.f32 %v2036, %v2085
        %v2101 = vmul.f32 %v2037, %v2077
        %v2102 = vmul.f32 %v2038, %v2081
        %v2103 = vmul.f32 %v2039, %v2085
        %v2104 = vmul.f32 %v2040, %v2077
        %v2105 = vmul.f32 %v2041, %v2081
        %v2106 = vmul.f32 %v2042, %v2085
        %v2107 = vmul.f32 %v2043, %v2077
        %v2108 = vmul.f32 %v2044, %v2081
        %v2109 = vmul.f32 %v2045, %v2085
        %v2110 = vmul.f32 %v2046, %v2077
        %v2111 = vmul.f32 %v2047, %v2081
        %v2112 = vmul.f32 %v2048, %v2085
        %v2113 = vmul.f32 %v2049, %v2077
        %v2114 = vmul.f32 %v2050, %v2081
        %v2115 = vmul.f32 %v2051, %v2085
        %v2116 = vmul.f32 %v2052, %v2077
        %v2117 = vmul.f32 %v2053, %v2081
        %v2118 = vmul.f32 %v2054, %v2085
        %v2119 = vmul.f32 %v2055, %v2077
        %v2120 = vmul.f32 %v2056, %v2081
        %v2121 = vmul.f32 %v2057, %v2085
        %v2122 = vmul.f32 %v2058, %v2077
        %v2123 = vmul.f32 %v2059, %v2081
        %v2124 = vmul.f32 %v2060, %v2085
        %v2125 = vmul.f32 %v2061, %v2077
        %v2126 = vmul.f32 %v2062, %v2081
        %v2127 = vmul.f32 %v2063, %v2085
        %v2128 = vmul.f32 %v2064, %v2077
        %v2129 = vmul.f32 %v2065, %v2081
        %v2130 = vmul.f32 %v2066, %v2085
        %v2131 = vmul.f32 %v2067, %v2077
        %v2132 = vmul.f32 %v2068, %v2081
        %v2133 = vmul.f32 %v2069, %v2085
        %v2134 = vmul.f32 %v2070, %v2077
        %v2135 = vmul.f32 %v2071, %v2081
        %v2136 = vmul.f32 %v2072, %v2085
        %v2137 = vadd.f32 %v2089, %v2090
        %v2138 = vadd.f32 %v2137, %v2091
        %2139 = vadd.xlane.f32.xlu0 %v2138
        %v2140 = vpop.xlane.xlu0 %2139
        %v2141 = vadd.f32 %v2092, %v2093
        %v2142 = vadd.f32 %v2141, %v2094
        %2143 = vadd.xlane.f32.xlu0 %v2142
        %v2144 = vpop.xlane.xlu0 %2143
        %v2145 = vadd.f32 %v2095, %v2096
        %v2146 = vadd.f32 %v2145, %v2097
        %2147 = vadd.xlane.f32.xlu0 %v2146
        %v2148 = vpop.xlane.xlu0 %2147
        %v2149 = vadd.f32 %v2098, %v2099
        %v2150 = vadd.f32 %v2149, %v2100
        %2151 = vadd.xlane.f32.xlu0 %v2150
        %v2152 = vpop.xlane.xlu0 %2151
        %v2153 = vadd.f32 %v2101, %v2102
        %v2154 = vadd.f32 %v2153, %v2103
        %2155 = vadd.xlane.f32.xlu0 %v2154
        %v2156 = vpop.xlane.xlu0 %2155
        %v2157 = vadd.f32 %v2104, %v2105
        %v2158 = vadd.f32 %v2157, %v2106
        %2159 = vadd.xlane.f32.xlu0 %v2158
        %v2160 = vpop.xlane.xlu0 %2159
        %v2161 = vadd.f32 %v2107, %v2108
        %v2162 = vadd.f32 %v2161, %v2109
        %2163 = vadd.xlane.f32.xlu0 %v2162
        %v2164 = vpop.xlane.xlu0 %2163
        %v2165 = vadd.f32 %v2110, %v2111
        %v2166 = vadd.f32 %v2165, %v2112
        %2167 = vadd.xlane.f32.xlu0 %v2166
        %v2168 = vpop.xlane.xlu0 %2167
        %v2169 = vadd.f32 %v2113, %v2114
        %v2170 = vadd.f32 %v2169, %v2115
        %2171 = vadd.xlane.f32.xlu0 %v2170
        %v2172 = vpop.xlane.xlu0 %2171
        %v2173 = vadd.f32 %v2116, %v2117
        %v2174 = vadd.f32 %v2173, %v2118
        %2175 = vadd.xlane.f32.xlu0 %v2174
        %v2176 = vpop.xlane.xlu0 %2175
        %v2177 = vadd.f32 %v2119, %v2120
        %v2178 = vadd.f32 %v2177, %v2121
        %2179 = vadd.xlane.f32.xlu0 %v2178
        %v2180 = vpop.xlane.xlu0 %2179
        %v2181 = vadd.f32 %v2122, %v2123
        %v2182 = vadd.f32 %v2181, %v2124
        %2183 = vadd.xlane.f32.xlu0 %v2182
        %v2184 = vpop.xlane.xlu0 %2183
        %v2185 = vadd.f32 %v2125, %v2126
        %v2186 = vadd.f32 %v2185, %v2127
        %2187 = vadd.xlane.f32.xlu0 %v2186
        %v2188 = vpop.xlane.xlu0 %2187
        %v2189 = vadd.f32 %v2128, %v2129
        %v2190 = vadd.f32 %v2189, %v2130
        %2191 = vadd.xlane.f32.xlu0 %v2190
        %v2192 = vpop.xlane.xlu0 %2191
        %v2193 = vadd.f32 %v2131, %v2132
        %v2194 = vadd.f32 %v2193, %v2133
        %2195 = vadd.xlane.f32.xlu0 %v2194
        %v2196 = vpop.xlane.xlu0 %2195
        %v2197 = vadd.f32 %v2134, %v2135
        %v2198 = vadd.f32 %v2197, %v2136
        %2199 = vadd.xlane.f32.xlu0 %v2198
        %v2200 = vpop.xlane.xlu0 %2199
        %v2201 = vstv %s500
        %v2202 = vadd.f32 %v2140, %v2201
        %v2203 = vadd.f32 %v2144, %v2201
        %v2204 = vadd.f32 %v2148, %v2201
        %v2205 = vadd.f32 %v2152, %v2201
        %v2206 = vadd.f32 %v2156, %v2201
        %v2207 = vadd.f32 %v2160, %v2201
        %v2208 = vadd.f32 %v2164, %v2201
        %v2209 = vadd.f32 %v2168, %v2201
        %v2210 = vadd.f32 %v2172, %v2201
        %v2211 = vadd.f32 %v2176, %v2201
        %v2212 = vadd.f32 %v2180, %v2201
        %v2213 = vadd.f32 %v2184, %v2201
        %v2214 = vadd.f32 %v2188, %v2201
        %v2215 = vadd.f32 %v2192, %v2201
        %v2216 = vadd.f32 %v2196, %v2201
        %v2217 = vadd.f32 %v2200, %v2201
        %v2218 = vmax.f32 %v2202, 0.0
        %v2219 = vmax.f32 %v2203, 0.0
        %v2220 = vmax.f32 %v2204, 0.0
        %v2221 = vmax.f32 %v2205, 0.0
        %v2222 = vmax.f32 %v2206, 0.0
        %v2223 = vmax.f32 %v2207, 0.0
        %v2224 = vmax.f32 %v2208, 0.0
        %v2225 = vmax.f32 %v2209, 0.0
        %v2226 = vmax.f32 %v2210, 0.0
        %v2227 = vmax.f32 %v2211, 0.0
        %v2228 = vmax.f32 %v2212, 0.0
        %v2229 = vmax.f32 %v2213, 0.0
        %v2230 = vmax.f32 %v2214, 0.0
        %v2231 = vmax.f32 %v2215, 0.0
        %v2232 = vmax.f32 %v2216, 0.0
        %v2233 = vmax.f32 %v2217, 0.0
        %s2234 = sld [smem:[#allocation8]]
        %v2235 = vstv %s2234
        %v2236 = vmul.f32 %v2235, %v2218
        %v2237 = vmul.f32 %v2235, %v2219
        %v2238 = vmul.f32 %v2235, %v2220
        %v2239 = vmul.f32 %v2235, %v2221
        %v2240 = vmul.f32 %v2235, %v2222
        %v2241 = vmul.f32 %v2235, %v2223
        %v2242 = vmul.f32 %v2235, %v2224
        %v2243 = vmul.f32 %v2235, %v2225
        %v2244 = vmul.f32 %v2235, %v2226
        %v2245 = vmul.f32 %v2235, %v2227
        %v2246 = vmul.f32 %v2235, %v2228
        %v2247 = vmul.f32 %v2235, %v2229
        %v2248 = vmul.f32 %v2235, %v2230
        %v2249 = vmul.f32 %v2235, %v2231
        %v2250 = vmul.f32 %v2235, %v2232
        %v2251 = vmul.f32 %v2235, %v2233
        %2252 = vset.pattern.permute.xlu0 2
        %2253 = vperm.xlu0 %2252, %v502
        %v2254 = vpop.permute.xlu0 %2253
        %2256 = vset.pattern.permute.xlu0 2
        %2257 = vperm.xlu0 %2256, %v503
        %v2258 = vpop.permute.xlu0 %2257
        %2260 = vset.pattern.permute.xlu0 2
        %2261 = vperm.xlu0 %2260, %v504
        %v2262 = vpop.permute.xlu0 %2261
        %2264 = vset.pattern.permute.xlu0 2
        %2265 = vperm.xlu0 %2264, %v505
        %v2266 = vpop.permute.xlu0 %2265
        %2268 = vset.pattern.permute.xlu0 2
        %2269 = vperm.xlu0 %2268, %v506
        %v2270 = vpop.permute.xlu0 %2269
        %2272 = vset.pattern.permute.xlu0 2
        %2273 = vperm.xlu0 %2272, %v507
        %v2274 = vpop.permute.xlu0 %2273
        %2276 = vset.pattern.permute.xlu0 2
        %2277 = vperm.xlu0 %2276, %v508
        %v2278 = vpop.permute.xlu0 %2277
        %2280 = vset.pattern.permute.xlu0 2
        %2281 = vperm.xlu0 %2280, %v509
        %v2282 = vpop.permute.xlu0 %2281
        %2284 = vset.pattern.permute.xlu0 2
        %2285 = vperm.xlu0 %2284, %v510
        %v2286 = vpop.permute.xlu0 %2285
        %2288 = vset.pattern.permute.xlu0 2
        %2289 = vperm.xlu0 %2288, %v511
        %v2290 = vpop.permute.xlu0 %2289
        %2292 = vset.pattern.permute.xlu0 2
        %2293 = vperm.xlu0 %2292, %v512
        %v2294 = vpop.permute.xlu0 %2293
        %2296 = vset.pattern.permute.xlu0 2
        %2297 = vperm.xlu0 %2296, %v513
        %v2298 = vpop.permute.xlu0 %2297
        %2300 = vset.pattern.permute.xlu0 2
        %2301 = vperm.xlu0 %2300, %v514
        %v2302 = vpop.permute.xlu0 %2301
        %2304 = vset.pattern.permute.xlu0 2
        %2305 = vperm.xlu0 %2304, %v515
        %v2306 = vpop.permute.xlu0 %2305
        %2308 = vset.pattern.permute.xlu0 2
        %2309 = vperm.xlu0 %2308, %v516
        %v2310 = vpop.permute.xlu0 %2309
        %2312 = vset.pattern.permute.xlu0 2
        %2313 = vperm.xlu0 %2312, %v517
        %v2314 = vpop.permute.xlu0 %2313
        %v2316 = vmul.f32 %v2254, %v602
        %v2317 = vmul.f32 %v2254, %v606
        %v2318 = vmul.f32 %v2254, %v610
        %v2319 = vmul.f32 %v2254, %v614
        %v2320 = vmul.f32 %v2258, %v602
        %v2321 = vmul.f32 %v2258, %v606
        %v2322 = vmul.f32 %v2258, %v610
        %v2323 = vmul.f32 %v2258, %v614
        %v2324 = vmul.f32 %v2262, %v602
        %v2325 = vmul.f32 %v2262, %v606
        %v2326 = vmul.f32 %v2262, %v610
        %v2327 = vmul.f32 %v2262, %v614
        %v2328 = vmul.f32 %v2266, %v602
        %v2329 = vmul.f32 %v2266, %v606
        %v2330 = vmul.f32 %v2266, %v610
        %v2331 = vmul.f32 %v2266, %v614
        %v2332 = vmul.f32 %v2270, %v602
        %v2333 = vmul.f32 %v2270, %v606
        %v2334 = vmul.f32 %v2270, %v610
        %v2335 = vmul.f32 %v2270, %v614
        %v2336 = vmul.f32 %v2274, %v602
        %v2337 = vmul.f32 %v2274, %v606
        %v2338 = vmul.f32 %v2274, %v610
        %v2339 = vmul.f32 %v2274, %v614
        %v2340 = vmul.f32 %v2278, %v602
        %v2341 = vmul.f32 %v2278, %v606
        %v2342 = vmul.f32 %v2278, %v610
        %v2343 = vmul.f32 %v2278, %v614
        %v2344 = vmul.f32 %v2282, %v602
        %v2345 = vmul.f32 %v2282, %v606
        %v2346 = vmul.f32 %v2282, %v610
        %v2347 = vmul.f32 %v2282, %v614
        %v2348 = vmul.f32 %v2286, %v602
        %v2349 = vmul.f32 %v2286, %v606
        %v2350 = vmul.f32 %v2286, %v610
        %v2351 = vmul.f32 %v2286, %v614
        %v2352 = vmul.f32 %v2290, %v602
        %v2353 = vmul.f32 %v2290, %v606
        %v2354 = vmul.f32 %v2290, %v610
        %v2355 = vmul.f32 %v2290, %v614
        %v2356 = vmul.f32 %v2294, %v602
        %v2357 = vmul.f32 %v2294, %v606
        %v2358 = vmul.f32 %v2294, %v610
        %v2359 = vmul.f32 %v2294, %v614
        %v2360 = vmul.f32 %v2298, %v602
        %v2361 = vmul.f32 %v2298, %v606
        %v2362 = vmul.f32 %v2298, %v610
        %v2363 = vmul.f32 %v2298, %v614
        %v2364 = vmul.f32 %v2302, %v602
        %v2365 = vmul.f32 %v2302, %v606
        %v2366 = vmul.f32 %v2302, %v610
        %v2367 = vmul.f32 %v2302, %v614
        %v2368 = vmul.f32 %v2306, %v602
        %v2369 = vmul.f32 %v2306, %v606
        %v2370 = vmul.f32 %v2306, %v610
        %v2371 = vmul.f32 %v2306, %v614
        %v2372 = vmul.f32 %v2310, %v602
        %v2373 = vmul.f32 %v2310, %v606
        %v2374 = vmul.f32 %v2310, %v610
        %v2375 = vmul.f32 %v2310, %v614
        %v2376 = vmul.f32 %v2314, %v602
        %v2377 = vmul.f32 %v2314, %v606
        %v2378 = vmul.f32 %v2314, %v610
        %v2379 = vmul.f32 %v2314, %v614
        %2380 = vset.pattern.permute.xlu0 3
        %2381 = vperm.xlu0 %2380, %v502
        %v2382 = vpop.permute.xlu0 %2381
        %2384 = vset.pattern.permute.xlu0 3
        %2385 = vperm.xlu0 %2384, %v503
        %v2386 = vpop.permute.xlu0 %2385
        %2388 = vset.pattern.permute.xlu0 3
        %2389 = vperm.xlu0 %2388, %v504
        %v2390 = vpop.permute.xlu0 %2389
        %2392 = vset.pattern.permute.xlu0 3
        %2393 = vperm.xlu0 %2392, %v505
        %v2394 = vpop.permute.xlu0 %2393
        %2396 = vset.pattern.permute.xlu0 3
        %2397 = vperm.xlu0 %2396, %v506
        %v2398 = vpop.permute.xlu0 %2397
        %2400 = vset.pattern.permute.xlu0 3
        %2401 = vperm.xlu0 %2400, %v507
        %v2402 = vpop.permute.xlu0 %2401
        %2404 = vset.pattern.permute.xlu0 3
        %2405 = vperm.xlu0 %2404, %v508
        %v2406 = vpop.permute.xlu0 %2405
        %2408 = vset.pattern.permute.xlu0 3
        %2409 = vperm.xlu0 %2408, %v509
        %v2410 = vpop.permute.xlu0 %2409
        %2412 = vset.pattern.permute.xlu0 3
        %2413 = vperm.xlu0 %2412, %v510
        %v2414 = vpop.permute.xlu0 %2413
        %2416 = vset.pattern.permute.xlu0 3
        %2417 = vperm.xlu0 %2416, %v511
        %v2418 = vpop.permute.xlu0 %2417
        %2420 = vset.pattern.permute.xlu0 3
        %2421 = vperm.xlu0 %2420, %v512
        %v2422 = vpop.permute.xlu0 %2421
        %2424 = vset.pattern.permute.xlu0 3
        %2425 = vperm.xlu0 %2424, %v513
        %v2426 = vpop.permute.xlu0 %2425
        %2428 = vset.pattern.permute.xlu0 3
        %2429 = vperm.xlu0 %2428, %v514
        %v2430 = vpop.permute.xlu0 %2429
        %2432 = vset.pattern.permute.xlu0 3
        %2433 = vperm.xlu0 %2432, %v515
        %v2434 = vpop.permute.xlu0 %2433
        %2436 = vset.pattern.permute.xlu0 3
        %2437 = vperm.xlu0 %2436, %v516
        %v2438 = vpop.permute.xlu0 %2437
        %2440 = vset.pattern.permute.xlu0 3
        %2441 = vperm.xlu0 %2440, %v517
        %v2442 = vpop.permute.xlu0 %2441
        %v2444 = vmul.f32 %v2382, %v751
        %v2445 = vmul.f32 %v2382, %v755
        %v2446 = vmul.f32 %v2382, %v759
        %v2447 = vmul.f32 %v2382, %v763
        %v2448 = vmul.f32 %v2386, %v751
        %v2449 = vmul.f32 %v2386, %v755
        %v2450 = vmul.f32 %v2386, %v759
        %v2451 = vmul.f32 %v2386, %v763
        %v2452 = vmul.f32 %v2390, %v751
        %v2453 = vmul.f32 %v2390, %v755
        %v2454 = vmul.f32 %v2390, %v759
        %v2455 = vmul.f32 %v2390, %v763
        %v2456 = vmul.f32 %v2394, %v751
        %v2457 = vmul.f32 %v2394, %v755
        %v2458 = vmul.f32 %v2394, %v759
        %v2459 = vmul.f32 %v2394, %v763
        %v2460 = vmul.f32 %v2398, %v751
        %v2461 = vmul.f32 %v2398, %v755
        %v2462 = vmul.f32 %v2398, %v759
        %v2463 = vmul.f32 %v2398, %v763
        %v2464 = vmul.f32 %v2402, %v751
        %v2465 = vmul.f32 %v2402, %v755
        %v2466 = vmul.f32 %v2402, %v759
        %v2467 = vmul.f32 %v2402, %v763
        %v2468 = vmul.f32 %v2406, %v751
        %v2469 = vmul.f32 %v2406, %v755
        %v2470 = vmul.f32 %v2406, %v759
        %v2471 = vmul.f32 %v2406, %v763
        %v2472 = vmul.f32 %v2410, %v751
        %v2473 = vmul.f32 %v2410, %v755
        %v2474 = vmul.f32 %v2410, %v759
        %v2475 = vmul.f32 %v2410, %v763
        %v2476 = vmul.f32 %v2414, %v751
        %v2477 = vmul.f32 %v2414, %v755
        %v2478 = vmul.f32 %v2414, %v759
        %v2479 = vmul.f32 %v2414, %v763
        %v2480 = vmul.f32 %v2418, %v751
        %v2481 = vmul.f32 %v2418, %v755
        %v2482 = vmul.f32 %v2418, %v759
        %v2483 = vmul.f32 %v2418, %v763
        %v2484 = vmul.f32 %v2422, %v751
        %v2485 = vmul.f32 %v2422, %v755
        %v2486 = vmul.f32 %v2422, %v759
        %v2487 = vmul.f32 %v2422, %v763
        %v2488 = vmul.f32 %v2426, %v751
        %v2489 = vmul.f32 %v2426, %v755
        %v2490 = vmul.f32 %v2426, %v759
        %v2491 = vmul.f32 %v2426, %v763
        %v2492 = vmul.f32 %v2430, %v751
        %v2493 = vmul.f32 %v2430, %v755
        %v2494 = vmul.f32 %v2430, %v759
        %v2495 = vmul.f32 %v2430, %v763
        %v2496 = vmul.f32 %v2434, %v751
        %v2497 = vmul.f32 %v2434, %v755
        %v2498 = vmul.f32 %v2434, %v759
        %v2499 = vmul.f32 %v2434, %v763
        %v2500 = vmul.f32 %v2438, %v751
        %v2501 = vmul.f32 %v2438, %v755
        %v2502 = vmul.f32 %v2438, %v759
        %v2503 = vmul.f32 %v2438, %v763
        %v2504 = vmul.f32 %v2442, %v751
        %v2505 = vmul.f32 %v2442, %v755
        %v2506 = vmul.f32 %v2442, %v759
        %v2507 = vmul.f32 %v2442, %v763
        %v2508 = vadd.f32 %v2316, %v2444
        %v2509 = vadd.f32 %v2317, %v2445
        %v2510 = vadd.f32 %v2318, %v2446
        %v2511 = vadd.f32 %v2319, %v2447
        %v2512 = vadd.f32 %v2320, %v2448
        %v2513 = vadd.f32 %v2321, %v2449
        %v2514 = vadd.f32 %v2322, %v2450
        %v2515 = vadd.f32 %v2323, %v2451
        %v2516 = vadd.f32 %v2324, %v2452
        %v2517 = vadd.f32 %v2325, %v2453
        %v2518 = vadd.f32 %v2326, %v2454
        %v2519 = vadd.f32 %v2327, %v2455
        %v2520 = vadd.f32 %v2328, %v2456
        %v2521 = vadd.f32 %v2329, %v2457
        %v2522 = vadd.f32 %v2330, %v2458
        %v2523 = vadd.f32 %v2331, %v2459
        %v2524 = vadd.f32 %v2332, %v2460
        %v2525 = vadd.f32 %v2333, %v2461
        %v2526 = vadd.f32 %v2334, %v2462
        %v2527 = vadd.f32 %v2335, %v2463
        %v2528 = vadd.f32 %v2336, %v2464
        %v2529 = vadd.f32 %v2337, %v2465
        %v2530 = vadd.f32 %v2338, %v2466
        %v2531 = vadd.f32 %v2339, %v2467
        %v2532 = vadd.f32 %v2340, %v2468
        %v2533 = vadd.f32 %v2341, %v2469
        %v2534 = vadd.f32 %v2342, %v2470
        %v2535 = vadd.f32 %v2343, %v2471
        %v2536 = vadd.f32 %v2344, %v2472
        %v2537 = vadd.f32 %v2345, %v2473
        %v2538 = vadd.f32 %v2346, %v2474
        %v2539 = vadd.f32 %v2347, %v2475
        %v2540 = vadd.f32 %v2348, %v2476
        %v2541 = vadd.f32 %v2349, %v2477
        %v2542 = vadd.f32 %v2350, %v2478
        %v2543 = vadd.f32 %v2351, %v2479
        %v2544 = vadd.f32 %v2352, %v2480
        %v2545 = vadd.f32 %v2353, %v2481
        %v2546 = vadd.f32 %v2354, %v2482
        %v2547 = vadd.f32 %v2355, %v2483
        %v2548 = vadd.f32 %v2356, %v2484
        %v2549 = vadd.f32 %v2357, %v2485
        %v2550 = vadd.f32 %v2358, %v2486
        %v2551 = vadd.f32 %v2359, %v2487
        %v2552 = vadd.f32 %v2360, %v2488
        %v2553 = vadd.f32 %v2361, %v2489
        %v2554 = vadd.f32 %v2362, %v2490
        %v2555 = vadd.f32 %v2363, %v2491
        %v2556 = vadd.f32 %v2364, %v2492
        %v2557 = vadd.f32 %v2365, %v2493
        %v2558 = vadd.f32 %v2366, %v2494
        %v2559 = vadd.f32 %v2367, %v2495
        %v2560 = vadd.f32 %v2368, %v2496
        %v2561 = vadd.f32 %v2369, %v2497
        %v2562 = vadd.f32 %v2370, %v2498
        %v2563 = vadd.f32 %v2371, %v2499
        %v2564 = vadd.f32 %v2372, %v2500
        %v2565 = vadd.f32 %v2373, %v2501
        %v2566 = vadd.f32 %v2374, %v2502
        %v2567 = vadd.f32 %v2375, %v2503
        %v2568 = vadd.f32 %v2376, %v2504
        %v2569 = vadd.f32 %v2377, %v2505
        %v2570 = vadd.f32 %v2378, %v2506
        %v2571 = vadd.f32 %v2379, %v2507
        %v2572 = vadd.f32 %v2508, %v900
        %v2573 = vadd.f32 %v2509, %v904
        %v2574 = vadd.f32 %v2510, %v908
        %v2575 = vadd.f32 %v2511, %v912
        %v2576 = vadd.f32 %v2512, %v900
        %v2577 = vadd.f32 %v2513, %v904
        %v2578 = vadd.f32 %v2514, %v908
        %v2579 = vadd.f32 %v2515, %v912
        %v2580 = vadd.f32 %v2516, %v900
        %v2581 = vadd.f32 %v2517, %v904
        %v2582 = vadd.f32 %v2518, %v908
        %v2583 = vadd.f32 %v2519, %v912
        %v2584 = vadd.f32 %v2520, %v900
        %v2585 = vadd.f32 %v2521, %v904
        %v2586 = vadd.f32 %v2522, %v908
        %v2587 = vadd.f32 %v2523, %v912
        %v2588 = vadd.f32 %v2524, %v900
        %v2589 = vadd.f32 %v2525, %v904
        %v2590 = vadd.f32 %v2526, %v908
        %v2591 = vadd.f32 %v2527, %v912
        %v2592 = vadd.f32 %v2528, %v900
        %v2593 = vadd.f32 %v2529, %v904
        %v2594 = vadd.f32 %v2530, %v908
        %v2595 = vadd.f32 %v2531, %v912
        %v2596 = vadd.f32 %v2532, %v900
        %v2597 = vadd.f32 %v2533, %v904
        %v2598 = vadd.f32 %v2534, %v908
        %v2599 = vadd.f32 %v2535, %v912
        %v2600 = vadd.f32 %v2536, %v900
        %v2601 = vadd.f32 %v2537, %v904
        %v2602 = vadd.f32 %v2538, %v908
        %v2603 = vadd.f32 %v2539, %v912
        %v2604 = vadd.f32 %v2540, %v900
        %v2605 = vadd.f32 %v2541, %v904
        %v2606 = vadd.f32 %v2542, %v908
        %v2607 = vadd.f32 %v2543, %v912
        %v2608 = vadd.f32 %v2544, %v900
        %v2609 = vadd.f32 %v2545, %v904
        %v2610 = vadd.f32 %v2546, %v908
        %v2611 = vadd.f32 %v2547, %v912
        %v2612 = vadd.f32 %v2548, %v900
        %v2613 = vadd.f32 %v2549, %v904
        %v2614 = vadd.f32 %v2550, %v908
        %v2615 = vadd.f32 %v2551, %v912
        %v2616 = vadd.f32 %v2552, %v900
        %v2617 = vadd.f32 %v2553, %v904
        %v2618 = vadd.f32 %v2554, %v908
        %v2619 = vadd.f32 %v2555, %v912
        %v2620 = vadd.f32 %v2556, %v900
        %v2621 = vadd.f32 %v2557, %v904
        %v2622 = vadd.f32 %v2558, %v908
        %v2623 = vadd.f32 %v2559, %v912
        %v2624 = vadd.f32 %v2560, %v900
        %v2625 = vadd.f32 %v2561, %v904
        %v2626 = vadd.f32 %v2562, %v908
        %v2627 = vadd.f32 %v2563, %v912
        %v2628 = vadd.f32 %v2564, %v900
        %v2629 = vadd.f32 %v2565, %v904
        %v2630 = vadd.f32 %v2566, %v908
        %v2631 = vadd.f32 %v2567, %v912
        %v2632 = vadd.f32 %v2568, %v900
        %v2633 = vadd.f32 %v2569, %v904
        %v2634 = vadd.f32 %v2570, %v908
        %v2635 = vadd.f32 %v2571, %v912
        %v2636 = vmax.f32 %v2572, 0.0
        %v2637 = vmax.f32 %v2573, 0.0
        %v2638 = vmax.f32 %v2574, 0.0
        %v2639 = vmax.f32 %v2575, 0.0
        %v2640 = vmax.f32 %v2576, 0.0
        %v2641 = vmax.f32 %v2577, 0.0
        %v2642 = vmax.f32 %v2578, 0.0
        %v2643 = vmax.f32 %v2579, 0.0
        %v2644 = vmax.f32 %v2580, 0.0
        %v2645 = vmax.f32 %v2581, 0.0
        %v2646 = vmax.f32 %v2582, 0.0
        %v2647 = vmax.f32 %v2583, 0.0
        %v2648 = vmax.f32 %v2584, 0.0
        %v2649 = vmax.f32 %v2585, 0.0
        %v2650 = vmax.f32 %v2586, 0.0
        %v2651 = vmax.f32 %v2587, 0.0
        %v2652 = vmax.f32 %v2588, 0.0
        %v2653 = vmax.f32 %v2589, 0.0
        %v2654 = vmax.f32 %v2590, 0.0
        %v2655 = vmax.f32 %v2591, 0.0
        %v2656 = vmax.f32 %v2592, 0.0
        %v2657 = vmax.f32 %v2593, 0.0
        %v2658 = vmax.f32 %v2594, 0.0
        %v2659 = vmax.f32 %v2595, 0.0
        %v2660 = vmax.f32 %v2596, 0.0
        %v2661 = vmax.f32 %v2597, 0.0
        %v2662 = vmax.f32 %v2598, 0.0
        %v2663 = vmax.f32 %v2599, 0.0
        %v2664 = vmax.f32 %v2600, 0.0
        %v2665 = vmax.f32 %v2601, 0.0
        %v2666 = vmax.f32 %v2602, 0.0
        %v2667 = vmax.f32 %v2603, 0.0
        %v2668 = vmax.f32 %v2604, 0.0
        %v2669 = vmax.f32 %v2605, 0.0
        %v2670 = vmax.f32 %v2606, 0.0
        %v2671 = vmax.f32 %v2607, 0.0
        %v2672 = vmax.f32 %v2608, 0.0
        %v2673 = vmax.f32 %v2609, 0.0
        %v2674 = vmax.f32 %v2610, 0.0
        %v2675 = vmax.f32 %v2611, 0.0
        %v2676 = vmax.f32 %v2612, 0.0
        %v2677 = vmax.f32 %v2613, 0.0
        %v2678 = vmax.f32 %v2614, 0.0
        %v2679 = vmax.f32 %v2615, 0.0
        %v2680 = vmax.f32 %v2616, 0.0
        %v2681 = vmax.f32 %v2617, 0.0
        %v2682 = vmax.f32 %v2618, 0.0
        %v2683 = vmax.f32 %v2619, 0.0
        %v2684 = vmax.f32 %v2620, 0.0
        %v2685 = vmax.f32 %v2621, 0.0
        %v2686 = vmax.f32 %v2622, 0.0
        %v2687 = vmax.f32 %v2623, 0.0
        %v2688 = vmax.f32 %v2624, 0.0
        %v2689 = vmax.f32 %v2625, 0.0
        %v2690 = vmax.f32 %v2626, 0.0
        %v2691 = vmax.f32 %v2627, 0.0
        %v2692 = vmax.f32 %v2628, 0.0
        %v2693 = vmax.f32 %v2629, 0.0
        %v2694 = vmax.f32 %v2630, 0.0
        %v2695 = vmax.f32 %v2631, 0.0
        %v2696 = vmax.f32 %v2632, 0.0
        %v2697 = vmax.f32 %v2633, 0.0
        %v2698 = vmax.f32 %v2634, 0.0
        %v2699 = vmax.f32 %v2635, 0.0
        %v2700 = vpack.c.bf16 %v2640, %v2636
        %v2701 = vpack.c.bf16 %v2641, %v2637
        %v2702 = vpack.c.bf16 %v2642, %v2638
        %v2703 = vpack.c.bf16 %v2643, %v2639
        %v2704 = vpack.c.bf16 %v2648, %v2644
        %v2705 = vpack.c.bf16 %v2649, %v2645
        %v2706 = vpack.c.bf16 %v2650, %v2646
        %v2707 = vpack.c.bf16 %v2651, %v2647
        %v2708 = vpack.c.bf16 %v2656, %v2652
        %v2709 = vpack.c.bf16 %v2657, %v2653
        %v2710 = vpack.c.bf16 %v2658, %v2654
        %v2711 = vpack.c.bf16 %v2659, %v2655
        %v2712 = vpack.c.bf16 %v2664, %v2660
        %v2713 = vpack.c.bf16 %v2665, %v2661
        %v2714 = vpack.c.bf16 %v2666, %v2662
        %v2715 = vpack.c.bf16 %v2667, %v2663
        %v2716 = vpack.c.bf16 %v2672, %v2668
        %v2717 = vpack.c.bf16 %v2673, %v2669
        %v2718 = vpack.c.bf16 %v2674, %v2670
        %v2719 = vpack.c.bf16 %v2675, %v2671
        %v2720 = vpack.c.bf16 %v2680, %v2676
        %v2721 = vpack.c.bf16 %v2681, %v2677
        %v2722 = vpack.c.bf16 %v2682, %v2678
        %v2723 = vpack.c.bf16 %v2683, %v2679
        %v2724 = vpack.c.bf16 %v2688, %v2684
        %v2725 = vpack.c.bf16 %v2689, %v2685
        %v2726 = vpack.c.bf16 %v2690, %v2686
        %v2727 = vpack.c.bf16 %v2691, %v2687
        %v2728 = vpack.c.bf16 %v2696, %v2692
        %v2729 = vpack.c.bf16 %v2697, %v2693
        %v2730 = vpack.c.bf16 %v2698, %v2694
        %v2731 = vpack.c.bf16 %v2699, %v2695
        %2732 = vmatprep.subr.bf16.mxu0 %v1435
        %2733 = vmatpush1.bf16.msra.mxu0 %v1434
        %2734 = vmatprep.subr.bf16.mxu0 %v1432
        %2735 = vmatpush1.bf16.msra.mxu0 %v1431
        %2736 = vmatprep.subr.bf16.mxu0 %v1429
        %2737 = vmatpush1.bf16.msra.mxu0 %v1428
        %2738 = vmatprep.subr.bf16.mxu0 %v1426
        %2739 = vmatpush1.bf16.msra.mxu0 %v1425
        %2740 = vmatprep.subr.bf16.mxu0 %v1423
        %2741 = vmatpush1.bf16.msra.mxu0 %v1422
        %2742 = vmatprep.subr.bf16.mxu0 %v1420
        %2743 = vmatpush1.bf16.msra.mxu0 %v1419
        %2744 = vmatprep.subr.bf16.mxu0 %v1417
        %2745 = vmatpush1.bf16.msra.mxu0 %v1416
        %2746 = vmatprep.subr.bf16.mxu0 %v1414
        %2747 = vmatpush1.bf16.msra.mxu0 %v1413
        %2748 = vmatprep.subr.bf16.mxu0 %v1459
        %2749 = vmatpush2.bf16.msra.mxu0 %v1458
        %2750 = vmatprep.subr.bf16.mxu0 %v1456
        %2751 = vmatpush2.bf16.msra.mxu0 %v1455
        %2752 = vmatprep.subr.bf16.mxu0 %v1453
        %2753 = vmatpush2.bf16.msra.mxu0 %v1452
        %2754 = vmatprep.subr.bf16.mxu0 %v1450
        %2755 = vmatpush2.bf16.msra.mxu0 %v1449
        %2756 = vmatprep.subr.bf16.mxu0 %v1447
        %2757 = vmatpush2.bf16.msra.mxu0 %v1446
        %2758 = vmatprep.subr.bf16.mxu0 %v1444
        %2759 = vmatpush2.bf16.msra.mxu0 %v1443
        %2760 = vmatprep.subr.bf16.mxu0 %v1441
        %2761 = vmatpush2.bf16.msra.mxu0 %v1440
        %2762 = vmatprep.subr.bf16.mxu0 %v1438
        %2763 = vmatpush2.bf16.msra.mxu0 %v1437
        %2764 = vmatprep.mubr.bf16.mxu0 %v2701
        %2765 = vmatmul.mubr.bf16.gmra.mxu0 %v2700
        %v2766 = vpop.f32.mrf.mxu0
        %v2767 = vadd.f32 %v1081, %v2766
        %v2768 = vpop.f32.mrf.mxu0
        %v2769 = vadd.f32 %v1085, %v2768
        %v2770 = vpop.f32.mrf.mxu0
        %v2771 = vadd.f32 %v1081, %v2770
        %v2772 = vpop.f32.mrf.mxu0
        %v2773 = vadd.f32 %v1085, %v2772
        %2774 = vmatprep.mubr.bf16.mxu0 %v2705
        %2775 = vmatmul.mubr.bf16.gmra.mxu0 %v2704
        %v2776 = vpop.f32.mrf.mxu0
        %v2777 = vadd.f32 %v1081, %v2776
        %v2778 = vpop.f32.mrf.mxu0
        %v2779 = vadd.f32 %v1085, %v2778
        %v2780 = vpop.f32.mrf.mxu0
        %v2781 = vadd.f32 %v1081, %v2780
        %v2782 = vpop.f32.mrf.mxu0
        %v2783 = vadd.f32 %v1085, %v2782
        %2784 = vmatprep.mubr.bf16.mxu0 %v2709
        %2785 = vmatmul.mubr.bf16.gmra.mxu0 %v2708
        %v2786 = vpop.f32.mrf.mxu0
        %v2787 = vadd.f32 %v1081, %v2786
        %v2788 = vpop.f32.mrf.mxu0
        %v2789 = vadd.f32 %v1085, %v2788
        %v2790 = vpop.f32.mrf.mxu0
        %v2791 = vadd.f32 %v1081, %v2790
        %v2792 = vpop.f32.mrf.mxu0
        %v2793 = vadd.f32 %v1085, %v2792
        %2794 = vmatprep.mubr.bf16.mxu0 %v2713
        %2795 = vmatmul.mubr.bf16.gmra.mxu0 %v2712
        %v2796 = vpop.f32.mrf.mxu0
        %v2797 = vadd.f32 %v1081, %v2796
        %v2798 = vpop.f32.mrf.mxu0
        %v2799 = vadd.f32 %v1085, %v2798
        %v2800 = vpop.f32.mrf.mxu0
        %v2801 = vadd.f32 %v1081, %v2800
        %v2802 = vpop.f32.mrf.mxu0
        %v2803 = vadd.f32 %v1085, %v2802
        %2804 = vmatprep.mubr.bf16.mxu0 %v2717
        %2805 = vmatmul.mubr.bf16.gmra.mxu0 %v2716
        %v2806 = vpop.f32.mrf.mxu0
        %v2807 = vadd.f32 %v1081, %v2806
        %v2808 = vpop.f32.mrf.mxu0
        %v2809 = vadd.f32 %v1085, %v2808
        %v2810 = vpop.f32.mrf.mxu0
        %v2811 = vadd.f32 %v1081, %v2810
        %v2812 = vpop.f32.mrf.mxu0
        %v2813 = vadd.f32 %v1085, %v2812
        %2814 = vmatprep.mubr.bf16.mxu0 %v2721
        %2815 = vmatmul.mubr.bf16.gmra.mxu0 %v2720
        %v2816 = vpop.f32.mrf.mxu0
        %v2817 = vadd.f32 %v1081, %v2816
        %v2818 = vpop.f32.mrf.mxu0
        %v2819 = vadd.f32 %v1085, %v2818
        %v2820 = vpop.f32.mrf.mxu0
        %v2821 = vadd.f32 %v1081, %v2820
        %v2822 = vpop.f32.mrf.mxu0
        %v2823 = vadd.f32 %v1085, %v2822
        %2824 = vmatprep.mubr.bf16.mxu0 %v2725
        %2825 = vmatmul.mubr.bf16.gmra.mxu0 %v2724
        %v2826 = vpop.f32.mrf.mxu0
        %v2827 = vadd.f32 %v1081, %v2826
        %v2828 = vpop.f32.mrf.mxu0
        %v2829 = vadd.f32 %v1085, %v2828
        %v2830 = vpop.f32.mrf.mxu0
        %v2831 = vadd.f32 %v1081, %v2830
        %v2832 = vpop.f32.mrf.mxu0
        %v2833 = vadd.f32 %v1085, %v2832
        %2834 = vmatprep.mubr.bf16.mxu0 %v2729
        %2835 = vmatmul.mubr.bf16.gmra.mxu0 %v2728
        %v2836 = vpop.f32.mrf.mxu0
        %v2837 = vadd.f32 %v1081, %v2836
        %v2838 = vpop.f32.mrf.mxu0
        %v2839 = vadd.f32 %v1085, %v2838
        %v2840 = vpop.f32.mrf.mxu0
        %v2841 = vadd.f32 %v1081, %v2840
        %v2842 = vpop.f32.mrf.mxu0
        %v2843 = vadd.f32 %v1085, %v2842
        %2844 = vdwg.mxu0
        %2845 = vmatprep.subr.bf16.mxu0 %v1483
        %2846 = vmatpush1.bf16.msra.mxu0 %v1482
        %2847 = vmatprep.subr.bf16.mxu0 %v1480
        %2848 = vmatpush1.bf16.msra.mxu0 %v1479
        %2849 = vmatprep.subr.bf16.mxu0 %v1477
        %2850 = vmatpush1.bf16.msra.mxu0 %v1476
        %2851 = vmatprep.subr.bf16.mxu0 %v1474
        %2852 = vmatpush1.bf16.msra.mxu0 %v1473
        %2853 = vmatprep.subr.bf16.mxu0 %v1471
        %2854 = vmatpush1.bf16.msra.mxu0 %v1470
        %2855 = vmatprep.subr.bf16.mxu0 %v1468
        %2856 = vmatpush1.bf16.msra.mxu0 %v1467
        %2857 = vmatprep.subr.bf16.mxu0 %v1465
        %2858 = vmatpush1.bf16.msra.mxu0 %v1464
        %2859 = vmatprep.subr.bf16.mxu0 %v1462
        %2860 = vmatpush1.bf16.msra.mxu0 %v1461
        %2861 = vmatprep.subr.bf16.mxu0 %v1507
        %2862 = vmatpush2.bf16.msra.mxu0 %v1506
        %2863 = vmatprep.subr.bf16.mxu0 %v1504
        %2864 = vmatpush2.bf16.msra.mxu0 %v1503
        %2865 = vmatprep.subr.bf16.mxu0 %v1501
        %2866 = vmatpush2.bf16.msra.mxu0 %v1500
        %2867 = vmatprep.subr.bf16.mxu0 %v1498
        %2868 = vmatpush2.bf16.msra.mxu0 %v1497
        %2869 = vmatprep.subr.bf16.mxu0 %v1495
        %2870 = vmatpush2.bf16.msra.mxu0 %v1494
        %2871 = vmatprep.subr.bf16.mxu0 %v1492
        %2872 = vmatpush2.bf16.msra.mxu0 %v1491
        %2873 = vmatprep.subr.bf16.mxu0 %v1489
        %2874 = vmatpush2.bf16.msra.mxu0 %v1488
        %2875 = vmatprep.subr.bf16.mxu0 %v1486
        %2876 = vmatpush2.bf16.msra.mxu0 %v1485
        %2877 = vmatprep.mubr.bf16.mxu0 %v2703
        %2878 = vmatmul.mubr.bf16.gmra.mxu0 %v2702
        %v2879 = vpop.f32.mrf.mxu0
        %v2880 = vadd.f32 %v2767, %v2879
        %v2881 = vpop.f32.mrf.mxu0
        %v2882 = vadd.f32 %v2769, %v2881
        %v2883 = vpop.f32.mrf.mxu0
        %v2884 = vadd.f32 %v2771, %v2883
        %v2885 = vpop.f32.mrf.mxu0
        %v2886 = vadd.f32 %v2773, %v2885
        %2887 = vmatprep.mubr.bf16.mxu0 %v2707
        %2888 = vmatmul.mubr.bf16.gmra.mxu0 %v2706
        %v2889 = vpop.f32.mrf.mxu0
        %v2890 = vadd.f32 %v2777, %v2889
        %v2891 = vpop.f32.mrf.mxu0
        %v2892 = vadd.f32 %v2779, %v2891
        %v2893 = vpop.f32.mrf.mxu0
        %v2894 = vadd.f32 %v2781, %v2893
        %v2895 = vpop.f32.mrf.mxu0
        %v2896 = vadd.f32 %v2783, %v2895
        %2897 = vmatprep.mubr.bf16.mxu0 %v2711
        %2898 = vmatmul.mubr.bf16.gmra.mxu0 %v2710
        %v2899 = vpop.f32.mrf.mxu0
        %v2900 = vadd.f32 %v2787, %v2899
        %v2901 = vpop.f32.mrf.mxu0
        %v2902 = vadd.f32 %v2789, %v2901
        %v2903 = vpop.f32.mrf.mxu0
        %v2904 = vadd.f32 %v2791, %v2903
        %v2905 = vpop.f32.mrf.mxu0
        %v2906 = vadd.f32 %v2793, %v2905
        %2907 = vmatprep.mubr.bf16.mxu0 %v2715
        %2908 = vmatmul.mubr.bf16.gmra.mxu0 %v2714
        %v2909 = vpop.f32.mrf.mxu0
        %v2910 = vadd.f32 %v2797, %v2909
        %v2911 = vpop.f32.mrf.mxu0
        %v2912 = vadd.f32 %v2799, %v2911
        %v2913 = vpop.f32.mrf.mxu0
        %v2914 = vadd.f32 %v2801, %v2913
        %v2915 = vpop.f32.mrf.mxu0
        %v2916 = vadd.f32 %v2803, %v2915
        %2917 = vmatprep.mubr.bf16.mxu0 %v2719
        %2918 = vmatmul.mubr.bf16.gmra.mxu0 %v2718
        %v2919 = vpop.f32.mrf.mxu0
        %v2920 = vadd.f32 %v2807, %v2919
        %v2921 = vpop.f32.mrf.mxu0
        %v2922 = vadd.f32 %v2809, %v2921
        %v2923 = vpop.f32.mrf.mxu0
        %v2924 = vadd.f32 %v2811, %v2923
        %v2925 = vpop.f32.mrf.mxu0
        %v2926 = vadd.f32 %v2813, %v2925
        %2927 = vmatprep.mubr.bf16.mxu0 %v2723
        %2928 = vmatmul.mubr.bf16.gmra.mxu0 %v2722
        %v2929 = vpop.f32.mrf.mxu0
        %v2930 = vadd.f32 %v2817, %v2929
        %v2931 = vpop.f32.mrf.mxu0
        %v2932 = vadd.f32 %v2819, %v2931
        %v2933 = vpop.f32.mrf.mxu0
        %v2934 = vadd.f32 %v2821, %v2933
        %v2935 = vpop.f32.mrf.mxu0
        %v2936 = vadd.f32 %v2823, %v2935
        %2937 = vmatprep.mubr.bf16.mxu0 %v2727
        %2938 = vmatmul.mubr.bf16.gmra.mxu0 %v2726
        %v2939 = vpop.f32.mrf.mxu0
        %v2940 = vadd.f32 %v2827, %v2939
        %v2941 = vpop.f32.mrf.mxu0
        %v2942 = vadd.f32 %v2829, %v2941
        %v2943 = vpop.f32.mrf.mxu0
        %v2944 = vadd.f32 %v2831, %v2943
        %v2945 = vpop.f32.mrf.mxu0
        %v2946 = vadd.f32 %v2833, %v2945
        %2947 = vmatprep.mubr.bf16.mxu0 %v2731
        %2948 = vmatmul.mubr.bf16.gmra.mxu0 %v2730
        %v2949 = vpop.f32.mrf.mxu0
        %v2950 = vadd.f32 %v2837, %v2949
        %v2951 = vpop.f32.mrf.mxu0
        %v2952 = vadd.f32 %v2839, %v2951
        %v2953 = vpop.f32.mrf.mxu0
        %v2954 = vadd.f32 %v2841, %v2953
        %v2955 = vpop.f32.mrf.mxu0
        %v2956 = vadd.f32 %v2843, %v2955
        %2957 = vdwg.mxu0
        %2958 = vmatprep.subr.bf16.mxu0 0
        %2959 = vmatpush1.bf16.msra.mxu0 %v1436
        %2960 = vmatprep.subr.bf16.mxu0 0
        %2961 = vmatpush1.bf16.msra.mxu0 %v1433
        %2962 = vmatprep.subr.bf16.mxu0 0
        %2963 = vmatpush1.bf16.msra.mxu0 %v1430
        %2964 = vmatprep.subr.bf16.mxu0 0
        %2965 = vmatpush1.bf16.msra.mxu0 %v1427
        %2966 = vmatprep.subr.bf16.mxu0 0
        %2967 = vmatpush1.bf16.msra.mxu0 %v1424
        %2968 = vmatprep.subr.bf16.mxu0 0
        %2969 = vmatpush1.bf16.msra.mxu0 %v1421
        %2970 = vmatprep.subr.bf16.mxu0 0
        %2971 = vmatpush1.bf16.msra.mxu0 %v1418
        %2972 = vmatprep.subr.bf16.mxu0 0
        %2973 = vmatpush1.bf16.msra.mxu0 %v1415
        %2974 = vmatprep.subr.bf16.mxu0 0
        %2975 = vmatpush2.bf16.msra.mxu0 %v1460
        %2976 = vmatprep.subr.bf16.mxu0 0
        %2977 = vmatpush2.bf16.msra.mxu0 %v1457
        %2978 = vmatprep.subr.bf16.mxu0 0
        %2979 = vmatpush2.bf16.msra.mxu0 %v1454
        %2980 = vmatprep.subr.bf16.mxu0 0
        %2981 = vmatpush2.bf16.msra.mxu0 %v1451
        %2982 = vmatprep.subr.bf16.mxu0 0
        %2983 = vmatpush2.bf16.msra.mxu0 %v1448
        %2984 = vmatprep.subr.bf16.mxu0 0
        %2985 = vmatpush2.bf16.msra.mxu0 %v1445
        %2986 = vmatprep.subr.bf16.mxu0 0
        %2987 = vmatpush2.bf16.msra.mxu0 %v1442
        %2988 = vmatprep.subr.bf16.mxu0 0
        %2989 = vmatpush2.bf16.msra.mxu0 %v1439
        %2990 = vmatprep.mubr.bf16.mxu0 %v2701
        %2991 = vmatmul.mubr.bf16.gmra.mxu0 %v2700
        %v2992 = vpop.f32.mrf.mxu0
        %v2993 = vadd.f32 %v1089, %v2992
        %v2994 = vpop.f32.mrf.mxu0
        %v2995 = vpop.f32.mrf.mxu0
        %v2996 = vadd.f32 %v1089, %v2995
        %v2997 = vpop.f32.mrf.mxu0
        %2998 = vmatprep.mubr.bf16.mxu0 %v2705
        %2999 = vmatmul.mubr.bf16.gmra.mxu0 %v2704
        %v3000 = vpop.f32.mrf.mxu0
        %v3001 = vadd.f32 %v1089, %v3000
        %v3002 = vpop.f32.mrf.mxu0
        %v3003 = vpop.f32.mrf.mxu0
        %v3004 = vadd.f32 %v1089, %v3003
        %v3005 = vpop.f32.mrf.mxu0
        %3006 = vmatprep.mubr.bf16.mxu0 %v2709
        %3007 = vmatmul.mubr.bf16.gmra.mxu0 %v2708
        %v3008 = vpop.f32.mrf.mxu0
        %v3009 = vadd.f32 %v1089, %v3008
        %v3010 = vpop.f32.mrf.mxu0
        %v3011 = vpop.f32.mrf.mxu0
        %v3012 = vadd.f32 %v1089, %v3011
        %v3013 = vpop.f32.mrf.mxu0
        %3014 = vmatprep.mubr.bf16.mxu0 %v2713
        %3015 = vmatmul.mubr.bf16.gmra.mxu0 %v2712
        %v3016 = vpop.f32.mrf.mxu0
        %v3017 = vadd.f32 %v1089, %v3016
        %v3018 = vpop.f32.mrf.mxu0
        %v3019 = vpop.f32.mrf.mxu0
        %v3020 = vadd.f32 %v1089, %v3019
        %v3021 = vpop.f32.mrf.mxu0
        %3022 = vmatprep.mubr.bf16.mxu0 %v2717
        %3023 = vmatmul.mubr.bf16.gmra.mxu0 %v2716
        %v3024 = vpop.f32.mrf.mxu0
        %v3025 = vadd.f32 %v1089, %v3024
        %v3026 = vpop.f32.mrf.mxu0
        %v3027 = vpop.f32.mrf.mxu0
        %v3028 = vadd.f32 %v1089, %v3027
        %v3029 = vpop.f32.mrf.mxu0
        %3030 = vmatprep.mubr.bf16.mxu0 %v2721
        %3031 = vmatmul.mubr.bf16.gmra.mxu0 %v2720
        %v3032 = vpop.f32.mrf.mxu0
        %v3033 = vadd.f32 %v1089, %v3032
        %v3034 = vpop.f32.mrf.mxu0
        %v3035 = vpop.f32.mrf.mxu0
        %v3036 = vadd.f32 %v1089, %v3035
        %v3037 = vpop.f32.mrf.mxu0
        %3038 = vmatprep.mubr.bf16.mxu0 %v2725
        %3039 = vmatmul.mubr.bf16.gmra.mxu0 %v2724
        %v3040 = vpop.f32.mrf.mxu0
        %v3041 = vadd.f32 %v1089, %v3040
        %v3042 = vpop.f32.mrf.mxu0
        %v3043 = vpop.f32.mrf.mxu0
        %v3044 = vadd.f32 %v1089, %v3043
        %v3045 = vpop.f32.mrf.mxu0
        %3046 = vmatprep.mubr.bf16.mxu0 %v2729
        %3047 = vmatmul.mubr.bf16.gmra.mxu0 %v2728
        %v3048 = vpop.f32.mrf.mxu0
        %v3049 = vadd.f32 %v1089, %v3048
        %v3050 = vpop.f32.mrf.mxu0
        %v3051 = vpop.f32.mrf.mxu0
        %v3052 = vadd.f32 %v1089, %v3051
        %v3053 = vpop.f32.mrf.mxu0
        %3054 = vdwg.mxu0
        %3055 = vmatprep.subr.bf16.mxu0 0
        %3056 = vmatpush1.bf16.msra.mxu0 %v1484
        %3057 = vmatprep.subr.bf16.mxu0 0
        %3058 = vmatpush1.bf16.msra.mxu0 %v1481
        %3059 = vmatprep.subr.bf16.mxu0 0
        %3060 = vmatpush1.bf16.msra.mxu0 %v1478
        %3061 = vmatprep.subr.bf16.mxu0 0
        %3062 = vmatpush1.bf16.msra.mxu0 %v1475
        %3063 = vmatprep.subr.bf16.mxu0 0
        %3064 = vmatpush1.bf16.msra.mxu0 %v1472
        %3065 = vmatprep.subr.bf16.mxu0 0
        %3066 = vmatpush1.bf16.msra.mxu0 %v1469
        %3067 = vmatprep.subr.bf16.mxu0 0
        %3068 = vmatpush1.bf16.msra.mxu0 %v1466
        %3069 = vmatprep.subr.bf16.mxu0 0
        %3070 = vmatpush1.bf16.msra.mxu0 %v1463
        %3071 = vmatprep.subr.bf16.mxu0 0
        %3072 = vmatpush2.bf16.msra.mxu0 %v1508
        %3073 = vmatprep.subr.bf16.mxu0 0
        %3074 = vmatpush2.bf16.msra.mxu0 %v1505
        %3075 = vmatprep.subr.bf16.mxu0 0
        %3076 = vmatpush2.bf16.msra.mxu0 %v1502
        %3077 = vmatprep.subr.bf16.mxu0 0
        %3078 = vmatpush2.bf16.msra.mxu0 %v1499
        %3079 = vmatprep.subr.bf16.mxu0 0
        %3080 = vmatpush2.bf16.msra.mxu0 %v1496
        %3081 = vmatprep.subr.bf16.mxu0 0
        %3082 = vmatpush2.bf16.msra.mxu0 %v1493
        %3083 = vmatprep.subr.bf16.mxu0 0
        %3084 = vmatpush2.bf16.msra.mxu0 %v1490
        %3085 = vmatprep.subr.bf16.mxu0 0
        %3086 = vmatpush2.bf16.msra.mxu0 %v1487
        %3087 = vmatprep.mubr.bf16.mxu0 %v2703
        %3088 = vmatmul.mubr.bf16.gmra.mxu0 %v2702
        %v3089 = vpop.f32.mrf.mxu0
        %v3090 = vadd.f32 %v2993, %v3089
        %v3091 = vpop.f32.mrf.mxu0
        %v3092 = vpop.f32.mrf.mxu0
        %v3093 = vadd.f32 %v2996, %v3092
        %v3094 = vpop.f32.mrf.mxu0
        %3095 = vmatprep.mubr.bf16.mxu0 %v2707
        %3096 = vmatmul.mubr.bf16.gmra.mxu0 %v2706
        %v3097 = vpop.f32.mrf.mxu0
        %v3098 = vadd.f32 %v3001, %v3097
        %v3099 = vpop.f32.mrf.mxu0
        %v3100 = vpop.f32.mrf.mxu0
        %v3101 = vadd.f32 %v3004, %v3100
        %v3102 = vpop.f32.mrf.mxu0
        %3103 = vmatprep.mubr.bf16.mxu0 %v2711
        %3104 = vmatmul.mubr.bf16.gmra.mxu0 %v2710
        %v3105 = vpop.f32.mrf.mxu0
        %v3106 = vadd.f32 %v3009, %v3105
        %v3107 = vpop.f32.mrf.mxu0
        %v3108 = vpop.f32.mrf.mxu0
        %v3109 = vadd.f32 %v3012, %v3108
        %v3110 = vpop.f32.mrf.mxu0
        %3111 = vmatprep.mubr.bf16.mxu0 %v2715
        %3112 = vmatmul.mubr.bf16.gmra.mxu0 %v2714
        %v3113 = vpop.f32.mrf.mxu0
        %v3114 = vadd.f32 %v3017, %v3113
        %v3115 = vpop.f32.mrf.mxu0
        %v3116 = vpop.f32.mrf.mxu0
        %v3117 = vadd.f32 %v3020, %v3116
        %v3118 = vpop.f32.mrf.mxu0
        %3119 = vmatprep.mubr.bf16.mxu0 %v2719
        %3120 = vmatmul.mubr.bf16.gmra.mxu0 %v2718
        %v3121 = vpop.f32.mrf.mxu0
        %v3122 = vadd.f32 %v3025, %v3121
        %v3123 = vpop.f32.mrf.mxu0
        %v3124 = vpop.f32.mrf.mxu0
        %v3125 = vadd.f32 %v3028, %v3124
        %v3126 = vpop.f32.mrf.mxu0
        %3127 = vmatprep.mubr.bf16.mxu0 %v2723
        %3128 = vmatmul.mubr.bf16.gmra.mxu0 %v2722
        %v3129 = vpop.f32.mrf.mxu0
        %v3130 = vadd.f32 %v3033, %v3129
        %v3131 = vpop.f32.mrf.mxu0
        %v3132 = vpop.f32.mrf.mxu0
        %v3133 = vadd.f32 %v3036, %v3132
        %v3134 = vpop.f32.mrf.mxu0
        %3135 = vmatprep.mubr.bf16.mxu0 %v2727
        %3136 = vmatmul.mubr.bf16.gmra.mxu0 %v2726
        %v3137 = vpop.f32.mrf.mxu0
        %v3138 = vadd.f32 %v3041, %v3137
        %v3139 = vpop.f32.mrf.mxu0
        %v3140 = vpop.f32.mrf.mxu0
        %v3141 = vadd.f32 %v3044, %v3140
        %v3142 = vpop.f32.mrf.mxu0
        %3143 = vmatprep.mubr.bf16.mxu0 %v2731
        %3144 = vmatmul.mubr.bf16.gmra.mxu0 %v2730
        %v3145 = vpop.f32.mrf.mxu0
        %v3146 = vadd.f32 %v3049, %v3145
        %v3147 = vpop.f32.mrf.mxu0
        %v3148 = vpop.f32.mrf.mxu0
        %v3149 = vadd.f32 %v3052, %v3148
        %v3150 = vpop.f32.mrf.mxu0
        %3151 = vdwg.mxu0
        %v3152 = vmax.f32 %v2880, 0.0
        %v3153 = vmax.f32 %v2882, 0.0
        %v3154 = vmax.f32 %v3090, 0.0
        %v3155 = vmax.f32 %v2884, 0.0
        %v3156 = vmax.f32 %v2886, 0.0
        %v3157 = vmax.f32 %v3093, 0.0
        %v3158 = vmax.f32 %v2890, 0.0
        %v3159 = vmax.f32 %v2892, 0.0
        %v3160 = vmax.f32 %v3098, 0.0
        %v3161 = vmax.f32 %v2894, 0.0
        %v3162 = vmax.f32 %v2896, 0.0
        %v3163 = vmax.f32 %v3101, 0.0
        %v3164 = vmax.f32 %v2900, 0.0
        %v3165 = vmax.f32 %v2902, 0.0
        %v3166 = vmax.f32 %v3106, 0.0
        %v3167 = vmax.f32 %v2904, 0.0
        %v3168 = vmax.f32 %v2906, 0.0
        %v3169 = vmax.f32 %v3109, 0.0
        %v3170 = vmax.f32 %v2910, 0.0
        %v3171 = vmax.f32 %v2912, 0.0
        %v3172 = vmax.f32 %v3114, 0.0
        %v3173 = vmax.f32 %v2914, 0.0
        %v3174 = vmax.f32 %v2916, 0.0
        %v3175 = vmax.f32 %v3117, 0.0
        %v3176 = vmax.f32 %v2920, 0.0
        %v3177 = vmax.f32 %v2922, 0.0
        %v3178 = vmax.f32 %v3122, 0.0
        %v3179 = vmax.f32 %v2924, 0.0
        %v3180 = vmax.f32 %v2926, 0.0
        %v3181 = vmax.f32 %v3125, 0.0
        %v3182 = vmax.f32 %v2930, 0.0
        %v3183 = vmax.f32 %v2932, 0.0
        %v3184 = vmax.f32 %v3130, 0.0
        %v3185 = vmax.f32 %v2934, 0.0
        %v3186 = vmax.f32 %v2936, 0.0
        %v3187 = vmax.f32 %v3133, 0.0
        %v3188 = vmax.f32 %v2940, 0.0
        %v3189 = vmax.f32 %v2942, 0.0
        %v3190 = vmax.f32 %v3138, 0.0
        %v3191 = vmax.f32 %v2944, 0.0
        %v3192 = vmax.f32 %v2946, 0.0
        %v3193 = vmax.f32 %v3141, 0.0
        %v3194 = vmax.f32 %v2950, 0.0
        %v3195 = vmax.f32 %v2952, 0.0
        %v3196 = vmax.f32 %v3146, 0.0
        %v3197 = vmax.f32 %v2954, 0.0
        %v3198 = vmax.f32 %v2956, 0.0
        %v3199 = vmax.f32 %v3149, 0.0
        %v3200 = vmul.f32 %v3152, %v2077
        %v3201 = vmul.f32 %v3153, %v2081
        %v3202 = vmul.f32 %v3154, %v2085
        %v3203 = vmul.f32 %v3155, %v2077
        %v3204 = vmul.f32 %v3156, %v2081
        %v3205 = vmul.f32 %v3157, %v2085
        %v3206 = vmul.f32 %v3158, %v2077
        %v3207 = vmul.f32 %v3159, %v2081
        %v3208 = vmul.f32 %v3160, %v2085
        %v3209 = vmul.f32 %v3161, %v2077
        %v3210 = vmul.f32 %v3162, %v2081
        %v3211 = vmul.f32 %v3163, %v2085
        %v3212 = vmul.f32 %v3164, %v2077
        %v3213 = vmul.f32 %v3165, %v2081
        %v3214 = vmul.f32 %v3166, %v2085
        %v3215 = vmul.f32 %v3167, %v2077
        %v3216 = vmul.f32 %v3168, %v2081
        %v3217 = vmul.f32 %v3169, %v2085
        %v3218 = vmul.f32 %v3170, %v2077
        %v3219 = vmul.f32 %v3171, %v2081
        %v3220 = vmul.f32 %v3172, %v2085
        %v3221 = vmul.f32 %v3173, %v2077
        %v3222 = vmul.f32 %v3174, %v2081
        %v3223 = vmul.f32 %v3175, %v2085
        %v3224 = vmul.f32 %v3176, %v2077
        %v3225 = vmul.f32 %v3177, %v2081
        %v3226 = vmul.f32 %v3178, %v2085
        %v3227 = vmul.f32 %v3179, %v2077
        %v3228 = vmul.f32 %v3180, %v2081
        %v3229 = vmul.f32 %v3181, %v2085
        %v3230 = vmul.f32 %v3182, %v2077
        %v3231 = vmul.f32 %v3183, %v2081
        %v3232 = vmul.f32 %v3184, %v2085
        %v3233 = vmul.f32 %v3185, %v2077
        %v3234 = vmul.f32 %v3186, %v2081
        %v3235 = vmul.f32 %v3187, %v2085
        %v3236 = vmul.f32 %v3188, %v2077
        %v3237 = vmul.f32 %v3189, %v2081
        %v3238 = vmul.f32 %v3190, %v2085
        %v3239 = vmul.f32 %v3191, %v2077
        %v3240 = vmul.f32 %v3192, %v2081
        %v3241 = vmul.f32 %v3193, %v2085
        %v3242 = vmul.f32 %v3194, %v2077
        %v3243 = vmul.f32 %v3195, %v2081
        %v3244 = vmul.f32 %v3196, %v2085
        %v3245 = vmul.f32 %v3197, %v2077
        %v3246 = vmul.f32 %v3198, %v2081
        %v3247 = vmul.f32 %v3199, %v2085
        %v3248 = vadd.f32 %v3200, %v3201
        %v3249 = vadd.f32 %v3248, %v3202
        %3250 = vadd.xlane.f32.xlu0 %v3249
        %v3251 = vpop.xlane.xlu0 %3250
        %v3252 = vadd.f32 %v3203, %v3204
        %v3253 = vadd.f32 %v3252, %v3205
        %3254 = vadd.xlane.f32.xlu0 %v3253
        %v3255 = vpop.xlane.xlu0 %3254
        %v3256 = vadd.f32 %v3206, %v3207
        %v3257 = vadd.f32 %v3256, %v3208
        %3258 = vadd.xlane.f32.xlu0 %v3257
        %v3259 = vpop.xlane.xlu0 %3258
        %v3260 = vadd.f32 %v3209, %v3210
        %v3261 = vadd.f32 %v3260, %v3211
        %3262 = vadd.xlane.f32.xlu0 %v3261
        %v3263 = vpop.xlane.xlu0 %3262
        %v3264 = vadd.f32 %v3212, %v3213
        %v3265 = vadd.f32 %v3264, %v3214
        %3266 = vadd.xlane.f32.xlu0 %v3265
        %v3267 = vpop.xlane.xlu0 %3266
        %v3268 = vadd.f32 %v3215, %v3216
        %v3269 = vadd.f32 %v3268, %v3217
        %3270 = vadd.xlane.f32.xlu0 %v3269
        %v3271 = vpop.xlane.xlu0 %3270
        %v3272 = vadd.f32 %v3218, %v3219
        %v3273 = vadd.f32 %v3272, %v3220
        %3274 = vadd.xlane.f32.xlu0 %v3273
        %v3275 = vpop.xlane.xlu0 %3274
        %v3276 = vadd.f32 %v3221, %v3222
        %v3277 = vadd.f32 %v3276, %v3223
        %3278 = vadd.xlane.f32.xlu0 %v3277
        %v3279 = vpop.xlane.xlu0 %3278
        %v3280 = vadd.f32 %v3224, %v3225
        %v3281 = vadd.f32 %v3280, %v3226
        %3282 = vadd.xlane.f32.xlu0 %v3281
        %v3283 = vpop.xlane.xlu0 %3282
        %v3284 = vadd.f32 %v3227, %v3228
        %v3285 = vadd.f32 %v3284, %v3229
        %3286 = vadd.xlane.f32.xlu0 %v3285
        %v3287 = vpop.xlane.xlu0 %3286
        %v3288 = vadd.f32 %v3230, %v3231
        %v3289 = vadd.f32 %v3288, %v3232
        %3290 = vadd.xlane.f32.xlu0 %v3289
        %v3291 = vpop.xlane.xlu0 %3290
        %v3292 = vadd.f32 %v3233, %v3234
        %v3293 = vadd.f32 %v3292, %v3235
        %3294 = vadd.xlane.f32.xlu0 %v3293
        %v3295 = vpop.xlane.xlu0 %3294
        %v3296 = vadd.f32 %v3236, %v3237
        %v3297 = vadd.f32 %v3296, %v3238
        %3298 = vadd.xlane.f32.xlu0 %v3297
        %v3299 = vpop.xlane.xlu0 %3298
        %v3300 = vadd.f32 %v3239, %v3240
        %v3301 = vadd.f32 %v3300, %v3241
        %3302 = vadd.xlane.f32.xlu0 %v3301
        %v3303 = vpop.xlane.xlu0 %3302
        %v3304 = vadd.f32 %v3242, %v3243
        %v3305 = vadd.f32 %v3304, %v3244
        %3306 = vadd.xlane.f32.xlu0 %v3305
        %v3307 = vpop.xlane.xlu0 %3306
        %v3308 = vadd.f32 %v3245, %v3246
        %v3309 = vadd.f32 %v3308, %v3247
        %3310 = vadd.xlane.f32.xlu0 %v3309
        %v3311 = vpop.xlane.xlu0 %3310
        %v3312 = vadd.f32 %v3251, %v2201
        %v3313 = vadd.f32 %v3255, %v2201
        %v3314 = vadd.f32 %v3259, %v2201
        %v3315 = vadd.f32 %v3263, %v2201
        %v3316 = vadd.f32 %v3267, %v2201
        %v3317 = vadd.f32 %v3271, %v2201
        %v3318 = vadd.f32 %v3275, %v2201
        %v3319 = vadd.f32 %v3279, %v2201
        %v3320 = vadd.f32 %v3283, %v2201
        %v3321 = vadd.f32 %v3287, %v2201
        %v3322 = vadd.f32 %v3291, %v2201
        %v3323 = vadd.f32 %v3295, %v2201
        %v3324 = vadd.f32 %v3299, %v2201
        %v3325 = vadd.f32 %v3303, %v2201
        %v3326 = vadd.f32 %v3307, %v2201
        %v3327 = vadd.f32 %v3311, %v2201
        %v3328 = vmax.f32 %v3312, 0.0
        %v3329 = vmax.f32 %v3313, 0.0
        %v3330 = vmax.f32 %v3314, 0.0
        %v3331 = vmax.f32 %v3315, 0.0
        %v3332 = vmax.f32 %v3316, 0.0
        %v3333 = vmax.f32 %v3317, 0.0
        %v3334 = vmax.f32 %v3318, 0.0
        %v3335 = vmax.f32 %v3319, 0.0
        %v3336 = vmax.f32 %v3320, 0.0
        %v3337 = vmax.f32 %v3321, 0.0
        %v3338 = vmax.f32 %v3322, 0.0
        %v3339 = vmax.f32 %v3323, 0.0
        %v3340 = vmax.f32 %v3324, 0.0
        %v3341 = vmax.f32 %v3325, 0.0
        %v3342 = vmax.f32 %v3326, 0.0
        %v3343 = vmax.f32 %v3327, 0.0
        %s3344 = sld [smem:[#allocation8 + $0x1]]
        %v3345 = vstv %s3344
        %v3346 = vmul.f32 %v3345, %v3328
        %v3347 = vmul.f32 %v3345, %v3329
        %v3348 = vmul.f32 %v3345, %v3330
        %v3349 = vmul.f32 %v3345, %v3331
        %v3350 = vmul.f32 %v3345, %v3332
        %v3351 = vmul.f32 %v3345, %v3333
        %v3352 = vmul.f32 %v3345, %v3334
        %v3353 = vmul.f32 %v3345, %v3335
        %v3354 = vmul.f32 %v3345, %v3336
        %v3355 = vmul.f32 %v3345, %v3337
        %v3356 = vmul.f32 %v3345, %v3338
        %v3357 = vmul.f32 %v3345, %v3339
        %v3358 = vmul.f32 %v3345, %v3340
        %v3359 = vmul.f32 %v3345, %v3341
        %v3360 = vmul.f32 %v3345, %v3342
        %v3361 = vmul.f32 %v3345, %v3343
        %v3362 = vadd.f32 %v2236, %v3346
        %v3363 = vadd.f32 %v2237, %v3347
        %v3364 = vadd.f32 %v2238, %v3348
        %v3365 = vadd.f32 %v2239, %v3349
        %v3366 = vadd.f32 %v2240, %v3350
        %v3367 = vadd.f32 %v2241, %v3351
        %v3368 = vadd.f32 %v2242, %v3352
        %v3369 = vadd.f32 %v2243, %v3353
        %v3370 = vadd.f32 %v2244, %v3354
        %v3371 = vadd.f32 %v2245, %v3355
        %v3372 = vadd.f32 %v2246, %v3356
        %v3373 = vadd.f32 %v2247, %v3357
        %v3374 = vadd.f32 %v2248, %v3358
        %v3375 = vadd.f32 %v2249, %v3359
        %v3376 = vadd.f32 %v2250, %v3360
        %v3377 = vadd.f32 %v2251, %v3361
        %3378 = vset.pattern.permute.xlu0 4
        %3379 = vperm.xlu0 %3378, %v502
        %v3380 = vpop.permute.xlu0 %3379
        %3382 = vset.pattern.permute.xlu0 4
        %3383 = vperm.xlu0 %3382, %v503
        %v3384 = vpop.permute.xlu0 %3383
        %3386 = vset.pattern.permute.xlu0 4
        %3387 = vperm.xlu0 %3386, %v504
        %v3388 = vpop.permute.xlu0 %3387
        %3390 = vset.pattern.permute.xlu0 4
        %3391 = vperm.xlu0 %3390, %v505
        %v3392 = vpop.permute.xlu0 %3391
        %3394 = vset.pattern.permute.xlu0 4
        %3395 = vperm.xlu0 %3394, %v506
        %v3396 = vpop.permute.xlu0 %3395
        %3398 = vset.pattern.permute.xlu0 4
        %3399 = vperm.xlu0 %3398, %v507
        %v3400 = vpop.permute.xlu0 %3399
        %3402 = vset.pattern.permute.xlu0 4
        %3403 = vperm.xlu0 %3402, %v508
        %v3404 = vpop.permute.xlu0 %3403
        %3406 = vset.pattern.permute.xlu0 4
        %3407 = vperm.xlu0 %3406, %v509
        %v3408 = vpop.permute.xlu0 %3407
        %3410 = vset.pattern.permute.xlu0 4
        %3411 = vperm.xlu0 %3410, %v510
        %v3412 = vpop.permute.xlu0 %3411
        %3414 = vset.pattern.permute.xlu0 4
        %3415 = vperm.xlu0 %3414, %v511
        %v3416 = vpop.permute.xlu0 %3415
        %3418 = vset.pattern.permute.xlu0 4
        %3419 = vperm.xlu0 %3418, %v512
        %v3420 = vpop.permute.xlu0 %3419
        %3422 = vset.pattern.permute.xlu0 4
        %3423 = vperm.xlu0 %3422, %v513
        %v3424 = vpop.permute.xlu0 %3423
        %3426 = vset.pattern.permute.xlu0 4
        %3427 = vperm.xlu0 %3426, %v514
        %v3428 = vpop.permute.xlu0 %3427
        %3430 = vset.pattern.permute.xlu0 4
        %3431 = vperm.xlu0 %3430, %v515
        %v3432 = vpop.permute.xlu0 %3431
        %3434 = vset.pattern.permute.xlu0 4
        %3435 = vperm.xlu0 %3434, %v516
        %v3436 = vpop.permute.xlu0 %3435
        %3438 = vset.pattern.permute.xlu0 4
        %3439 = vperm.xlu0 %3438, %v517
        %v3440 = vpop.permute.xlu0 %3439
        %v3442 = vmul.f32 %v3380, %v602
        %v3443 = vmul.f32 %v3380, %v606
        %v3444 = vmul.f32 %v3380, %v610
        %v3445 = vmul.f32 %v3380, %v614
        %v3446 = vmul.f32 %v3384, %v602
        %v3447 = vmul.f32 %v3384, %v606
        %v3448 = vmul.f32 %v3384, %v610
        %v3449 = vmul.f32 %v3384, %v614
        %v3450 = vmul.f32 %v3388, %v602
        %v3451 = vmul.f32 %v3388, %v606
        %v3452 = vmul.f32 %v3388, %v610
        %v3453 = vmul.f32 %v3388, %v614
        %v3454 = vmul.f32 %v3392, %v602
        %v3455 = vmul.f32 %v3392, %v606
        %v3456 = vmul.f32 %v3392, %v610
        %v3457 = vmul.f32 %v3392, %v614
        %v3458 = vmul.f32 %v3396, %v602
        %v3459 = vmul.f32 %v3396, %v606
        %v3460 = vmul.f32 %v3396, %v610
        %v3461 = vmul.f32 %v3396, %v614
        %v3462 = vmul.f32 %v3400, %v602
        %v3463 = vmul.f32 %v3400, %v606
        %v3464 = vmul.f32 %v3400, %v610
        %v3465 = vmul.f32 %v3400, %v614
        %v3466 = vmul.f32 %v3404, %v602
        %v3467 = vmul.f32 %v3404, %v606
        %v3468 = vmul.f32 %v3404, %v610
        %v3469 = vmul.f32 %v3404, %v614
        %v3470 = vmul.f32 %v3408, %v602
        %v3471 = vmul.f32 %v3408, %v606
        %v3472 = vmul.f32 %v3408, %v610
        %v3473 = vmul.f32 %v3408, %v614
        %v3474 = vmul.f32 %v3412, %v602
        %v3475 = vmul.f32 %v3412, %v606
        %v3476 = vmul.f32 %v3412, %v610
        %v3477 = vmul.f32 %v3412, %v614
        %v3478 = vmul.f32 %v3416, %v602
        %v3479 = vmul.f32 %v3416, %v606
        %v3480 = vmul.f32 %v3416, %v610
        %v3481 = vmul.f32 %v3416, %v614
        %v3482 = vmul.f32 %v3420, %v602
        %v3483 = vmul.f32 %v3420, %v606
        %v3484 = vmul.f32 %v3420, %v610
        %v3485 = vmul.f32 %v3420, %v614
        %v3486 = vmul.f32 %v3424, %v602
        %v3487 = vmul.f32 %v3424, %v606
        %v3488 = vmul.f32 %v3424, %v610
        %v3489 = vmul.f32 %v3424, %v614
        %v3490 = vmul.f32 %v3428, %v602
        %v3491 = vmul.f32 %v3428, %v606
        %v3492 = vmul.f32 %v3428, %v610
        %v3493 = vmul.f32 %v3428, %v614
        %v3494 = vmul.f32 %v3432, %v602
        %v3495 = vmul.f32 %v3432, %v606
        %v3496 = vmul.f32 %v3432, %v610
        %v3497 = vmul.f32 %v3432, %v614
        %v3498 = vmul.f32 %v3436, %v602
        %v3499 = vmul.f32 %v3436, %v606
        %v3500 = vmul.f32 %v3436, %v610
        %v3501 = vmul.f32 %v3436, %v614
        %v3502 = vmul.f32 %v3440, %v602
        %v3503 = vmul.f32 %v3440, %v606
        %v3504 = vmul.f32 %v3440, %v610
        %v3505 = vmul.f32 %v3440, %v614
        %3506 = vset.pattern.permute.xlu0 5
        %3507 = vperm.xlu0 %3506, %v502
        %v3508 = vpop.permute.xlu0 %3507
        %3510 = vset.pattern.permute.xlu0 5
        %3511 = vperm.xlu0 %3510, %v503
        %v3512 = vpop.permute.xlu0 %3511
        %3514 = vset.pattern.permute.xlu0 5
        %3515 = vperm.xlu0 %3514, %v504
        %v3516 = vpop.permute.xlu0 %3515
        %3518 = vset.pattern.permute.xlu0 5
        %3519 = vperm.xlu0 %3518, %v505
        %v3520 = vpop.permute.xlu0 %3519
        %3522 = vset.pattern.permute.xlu0 5
        %3523 = vperm.xlu0 %3522, %v506
        %v3524 = vpop.permute.xlu0 %3523
        %3526 = vset.pattern.permute.xlu0 5
        %3527 = vperm.xlu0 %3526, %v507
        %v3528 = vpop.permute.xlu0 %3527
        %3530 = vset.pattern.permute.xlu0 5
        %3531 = vperm.xlu0 %3530, %v508
        %v3532 = vpop.permute.xlu0 %3531
        %3534 = vset.pattern.permute.xlu0 5
        %3535 = vperm.xlu0 %3534, %v509
        %v3536 = vpop.permute.xlu0 %3535
        %3538 = vset.pattern.permute.xlu0 5
        %3539 = vperm.xlu0 %3538, %v510
        %v3540 = vpop.permute.xlu0 %3539
        %3542 = vset.pattern.permute.xlu0 5
        %3543 = vperm.xlu0 %3542, %v511
        %v3544 = vpop.permute.xlu0 %3543
        %3546 = vset.pattern.permute.xlu0 5
        %3547 = vperm.xlu0 %3546, %v512
        %v3548 = vpop.permute.xlu0 %3547
        %3550 = vset.pattern.permute.xlu0 5
        %3551 = vperm.xlu0 %3550, %v513
        %v3552 = vpop.permute.xlu0 %3551
        %3554 = vset.pattern.permute.xlu0 5
        %3555 = vperm.xlu0 %3554, %v514
        %v3556 = vpop.permute.xlu0 %3555
        %3558 = vset.pattern.permute.xlu0 5
        %3559 = vperm.xlu0 %3558, %v515
        %v3560 = vpop.permute.xlu0 %3559
        %3562 = vset.pattern.permute.xlu0 5
        %3563 = vperm.xlu0 %3562, %v516
        %v3564 = vpop.permute.xlu0 %3563
        %3566 = vset.pattern.permute.xlu0 5
        %3567 = vperm.xlu0 %3566, %v517
        %v3568 = vpop.permute.xlu0 %3567
        %v3570 = vmul.f32 %v3508, %v751
        %v3571 = vmul.f32 %v3508, %v755
        %v3572 = vmul.f32 %v3508, %v759
        %v3573 = vmul.f32 %v3508, %v763
        %v3574 = vmul.f32 %v3512, %v751
        %v3575 = vmul.f32 %v3512, %v755
        %v3576 = vmul.f32 %v3512, %v759
        %v3577 = vmul.f32 %v3512, %v763
        %v3578 = vmul.f32 %v3516, %v751
        %v3579 = vmul.f32 %v3516, %v755
        %v3580 = vmul.f32 %v3516, %v759
        %v3581 = vmul.f32 %v3516, %v763
        %v3582 = vmul.f32 %v3520, %v751
        %v3583 = vmul.f32 %v3520, %v755
        %v3584 = vmul.f32 %v3520, %v759
        %v3585 = vmul.f32 %v3520, %v763
        %v3586 = vmul.f32 %v3524, %v751
        %v3587 = vmul.f32 %v3524, %v755
        %v3588 = vmul.f32 %v3524, %v759
        %v3589 = vmul.f32 %v3524, %v763
        %v3590 = vmul.f32 %v3528, %v751
        %v3591 = vmul.f32 %v3528, %v755
        %v3592 = vmul.f32 %v3528, %v759
        %v3593 = vmul.f32 %v3528, %v763
        %v3594 = vmul.f32 %v3532, %v751
        %v3595 = vmul.f32 %v3532, %v755
        %v3596 = vmul.f32 %v3532, %v759
        %v3597 = vmul.f32 %v3532, %v763
        %v3598 = vmul.f32 %v3536, %v751
        %v3599 = vmul.f32 %v3536, %v755
        %v3600 = vmul.f32 %v3536, %v759
        %v3601 = vmul.f32 %v3536, %v763
        %v3602 = vmul.f32 %v3540, %v751
        %v3603 = vmul.f32 %v3540, %v755
        %v3604 = vmul.f32 %v3540, %v759
        %v3605 = vmul.f32 %v3540, %v763
        %v3606 = vmul.f32 %v3544, %v751
        %v3607 = vmul.f32 %v3544, %v755
        %v3608 = vmul.f32 %v3544, %v759
        %v3609 = vmul.f32 %v3544, %v763
        %v3610 = vmul.f32 %v3548, %v751
        %v3611 = vmul.f32 %v3548, %v755
        %v3612 = vmul.f32 %v3548, %v759
        %v3613 = vmul.f32 %v3548, %v763
        %v3614 = vmul.f32 %v3552, %v751
        %v3615 = vmul.f32 %v3552, %v755
        %v3616 = vmul.f32 %v3552, %v759
        %v3617 = vmul.f32 %v3552, %v763
        %v3618 = vmul.f32 %v3556, %v751
        %v3619 = vmul.f32 %v3556, %v755
        %v3620 = vmul.f32 %v3556, %v759
        %v3621 = vmul.f32 %v3556, %v763
        %v3622 = vmul.f32 %v3560, %v751
        %v3623 = vmul.f32 %v3560, %v755
        %v3624 = vmul.f32 %v3560, %v759
        %v3625 = vmul.f32 %v3560, %v763
        %v3626 = vmul.f32 %v3564, %v751
        %v3627 = vmul.f32 %v3564, %v755
        %v3628 = vmul.f32 %v3564, %v759
        %v3629 = vmul.f32 %v3564, %v763
        %v3630 = vmul.f32 %v3568, %v751
        %v3631 = vmul.f32 %v3568, %v755
        %v3632 = vmul.f32 %v3568, %v759
        %v3633 = vmul.f32 %v3568, %v763
        %v3634 = vadd.f32 %v3442, %v3570
        %v3635 = vadd.f32 %v3443, %v3571
        %v3636 = vadd.f32 %v3444, %v3572
        %v3637 = vadd.f32 %v3445, %v3573
        %v3638 = vadd.f32 %v3446, %v3574
        %v3639 = vadd.f32 %v3447, %v3575
        %v3640 = vadd.f32 %v3448, %v3576
        %v3641 = vadd.f32 %v3449, %v3577
        %v3642 = vadd.f32 %v3450, %v3578
        %v3643 = vadd.f32 %v3451, %v3579
        %v3644 = vadd.f32 %v3452, %v3580
        %v3645 = vadd.f32 %v3453, %v3581
        %v3646 = vadd.f32 %v3454, %v3582
        %v3647 = vadd.f32 %v3455, %v3583
        %v3648 = vadd.f32 %v3456, %v3584
        %v3649 = vadd.f32 %v3457, %v3585
        %v3650 = vadd.f32 %v3458, %v3586
        %v3651 = vadd.f32 %v3459, %v3587
        %v3652 = vadd.f32 %v3460, %v3588
        %v3653 = vadd.f32 %v3461, %v3589
        %v3654 = vadd.f32 %v3462, %v3590
        %v3655 = vadd.f32 %v3463, %v3591
        %v3656 = vadd.f32 %v3464, %v3592
        %v3657 = vadd.f32 %v3465, %v3593
        %v3658 = vadd.f32 %v3466, %v3594
        %v3659 = vadd.f32 %v3467, %v3595
        %v3660 = vadd.f32 %v3468, %v3596
        %v3661 = vadd.f32 %v3469, %v3597
        %v3662 = vadd.f32 %v3470, %v3598
        %v3663 = vadd.f32 %v3471, %v3599
        %v3664 = vadd.f32 %v3472, %v3600
        %v3665 = vadd.f32 %v3473, %v3601
        %v3666 = vadd.f32 %v3474, %v3602
        %v3667 = vadd.f32 %v3475, %v3603
        %v3668 = vadd.f32 %v3476, %v3604
        %v3669 = vadd.f32 %v3477, %v3605
        %v3670 = vadd.f32 %v3478, %v3606
        %v3671 = vadd.f32 %v3479, %v3607
        %v3672 = vadd.f32 %v3480, %v3608
        %v3673 = vadd.f32 %v3481, %v3609
        %v3674 = vadd.f32 %v3482, %v3610
        %v3675 = vadd.f32 %v3483, %v3611
        %v3676 = vadd.f32 %v3484, %v3612
        %v3677 = vadd.f32 %v3485, %v3613
        %v3678 = vadd.f32 %v3486, %v3614
        %v3679 = vadd.f32 %v3487, %v3615
        %v3680 = vadd.f32 %v3488, %v3616
        %v3681 = vadd.f32 %v3489, %v3617
        %v3682 = vadd.f32 %v3490, %v3618
        %v3683 = vadd.f32 %v3491, %v3619
        %v3684 = vadd.f32 %v3492, %v3620
        %v3685 = vadd.f32 %v3493, %v3621
        %v3686 = vadd.f32 %v3494, %v3622
        %v3687 = vadd.f32 %v3495, %v3623
        %v3688 = vadd.f32 %v3496, %v3624
        %v3689 = vadd.f32 %v3497, %v3625
        %v3690 = vadd.f32 %v3498, %v3626
        %v3691 = vadd.f32 %v3499, %v3627
        %v3692 = vadd.f32 %v3500, %v3628
        %v3693 = vadd.f32 %v3501, %v3629
        %v3694 = vadd.f32 %v3502, %v3630
        %v3695 = vadd.f32 %v3503, %v3631
        %v3696 = vadd.f32 %v3504, %v3632
        %v3697 = vadd.f32 %v3505, %v3633
        %v3698 = vadd.f32 %v3634, %v900
        %v3699 = vadd.f32 %v3635, %v904
        %v3700 = vadd.f32 %v3636, %v908
        %v3701 = vadd.f32 %v3637, %v912
        %v3702 = vadd.f32 %v3638, %v900
        %v3703 = vadd.f32 %v3639, %v904
        %v3704 = vadd.f32 %v3640, %v908
        %v3705 = vadd.f32 %v3641, %v912
        %v3706 = vadd.f32 %v3642, %v900
        %v3707 = vadd.f32 %v3643, %v904
        %v3708 = vadd.f32 %v3644, %v908
        %v3709 = vadd.f32 %v3645, %v912
        %v3710 = vadd.f32 %v3646, %v900
        %v3711 = vadd.f32 %v3647, %v904
        %v3712 = vadd.f32 %v3648, %v908
        %v3713 = vadd.f32 %v3649, %v912
        %v3714 = vadd.f32 %v3650, %v900
        %v3715 = vadd.f32 %v3651, %v904
        %v3716 = vadd.f32 %v3652, %v908
        %v3717 = vadd.f32 %v3653, %v912
        %v3718 = vadd.f32 %v3654, %v900
        %v3719 = vadd.f32 %v3655, %v904
        %v3720 = vadd.f32 %v3656, %v908
        %v3721 = vadd.f32 %v3657, %v912
        %v3722 = vadd.f32 %v3658, %v900
        %v3723 = vadd.f32 %v3659, %v904
        %v3724 = vadd.f32 %v3660, %v908
        %v3725 = vadd.f32 %v3661, %v912
        %v3726 = vadd.f32 %v3662, %v900
        %v3727 = vadd.f32 %v3663, %v904
        %v3728 = vadd.f32 %v3664, %v908
        %v3729 = vadd.f32 %v3665, %v912
        %v3730 = vadd.f32 %v3666, %v900
        %v3731 = vadd.f32 %v3667, %v904
        %v3732 = vadd.f32 %v3668, %v908
        %v3733 = vadd.f32 %v3669, %v912
        %v3734 = vadd.f32 %v3670, %v900
        %v3735 = vadd.f32 %v3671, %v904
        %v3736 = vadd.f32 %v3672, %v908
        %v3737 = vadd.f32 %v3673, %v912
        %v3738 = vadd.f32 %v3674, %v900
        %v3739 = vadd.f32 %v3675, %v904
        %v3740 = vadd.f32 %v3676, %v908
        %v3741 = vadd.f32 %v3677, %v912
        %v3742 = vadd.f32 %v3678, %v900
        %v3743 = vadd.f32 %v3679, %v904
        %v3744 = vadd.f32 %v3680, %v908
        %v3745 = vadd.f32 %v3681, %v912
        %v3746 = vadd.f32 %v3682, %v900
        %v3747 = vadd.f32 %v3683, %v904
        %v3748 = vadd.f32 %v3684, %v908
        %v3749 = vadd.f32 %v3685, %v912
        %v3750 = vadd.f32 %v3686, %v900
        %v3751 = vadd.f32 %v3687, %v904
        %v3752 = vadd.f32 %v3688, %v908
        %v3753 = vadd.f32 %v3689, %v912
        %v3754 = vadd.f32 %v3690, %v900
        %v3755 = vadd.f32 %v3691, %v904
        %v3756 = vadd.f32 %v3692, %v908
        %v3757 = vadd.f32 %v3693, %v912
        %v3758 = vadd.f32 %v3694, %v900
        %v3759 = vadd.f32 %v3695, %v904
        %v3760 = vadd.f32 %v3696, %v908
        %v3761 = vadd.f32 %v3697, %v912
        %v3762 = vmax.f32 %v3698, 0.0
        %v3763 = vmax.f32 %v3699, 0.0
        %v3764 = vmax.f32 %v3700, 0.0
        %v3765 = vmax.f32 %v3701, 0.0
        %v3766 = vmax.f32 %v3702, 0.0
        %v3767 = vmax.f32 %v3703, 0.0
        %v3768 = vmax.f32 %v3704, 0.0
        %v3769 = vmax.f32 %v3705, 0.0
        %v3770 = vmax.f32 %v3706, 0.0
        %v3771 = vmax.f32 %v3707, 0.0
        %v3772 = vmax.f32 %v3708, 0.0
        %v3773 = vmax.f32 %v3709, 0.0
        %v3774 = vmax.f32 %v3710, 0.0
        %v3775 = vmax.f32 %v3711, 0.0
        %v3776 = vmax.f32 %v3712, 0.0
        %v3777 = vmax.f32 %v3713, 0.0
        %v3778 = vmax.f32 %v3714, 0.0
        %v3779 = vmax.f32 %v3715, 0.0
        %v3780 = vmax.f32 %v3716, 0.0
        %v3781 = vmax.f32 %v3717, 0.0
        %v3782 = vmax.f32 %v3718, 0.0
        %v3783 = vmax.f32 %v3719, 0.0
        %v3784 = vmax.f32 %v3720, 0.0
        %v3785 = vmax.f32 %v3721, 0.0
        %v3786 = vmax.f32 %v3722, 0.0
        %v3787 = vmax.f32 %v3723, 0.0
        %v3788 = vmax.f32 %v3724, 0.0
        %v3789 = vmax.f32 %v3725, 0.0
        %v3790 = vmax.f32 %v3726, 0.0
        %v3791 = vmax.f32 %v3727, 0.0
        %v3792 = vmax.f32 %v3728, 0.0
        %v3793 = vmax.f32 %v3729, 0.0
        %v3794 = vmax.f32 %v3730, 0.0
        %v3795 = vmax.f32 %v3731, 0.0
        %v3796 = vmax.f32 %v3732, 0.0
        %v3797 = vmax.f32 %v3733, 0.0
        %v3798 = vmax.f32 %v3734, 0.0
        %v3799 = vmax.f32 %v3735, 0.0
        %v3800 = vmax.f32 %v3736, 0.0
        %v3801 = vmax.f32 %v3737, 0.0
        %v3802 = vmax.f32 %v3738, 0.0
        %v3803 = vmax.f32 %v3739, 0.0
        %v3804 = vmax.f32 %v3740, 0.0
        %v3805 = vmax.f32 %v3741, 0.0
        %v3806 = vmax.f32 %v3742, 0.0
        %v3807 = vmax.f32 %v3743, 0.0
        %v3808 = vmax.f32 %v3744, 0.0
        %v3809 = vmax.f32 %v3745, 0.0
        %v3810 = vmax.f32 %v3746, 0.0
        %v3811 = vmax.f32 %v3747, 0.0
        %v3812 = vmax.f32 %v3748, 0.0
        %v3813 = vmax.f32 %v3749, 0.0
        %v3814 = vmax.f32 %v3750, 0.0
        %v3815 = vmax.f32 %v3751, 0.0
        %v3816 = vmax.f32 %v3752, 0.0
        %v3817 = vmax.f32 %v3753, 0.0
        %v3818 = vmax.f32 %v3754, 0.0
        %v3819 = vmax.f32 %v3755, 0.0
        %v3820 = vmax.f32 %v3756, 0.0
        %v3821 = vmax.f32 %v3757, 0.0
        %v3822 = vmax.f32 %v3758, 0.0
        %v3823 = vmax.f32 %v3759, 0.0
        %v3824 = vmax.f32 %v3760, 0.0
        %v3825 = vmax.f32 %v3761, 0.0
        %v3826 = vpack.c.bf16 %v3766, %v3762
        %v3827 = vpack.c.bf16 %v3767, %v3763
        %v3828 = vpack.c.bf16 %v3768, %v3764
        %v3829 = vpack.c.bf16 %v3769, %v3765
        %v3830 = vpack.c.bf16 %v3774, %v3770
        %v3831 = vpack.c.bf16 %v3775, %v3771
        %v3832 = vpack.c.bf16 %v3776, %v3772
        %v3833 = vpack.c.bf16 %v3777, %v3773
        %v3834 = vpack.c.bf16 %v3782, %v3778
        %v3835 = vpack.c.bf16 %v3783, %v3779
        %v3836 = vpack.c.bf16 %v3784, %v3780
        %v3837 = vpack.c.bf16 %v3785, %v3781
        %v3838 = vpack.c.bf16 %v3790, %v3786
        %v3839 = vpack.c.bf16 %v3791, %v3787
        %v3840 = vpack.c.bf16 %v3792, %v3788
        %v3841 = vpack.c.bf16 %v3793, %v3789
        %v3842 = vpack.c.bf16 %v3798, %v3794
        %v3843 = vpack.c.bf16 %v3799, %v3795
        %v3844 = vpack.c.bf16 %v3800, %v3796
        %v3845 = vpack.c.bf16 %v3801, %v3797
        %v3846 = vpack.c.bf16 %v3806, %v3802
        %v3847 = vpack.c.bf16 %v3807, %v3803
        %v3848 = vpack.c.bf16 %v3808, %v3804
        %v3849 = vpack.c.bf16 %v3809, %v3805
        %v3850 = vpack.c.bf16 %v3814, %v3810
        %v3851 = vpack.c.bf16 %v3815, %v3811
        %v3852 = vpack.c.bf16 %v3816, %v3812
        %v3853 = vpack.c.bf16 %v3817, %v3813
        %v3854 = vpack.c.bf16 %v3822, %v3818
        %v3855 = vpack.c.bf16 %v3823, %v3819
        %v3856 = vpack.c.bf16 %v3824, %v3820
        %v3857 = vpack.c.bf16 %v3825, %v3821
        %3858 = vmatprep.subr.bf16.mxu0 %v1435
        %3859 = vmatpush1.bf16.msra.mxu0 %v1434
        %3860 = vmatprep.subr.bf16.mxu0 %v1432
        %3861 = vmatpush1.bf16.msra.mxu0 %v1431
        %3862 = vmatprep.subr.bf16.mxu0 %v1429
        %3863 = vmatpush1.bf16.msra.mxu0 %v1428
        %3864 = vmatprep.subr.bf16.mxu0 %v1426
        %3865 = vmatpush1.bf16.msra.mxu0 %v1425
        %3866 = vmatprep.subr.bf16.mxu0 %v1423
        %3867 = vmatpush1.bf16.msra.mxu0 %v1422
        %3868 = vmatprep.subr.bf16.mxu0 %v1420
        %3869 = vmatpush1.bf16.msra.mxu0 %v1419
        %3870 = vmatprep.subr.bf16.mxu0 %v1417
        %3871 = vmatpush1.bf16.msra.mxu0 %v1416
        %3872 = vmatprep.subr.bf16.mxu0 %v1414
        %3873 = vmatpush1.bf16.msra.mxu0 %v1413
        %3874 = vmatprep.subr.bf16.mxu0 %v1459
        %3875 = vmatpush2.bf16.msra.mxu0 %v1458
        %3876 = vmatprep.subr.bf16.mxu0 %v1456
        %3877 = vmatpush2.bf16.msra.mxu0 %v1455
        %3878 = vmatprep.subr.bf16.mxu0 %v1453
        %3879 = vmatpush2.bf16.msra.mxu0 %v1452
        %3880 = vmatprep.subr.bf16.mxu0 %v1450
        %3881 = vmatpush2.bf16.msra.mxu0 %v1449
        %3882 = vmatprep.subr.bf16.mxu0 %v1447
        %3883 = vmatpush2.bf16.msra.mxu0 %v1446
        %3884 = vmatprep.subr.bf16.mxu0 %v1444
        %3885 = vmatpush2.bf16.msra.mxu0 %v1443
        %3886 = vmatprep.subr.bf16.mxu0 %v1441
        %3887 = vmatpush2.bf16.msra.mxu0 %v1440
        %3888 = vmatprep.subr.bf16.mxu0 %v1438
        %3889 = vmatpush2.bf16.msra.mxu0 %v1437
        %3890 = vmatprep.mubr.bf16.mxu0 %v3827
        %3891 = vmatmul.mubr.bf16.gmra.mxu0 %v3826
        %v3892 = vpop.f32.mrf.mxu0
        %v3893 = vadd.f32 %v1081, %v3892
        %v3894 = vpop.f32.mrf.mxu0
        %v3895 = vadd.f32 %v1085, %v3894
        %v3896 = vpop.f32.mrf.mxu0
        %v3897 = vadd.f32 %v1081, %v3896
        %v3898 = vpop.f32.mrf.mxu0
        %v3899 = vadd.f32 %v1085, %v3898
        %3900 = vmatprep.mubr.bf16.mxu0 %v3831
        %3901 = vmatmul.mubr.bf16.gmra.mxu0 %v3830
        %v3902 = vpop.f32.mrf.mxu0
        %v3903 = vadd.f32 %v1081, %v3902
        %v3904 = vpop.f32.mrf.mxu0
        %v3905 = vadd.f32 %v1085, %v3904
        %v3906 = vpop.f32.mrf.mxu0
        %v3907 = vadd.f32 %v1081, %v3906
        %v3908 = vpop.f32.mrf.mxu0
        %v3909 = vadd.f32 %v1085, %v3908
        %3910 = vmatprep.mubr.bf16.mxu0 %v3835
        %3911 = vmatmul.mubr.bf16.gmra.mxu0 %v3834
        %v3912 = vpop.f32.mrf.mxu0
        %v3913 = vadd.f32 %v1081, %v3912
        %v3914 = vpop.f32.mrf.mxu0
        %v3915 = vadd.f32 %v1085, %v3914
        %v3916 = vpop.f32.mrf.mxu0
        %v3917 = vadd.f32 %v1081, %v3916
        %v3918 = vpop.f32.mrf.mxu0
        %v3919 = vadd.f32 %v1085, %v3918
        %3920 = vmatprep.mubr.bf16.mxu0 %v3839
        %3921 = vmatmul.mubr.bf16.gmra.mxu0 %v3838
        %v3922 = vpop.f32.mrf.mxu0
        %v3923 = vadd.f32 %v1081, %v3922
        %v3924 = vpop.f32.mrf.mxu0
        %v3925 = vadd.f32 %v1085, %v3924
        %v3926 = vpop.f32.mrf.mxu0
        %v3927 = vadd.f32 %v1081, %v3926
        %v3928 = vpop.f32.mrf.mxu0
        %v3929 = vadd.f32 %v1085, %v3928
        %3930 = vmatprep.mubr.bf16.mxu0 %v3843
        %3931 = vmatmul.mubr.bf16.gmra.mxu0 %v3842
        %v3932 = vpop.f32.mrf.mxu0
        %v3933 = vadd.f32 %v1081, %v3932
        %v3934 = vpop.f32.mrf.mxu0
        %v3935 = vadd.f32 %v1085, %v3934
        %v3936 = vpop.f32.mrf.mxu0
        %v3937 = vadd.f32 %v1081, %v3936
        %v3938 = vpop.f32.mrf.mxu0
        %v3939 = vadd.f32 %v1085, %v3938
        %3940 = vmatprep.mubr.bf16.mxu0 %v3847
        %3941 = vmatmul.mubr.bf16.gmra.mxu0 %v3846
        %v3942 = vpop.f32.mrf.mxu0
        %v3943 = vadd.f32 %v1081, %v3942
        %v3944 = vpop.f32.mrf.mxu0
        %v3945 = vadd.f32 %v1085, %v3944
        %v3946 = vpop.f32.mrf.mxu0
        %v3947 = vadd.f32 %v1081, %v3946
        %v3948 = vpop.f32.mrf.mxu0
        %v3949 = vadd.f32 %v1085, %v3948
        %3950 = vmatprep.mubr.bf16.mxu0 %v3851
        %3951 = vmatmul.mubr.bf16.gmra.mxu0 %v3850
        %v3952 = vpop.f32.mrf.mxu0
        %v3953 = vadd.f32 %v1081, %v3952
        %v3954 = vpop.f32.mrf.mxu0
        %v3955 = vadd.f32 %v1085, %v3954
        %v3956 = vpop.f32.mrf.mxu0
        %v3957 = vadd.f32 %v1081, %v3956
        %v3958 = vpop.f32.mrf.mxu0
        %v3959 = vadd.f32 %v1085, %v3958
        %3960 = vmatprep.mubr.bf16.mxu0 %v3855
        %3961 = vmatmul.mubr.bf16.gmra.mxu0 %v3854
        %v3962 = vpop.f32.mrf.mxu0
        %v3963 = vadd.f32 %v1081, %v3962
        %v3964 = vpop.f32.mrf.mxu0
        %v3965 = vadd.f32 %v1085, %v3964
        %v3966 = vpop.f32.mrf.mxu0
        %v3967 = vadd.f32 %v1081, %v3966
        %v3968 = vpop.f32.mrf.mxu0
        %v3969 = vadd.f32 %v1085, %v3968
        %3970 = vdwg.mxu0
        %3971 = vmatprep.subr.bf16.mxu0 %v1483
        %3972 = vmatpush1.bf16.msra.mxu0 %v1482
        %3973 = vmatprep.subr.bf16.mxu0 %v1480
        %3974 = vmatpush1.bf16.msra.mxu0 %v1479
        %3975 = vmatprep.subr.bf16.mxu0 %v1477
        %3976 = vmatpush1.bf16.msra.mxu0 %v1476
        %3977 = vmatprep.subr.bf16.mxu0 %v1474
        %3978 = vmatpush1.bf16.msra.mxu0 %v1473
        %3979 = vmatprep.subr.bf16.mxu0 %v1471
        %3980 = vmatpush1.bf16.msra.mxu0 %v1470
        %3981 = vmatprep.subr.bf16.mxu0 %v1468
        %3982 = vmatpush1.bf16.msra.mxu0 %v1467
        %3983 = vmatprep.subr.bf16.mxu0 %v1465
        %3984 = vmatpush1.bf16.msra.mxu0 %v1464
        %3985 = vmatprep.subr.bf16.mxu0 %v1462
        %3986 = vmatpush1.bf16.msra.mxu0 %v1461
        %3987 = vmatprep.subr.bf16.mxu0 %v1507
        %3988 = vmatpush2.bf16.msra.mxu0 %v1506
        %3989 = vmatprep.subr.bf16.mxu0 %v1504
        %3990 = vmatpush2.bf16.msra.mxu0 %v1503
        %3991 = vmatprep.subr.bf16.mxu0 %v1501
        %3992 = vmatpush2.bf16.msra.mxu0 %v1500
        %3993 = vmatprep.subr.bf16.mxu0 %v1498
        %3994 = vmatpush2.bf16.msra.mxu0 %v1497
        %3995 = vmatprep.subr.bf16.mxu0 %v1495
        %3996 = vmatpush2.bf16.msra.mxu0 %v1494
        %3997 = vmatprep.subr.bf16.mxu0 %v1492
        %3998 = vmatpush2.bf16.msra.mxu0 %v1491
        %3999 = vmatprep.subr.bf16.mxu0 %v1489
        %4000 = vmatpush2.bf16.msra.mxu0 %v1488
        %4001 = vmatprep.subr.bf16.mxu0 %v1486
        %4002 = vmatpush2.bf16.msra.mxu0 %v1485
        %4003 = vmatprep.mubr.bf16.mxu0 %v3829
        %4004 = vmatmul.mubr.bf16.gmra.mxu0 %v3828
        %v4005 = vpop.f32.mrf.mxu0
        %v4006 = vadd.f32 %v3893, %v4005
        %v4007 = vpop.f32.mrf.mxu0
        %v4008 = vadd.f32 %v3895, %v4007
        %v4009 = vpop.f32.mrf.mxu0
        %v4010 = vadd.f32 %v3897, %v4009
        %v4011 = vpop.f32.mrf.mxu0
        %v4012 = vadd.f32 %v3899, %v4011
        %4013 = vmatprep.mubr.bf16.mxu0 %v3833
        %4014 = vmatmul.mubr.bf16.gmra.mxu0 %v3832
        %v4015 = vpop.f32.mrf.mxu0
        %v4016 = vadd.f32 %v3903, %v4015
        %v4017 = vpop.f32.mrf.mxu0
        %v4018 = vadd.f32 %v3905, %v4017
        %v4019 = vpop.f32.mrf.mxu0
        %v4020 = vadd.f32 %v3907, %v4019
        %v4021 = vpop.f32.mrf.mxu0
        %v4022 = vadd.f32 %v3909, %v4021
        %4023 = vmatprep.mubr.bf16.mxu0 %v3837
        %4024 = vmatmul.mubr.bf16.gmra.mxu0 %v3836
        %v4025 = vpop.f32.mrf.mxu0
        %v4026 = vadd.f32 %v3913, %v4025
        %v4027 = vpop.f32.mrf.mxu0
        %v4028 = vadd.f32 %v3915, %v4027
        %v4029 = vpop.f32.mrf.mxu0
        %v4030 = vadd.f32 %v3917, %v4029
        %v4031 = vpop.f32.mrf.mxu0
        %v4032 = vadd.f32 %v3919, %v4031
        %4033 = vmatprep.mubr.bf16.mxu0 %v3841
        %4034 = vmatmul.mubr.bf16.gmra.mxu0 %v3840
        %v4035 = vpop.f32.mrf.mxu0
        %v4036 = vadd.f32 %v3923, %v4035
        %v4037 = vpop.f32.mrf.mxu0
        %v4038 = vadd.f32 %v3925, %v4037
        %v4039 = vpop.f32.mrf.mxu0
        %v4040 = vadd.f32 %v3927, %v4039
        %v4041 = vpop.f32.mrf.mxu0
        %v4042 = vadd.f32 %v3929, %v4041
        %4043 = vmatprep.mubr.bf16.mxu0 %v3845
        %4044 = vmatmul.mubr.bf16.gmra.mxu0 %v3844
        %v4045 = vpop.f32.mrf.mxu0
        %v4046 = vadd.f32 %v3933, %v4045
        %v4047 = vpop.f32.mrf.mxu0
        %v4048 = vadd.f32 %v3935, %v4047
        %v4049 = vpop.f32.mrf.mxu0
        %v4050 = vadd.f32 %v3937, %v4049
        %v4051 = vpop.f32.mrf.mxu0
        %v4052 = vadd.f32 %v3939, %v4051
        %4053 = vmatprep.mubr.bf16.mxu0 %v3849
        %4054 = vmatmul.mubr.bf16.gmra.mxu0 %v3848
        %v4055 = vpop.f32.mrf.mxu0
        %v4056 = vadd.f32 %v3943, %v4055
        %v4057 = vpop.f32.mrf.mxu0
        %v4058 = vadd.f32 %v3945, %v4057
        %v4059 = vpop.f32.mrf.mxu0
        %v4060 = vadd.f32 %v3947, %v4059
        %v4061 = vpop.f32.mrf.mxu0
        %v4062 = vadd.f32 %v3949, %v4061
        %4063 = vmatprep.mubr.bf16.mxu0 %v3853
        %4064 = vmatmul.mubr.bf16.gmra.mxu0 %v3852
        %v4065 = vpop.f32.mrf.mxu0
        %v4066 = vadd.f32 %v3953, %v4065
        %v4067 = vpop.f32.mrf.mxu0
        %v4068 = vadd.f32 %v3955, %v4067
        %v4069 = vpop.f32.mrf.mxu0
        %v4070 = vadd.f32 %v3957, %v4069
        %v4071 = vpop.f32.mrf.mxu0
        %v4072 = vadd.f32 %v3959, %v4071
        %4073 = vmatprep.mubr.bf16.mxu0 %v3857
        %4074 = vmatmul.mubr.bf16.gmra.mxu0 %v3856
        %v4075 = vpop.f32.mrf.mxu0
        %v4076 = vadd.f32 %v3963, %v4075
        %v4077 = vpop.f32.mrf.mxu0
        %v4078 = vadd.f32 %v3965, %v4077
        %v4079 = vpop.f32.mrf.mxu0
        %v4080 = vadd.f32 %v3967, %v4079
        %v4081 = vpop.f32.mrf.mxu0
        %v4082 = vadd.f32 %v3969, %v4081
        %4083 = vdwg.mxu0
        %4084 = vmatprep.subr.bf16.mxu0 0
        %4085 = vmatpush1.bf16.msra.mxu0 %v1436
        %4086 = vmatprep.subr.bf16.mxu0 0
        %4087 = vmatpush1.bf16.msra.mxu0 %v1433
        %4088 = vmatprep.subr.bf16.mxu0 0
        %4089 = vmatpush1.bf16.msra.mxu0 %v1430
        %4090 = vmatprep.subr.bf16.mxu0 0
        %4091 = vmatpush1.bf16.msra.mxu0 %v1427
        %4092 = vmatprep.subr.bf16.mxu0 0
        %4093 = vmatpush1.bf16.msra.mxu0 %v1424
        %4094 = vmatprep.subr.bf16.mxu0 0
        %4095 = vmatpush1.bf16.msra.mxu0 %v1421
        %4096 = vmatprep.subr.bf16.mxu0 0
        %4097 = vmatpush1.bf16.msra.mxu0 %v1418
        %4098 = vmatprep.subr.bf16.mxu0 0
        %4099 = vmatpush1.bf16.msra.mxu0 %v1415
        %4100 = vmatprep.subr.bf16.mxu0 0
        %4101 = vmatpush2.bf16.msra.mxu0 %v1460
        %4102 = vmatprep.subr.bf16.mxu0 0
        %4103 = vmatpush2.bf16.msra.mxu0 %v1457
        %4104 = vmatprep.subr.bf16.mxu0 0
        %4105 = vmatpush2.bf16.msra.mxu0 %v1454
        %4106 = vmatprep.subr.bf16.mxu0 0
        %4107 = vmatpush2.bf16.msra.mxu0 %v1451
        %4108 = vmatprep.subr.bf16.mxu0 0
        %4109 = vmatpush2.bf16.msra.mxu0 %v1448
        %4110 = vmatprep.subr.bf16.mxu0 0
        %4111 = vmatpush2.bf16.msra.mxu0 %v1445
        %4112 = vmatprep.subr.bf16.mxu0 0
        %4113 = vmatpush2.bf16.msra.mxu0 %v1442
        %4114 = vmatprep.subr.bf16.mxu0 0
        %4115 = vmatpush2.bf16.msra.mxu0 %v1439
        %4116 = vmatprep.mubr.bf16.mxu0 %v3827
        %4117 = vmatmul.mubr.bf16.gmra.mxu0 %v3826
        %v4118 = vpop.f32.mrf.mxu0
        %v4119 = vadd.f32 %v1089, %v4118
        %v4120 = vpop.f32.mrf.mxu0
        %v4121 = vpop.f32.mrf.mxu0
        %v4122 = vadd.f32 %v1089, %v4121
        %v4123 = vpop.f32.mrf.mxu0
        %4124 = vmatprep.mubr.bf16.mxu0 %v3831
        %4125 = vmatmul.mubr.bf16.gmra.mxu0 %v3830
        %v4126 = vpop.f32.mrf.mxu0
        %v4127 = vadd.f32 %v1089, %v4126
        %v4128 = vpop.f32.mrf.mxu0
        %v4129 = vpop.f32.mrf.mxu0
        %v4130 = vadd.f32 %v1089, %v4129
        %v4131 = vpop.f32.mrf.mxu0
        %4132 = vmatprep.mubr.bf16.mxu0 %v3835
        %4133 = vmatmul.mubr.bf16.gmra.mxu0 %v3834
        %v4134 = vpop.f32.mrf.mxu0
        %v4135 = vadd.f32 %v1089, %v4134
        %v4136 = vpop.f32.mrf.mxu0
        %v4137 = vpop.f32.mrf.mxu0
        %v4138 = vadd.f32 %v1089, %v4137
        %v4139 = vpop.f32.mrf.mxu0
        %4140 = vmatprep.mubr.bf16.mxu0 %v3839
        %4141 = vmatmul.mubr.bf16.gmra.mxu0 %v3838
        %v4142 = vpop.f32.mrf.mxu0
        %v4143 = vadd.f32 %v1089, %v4142
        %v4144 = vpop.f32.mrf.mxu0
        %v4145 = vpop.f32.mrf.mxu0
        %v4146 = vadd.f32 %v1089, %v4145
        %v4147 = vpop.f32.mrf.mxu0
        %4148 = vmatprep.mubr.bf16.mxu0 %v3843
        %4149 = vmatmul.mubr.bf16.gmra.mxu0 %v3842
        %v4150 = vpop.f32.mrf.mxu0
        %v4151 = vadd.f32 %v1089, %v4150
        %v4152 = vpop.f32.mrf.mxu0
        %v4153 = vpop.f32.mrf.mxu0
        %v4154 = vadd.f32 %v1089, %v4153
        %v4155 = vpop.f32.mrf.mxu0
        %4156 = vmatprep.mubr.bf16.mxu0 %v3847
        %4157 = vmatmul.mubr.bf16.gmra.mxu0 %v3846
        %v4158 = vpop.f32.mrf.mxu0
        %v4159 = vadd.f32 %v1089, %v4158
        %v4160 = vpop.f32.mrf.mxu0
        %v4161 = vpop.f32.mrf.mxu0
        %v4162 = vadd.f32 %v1089, %v4161
        %v4163 = vpop.f32.mrf.mxu0
        %4164 = vmatprep.mubr.bf16.mxu0 %v3851
        %4165 = vmatmul.mubr.bf16.gmra.mxu0 %v3850
        %v4166 = vpop.f32.mrf.mxu0
        %v4167 = vadd.f32 %v1089, %v4166
        %v4168 = vpop.f32.mrf.mxu0
        %v4169 = vpop.f32.mrf.mxu0
        %v4170 = vadd.f32 %v1089, %v4169
        %v4171 = vpop.f32.mrf.mxu0
        %4172 = vmatprep.mubr.bf16.mxu0 %v3855
        %4173 = vmatmul.mubr.bf16.gmra.mxu0 %v3854
        %v4174 = vpop.f32.mrf.mxu0
        %v4175 = vadd.f32 %v1089, %v4174
        %v4176 = vpop.f32.mrf.mxu0
        %v4177 = vpop.f32.mrf.mxu0
        %v4178 = vadd.f32 %v1089, %v4177
        %v4179 = vpop.f32.mrf.mxu0
        %4180 = vdwg.mxu0
        %4181 = vmatprep.subr.bf16.mxu0 0
        %4182 = vmatpush1.bf16.msra.mxu0 %v1484
        %4183 = vmatprep.subr.bf16.mxu0 0
        %4184 = vmatpush1.bf16.msra.mxu0 %v1481
        %4185 = vmatprep.subr.bf16.mxu0 0
        %4186 = vmatpush1.bf16.msra.mxu0 %v1478
        %4187 = vmatprep.subr.bf16.mxu0 0
        %4188 = vmatpush1.bf16.msra.mxu0 %v1475
        %4189 = vmatprep.subr.bf16.mxu0 0
        %4190 = vmatpush1.bf16.msra.mxu0 %v1472
        %4191 = vmatprep.subr.bf16.mxu0 0
        %4192 = vmatpush1.bf16.msra.mxu0 %v1469
        %4193 = vmatprep.subr.bf16.mxu0 0
        %4194 = vmatpush1.bf16.msra.mxu0 %v1466
        %4195 = vmatprep.subr.bf16.mxu0 0
        %4196 = vmatpush1.bf16.msra.mxu0 %v1463
        %4197 = vmatprep.subr.bf16.mxu0 0
        %4198 = vmatpush2.bf16.msra.mxu0 %v1508
        %4199 = vmatprep.subr.bf16.mxu0 0
        %4200 = vmatpush2.bf16.msra.mxu0 %v1505
        %4201 = vmatprep.subr.bf16.mxu0 0
        %4202 = vmatpush2.bf16.msra.mxu0 %v1502
        %4203 = vmatprep.subr.bf16.mxu0 0
        %4204 = vmatpush2.bf16.msra.mxu0 %v1499
        %4205 = vmatprep.subr.bf16.mxu0 0
        %4206 = vmatpush2.bf16.msra.mxu0 %v1496
        %4207 = vmatprep.subr.bf16.mxu0 0
        %4208 = vmatpush2.bf16.msra.mxu0 %v1493
        %4209 = vmatprep.subr.bf16.mxu0 0
        %4210 = vmatpush2.bf16.msra.mxu0 %v1490
        %4211 = vmatprep.subr.bf16.mxu0 0
        %4212 = vmatpush2.bf16.msra.mxu0 %v1487
        %4213 = vmatprep.mubr.bf16.mxu0 %v3829
        %4214 = vmatmul.mubr.bf16.gmra.mxu0 %v3828
        %v4215 = vpop.f32.mrf.mxu0
        %v4216 = vadd.f32 %v4119, %v4215
        %v4217 = vpop.f32.mrf.mxu0
        %v4218 = vpop.f32.mrf.mxu0
        %v4219 = vadd.f32 %v4122, %v4218
        %v4220 = vpop.f32.mrf.mxu0
        %4221 = vmatprep.mubr.bf16.mxu0 %v3833
        %4222 = vmatmul.mubr.bf16.gmra.mxu0 %v3832
        %v4223 = vpop.f32.mrf.mxu0
        %v4224 = vadd.f32 %v4127, %v4223
        %v4225 = vpop.f32.mrf.mxu0
        %v4226 = vpop.f32.mrf.mxu0
        %v4227 = vadd.f32 %v4130, %v4226
        %v4228 = vpop.f32.mrf.mxu0
        %4229 = vmatprep.mubr.bf16.mxu0 %v3837
        %4230 = vmatmul.mubr.bf16.gmra.mxu0 %v3836
        %v4231 = vpop.f32.mrf.mxu0
        %v4232 = vadd.f32 %v4135, %v4231
        %v4233 = vpop.f32.mrf.mxu0
        %v4234 = vpop.f32.mrf.mxu0
        %v4235 = vadd.f32 %v4138, %v4234
        %v4236 = vpop.f32.mrf.mxu0
        %4237 = vmatprep.mubr.bf16.mxu0 %v3841
        %4238 = vmatmul.mubr.bf16.gmra.mxu0 %v3840
        %v4239 = vpop.f32.mrf.mxu0
        %v4240 = vadd.f32 %v4143, %v4239
        %v4241 = vpop.f32.mrf.mxu0
        %v4242 = vpop.f32.mrf.mxu0
        %v4243 = vadd.f32 %v4146, %v4242
        %v4244 = vpop.f32.mrf.mxu0
        %4245 = vmatprep.mubr.bf16.mxu0 %v3845
        %4246 = vmatmul.mubr.bf16.gmra.mxu0 %v3844
        %v4247 = vpop.f32.mrf.mxu0
        %v4248 = vadd.f32 %v4151, %v4247
        %v4249 = vpop.f32.mrf.mxu0
        %v4250 = vpop.f32.mrf.mxu0
        %v4251 = vadd.f32 %v4154, %v4250
        %v4252 = vpop.f32.mrf.mxu0
        %4253 = vmatprep.mubr.bf16.mxu0 %v3849
        %4254 = vmatmul.mubr.bf16.gmra.mxu0 %v3848
        %v4255 = vpop.f32.mrf.mxu0
        %v4256 = vadd.f32 %v4159, %v4255
        %v4257 = vpop.f32.mrf.mxu0
        %v4258 = vpop.f32.mrf.mxu0
        %v4259 = vadd.f32 %v4162, %v4258
        %v4260 = vpop.f32.mrf.mxu0
        %4261 = vmatprep.mubr.bf16.mxu0 %v3853
        %4262 = vmatmul.mubr.bf16.gmra.mxu0 %v3852
        %v4263 = vpop.f32.mrf.mxu0
        %v4264 = vadd.f32 %v4167, %v4263
        %v4265 = vpop.f32.mrf.mxu0
        %v4266 = vpop.f32.mrf.mxu0
        %v4267 = vadd.f32 %v4170, %v4266
        %v4268 = vpop.f32.mrf.mxu0
        %4269 = vmatprep.mubr.bf16.mxu0 %v3857
        %4270 = vmatmul.mubr.bf16.gmra.mxu0 %v3856
        %v4271 = vpop.f32.mrf.mxu0
        %v4272 = vadd.f32 %v4175, %v4271
        %v4273 = vpop.f32.mrf.mxu0
        %v4274 = vpop.f32.mrf.mxu0
        %v4275 = vadd.f32 %v4178, %v4274
        %v4276 = vpop.f32.mrf.mxu0
        %4277 = vdwg.mxu0
        %v4278 = vmax.f32 %v4006, 0.0
        %v4279 = vmax.f32 %v4008, 0.0
        %v4280 = vmax.f32 %v4216, 0.0
        %v4281 = vmax.f32 %v4010, 0.0
        %v4282 = vmax.f32 %v4012, 0.0
        %v4283 = vmax.f32 %v4219, 0.0
        %v4284 = vmax.f32 %v4016, 0.0
        %v4285 = vmax.f32 %v4018, 0.0
        %v4286 = vmax.f32 %v4224, 0.0
        %v4287 = vmax.f32 %v4020, 0.0
        %v4288 = vmax.f32 %v4022, 0.0
        %v4289 = vmax.f32 %v4227, 0.0
        %v4290 = vmax.f32 %v4026, 0.0
        %v4291 = vmax.f32 %v4028, 0.0
        %v4292 = vmax.f32 %v4232, 0.0
        %v4293 = vmax.f32 %v4030, 0.0
        %v4294 = vmax.f32 %v4032, 0.0
        %v4295 = vmax.f32 %v4235, 0.0
        %v4296 = vmax.f32 %v4036, 0.0
        %v4297 = vmax.f32 %v4038, 0.0
        %v4298 = vmax.f32 %v4240, 0.0
        %v4299 = vmax.f32 %v4040, 0.0
        %v4300 = vmax.f32 %v4042, 0.0
        %v4301 = vmax.f32 %v4243, 0.0
        %v4302 = vmax.f32 %v4046, 0.0
        %v4303 = vmax.f32 %v4048, 0.0
        %v4304 = vmax.f32 %v4248, 0.0
        %v4305 = vmax.f32 %v4050, 0.0
        %v4306 = vmax.f32 %v4052, 0.0
        %v4307 = vmax.f32 %v4251, 0.0
        %v4308 = vmax.f32 %v4056, 0.0
        %v4309 = vmax.f32 %v4058, 0.0
        %v4310 = vmax.f32 %v4256, 0.0
        %v4311 = vmax.f32 %v4060, 0.0
        %v4312 = vmax.f32 %v4062, 0.0
        %v4313 = vmax.f32 %v4259, 0.0
        %v4314 = vmax.f32 %v4066, 0.0
        %v4315 = vmax.f32 %v4068, 0.0
        %v4316 = vmax.f32 %v4264, 0.0
        %v4317 = vmax.f32 %v4070, 0.0
        %v4318 = vmax.f32 %v4072, 0.0
        %v4319 = vmax.f32 %v4267, 0.0
        %v4320 = vmax.f32 %v4076, 0.0
        %v4321 = vmax.f32 %v4078, 0.0
        %v4322 = vmax.f32 %v4272, 0.0
        %v4323 = vmax.f32 %v4080, 0.0
        %v4324 = vmax.f32 %v4082, 0.0
        %v4325 = vmax.f32 %v4275, 0.0
        %v4326 = vmul.f32 %v4278, %v2077
        %v4327 = vmul.f32 %v4279, %v2081
        %v4328 = vmul.f32 %v4280, %v2085
        %v4329 = vmul.f32 %v4281, %v2077
        %v4330 = vmul.f32 %v4282, %v2081
        %v4331 = vmul.f32 %v4283, %v2085
        %v4332 = vmul.f32 %v4284, %v2077
        %v4333 = vmul.f32 %v4285, %v2081
        %v4334 = vmul.f32 %v4286, %v2085
        %v4335 = vmul.f32 %v4287, %v2077
        %v4336 = vmul.f32 %v4288, %v2081
        %v4337 = vmul.f32 %v4289, %v2085
        %v4338 = vmul.f32 %v4290, %v2077
        %v4339 = vmul.f32 %v4291, %v2081
        %v4340 = vmul.f32 %v4292, %v2085
        %v4341 = vmul.f32 %v4293, %v2077
        %v4342 = vmul.f32 %v4294, %v2081
        %v4343 = vmul.f32 %v4295, %v2085
        %v4344 = vmul.f32 %v4296, %v2077
        %v4345 = vmul.f32 %v4297, %v2081
        %v4346 = vmul.f32 %v4298, %v2085
        %v4347 = vmul.f32 %v4299, %v2077
        %v4348 = vmul.f32 %v4300, %v2081
        %v4349 = vmul.f32 %v4301, %v2085
        %v4350 = vmul.f32 %v4302, %v2077
        %v4351 = vmul.f32 %v4303, %v2081
        %v4352 = vmul.f32 %v4304, %v2085
        %v4353 = vmul.f32 %v4305, %v2077
        %v4354 = vmul.f32 %v4306, %v2081
        %v4355 = vmul.f32 %v4307, %v2085
        %v4356 = vmul.f32 %v4308, %v2077
        %v4357 = vmul.f32 %v4309, %v2081
        %v4358 = vmul.f32 %v4310, %v2085
        %v4359 = vmul.f32 %v4311, %v2077
        %v4360 = vmul.f32 %v4312, %v2081
        %v4361 = vmul.f32 %v4313, %v2085
        %v4362 = vmul.f32 %v4314, %v2077
        %v4363 = vmul.f32 %v4315, %v2081
        %v4364 = vmul.f32 %v4316, %v2085
        %v4365 = vmul.f32 %v4317, %v2077
        %v4366 = vmul.f32 %v4318, %v2081
        %v4367 = vmul.f32 %v4319, %v2085
        %v4368 = vmul.f32 %v4320, %v2077
        %v4369 = vmul.f32 %v4321, %v2081
        %v4370 = vmul.f32 %v4322, %v2085
        %v4371 = vmul.f32 %v4323, %v2077
        %v4372 = vmul.f32 %v4324, %v2081
        %v4373 = vmul.f32 %v4325, %v2085
        %v4374 = vadd.f32 %v4326, %v4327
        %v4375 = vadd.f32 %v4374, %v4328
        %4376 = vadd.xlane.f32.xlu0 %v4375
        %v4377 = vpop.xlane.xlu0 %4376
        %v4378 = vadd.f32 %v4329, %v4330
        %v4379 = vadd.f32 %v4378, %v4331
        %4380 = vadd.xlane.f32.xlu0 %v4379
        %v4381 = vpop.xlane.xlu0 %4380
        %v4382 = vadd.f32 %v4332, %v4333
        %v4383 = vadd.f32 %v4382, %v4334
        %4384 = vadd.xlane.f32.xlu0 %v4383
        %v4385 = vpop.xlane.xlu0 %4384
        %v4386 = vadd.f32 %v4335, %v4336
        %v4387 = vadd.f32 %v4386, %v4337
        %4388 = vadd.xlane.f32.xlu0 %v4387
        %v4389 = vpop.xlane.xlu0 %4388
        %v4390 = vadd.f32 %v4338, %v4339
        %v4391 = vadd.f32 %v4390, %v4340
        %4392 = vadd.xlane.f32.xlu0 %v4391
        %v4393 = vpop.xlane.xlu0 %4392
        %v4394 = vadd.f32 %v4341, %v4342
        %v4395 = vadd.f32 %v4394, %v4343
        %4396 = vadd.xlane.f32.xlu0 %v4395
        %v4397 = vpop.xlane.xlu0 %4396
        %v4398 = vadd.f32 %v4344, %v4345
        %v4399 = vadd.f32 %v4398, %v4346
        %4400 = vadd.xlane.f32.xlu0 %v4399
        %v4401 = vpop.xlane.xlu0 %4400
        %v4402 = vadd.f32 %v4347, %v4348
        %v4403 = vadd.f32 %v4402, %v4349
        %4404 = vadd.xlane.f32.xlu0 %v4403
        %v4405 = vpop.xlane.xlu0 %4404
        %v4406 = vadd.f32 %v4350, %v4351
        %v4407 = vadd.f32 %v4406, %v4352
        %4408 = vadd.xlane.f32.xlu0 %v4407
        %v4409 = vpop.xlane.xlu0 %4408
        %v4410 = vadd.f32 %v4353, %v4354
        %v4411 = vadd.f32 %v4410, %v4355
        %4412 = vadd.xlane.f32.xlu0 %v4411
        %v4413 = vpop.xlane.xlu0 %4412
        %v4414 = vadd.f32 %v4356, %v4357
        %v4415 = vadd.f32 %v4414, %v4358
        %4416 = vadd.xlane.f32.xlu0 %v4415
        %v4417 = vpop.xlane.xlu0 %4416
        %v4418 = vadd.f32 %v4359, %v4360
        %v4419 = vadd.f32 %v4418, %v4361
        %4420 = vadd.xlane.f32.xlu0 %v4419
        %v4421 = vpop.xlane.xlu0 %4420
        %v4422 = vadd.f32 %v4362, %v4363
        %v4423 = vadd.f32 %v4422, %v4364
        %4424 = vadd.xlane.f32.xlu0 %v4423
        %v4425 = vpop.xlane.xlu0 %4424
        %v4426 = vadd.f32 %v4365, %v4366
        %v4427 = vadd.f32 %v4426, %v4367
        %4428 = vadd.xlane.f32.xlu0 %v4427
        %v4429 = vpop.xlane.xlu0 %4428
        %v4430 = vadd.f32 %v4368, %v4369
        %v4431 = vadd.f32 %v4430, %v4370
        %4432 = vadd.xlane.f32.xlu0 %v4431
        %v4433 = vpop.xlane.xlu0 %4432
        %v4434 = vadd.f32 %v4371, %v4372
        %v4435 = vadd.f32 %v4434, %v4373
        %4436 = vadd.xlane.f32.xlu0 %v4435
        %v4437 = vpop.xlane.xlu0 %4436
        %v4438 = vadd.f32 %v4377, %v2201
        %v4439 = vadd.f32 %v4381, %v2201
        %v4440 = vadd.f32 %v4385, %v2201
        %v4441 = vadd.f32 %v4389, %v2201
        %v4442 = vadd.f32 %v4393, %v2201
        %v4443 = vadd.f32 %v4397, %v2201
        %v4444 = vadd.f32 %v4401, %v2201
        %v4445 = vadd.f32 %v4405, %v2201
        %v4446 = vadd.f32 %v4409, %v2201
        %v4447 = vadd.f32 %v4413, %v2201
        %v4448 = vadd.f32 %v4417, %v2201
        %v4449 = vadd.f32 %v4421, %v2201
        %v4450 = vadd.f32 %v4425, %v2201
        %v4451 = vadd.f32 %v4429, %v2201
        %v4452 = vadd.f32 %v4433, %v2201
        %v4453 = vadd.f32 %v4437, %v2201
        %v4454 = vmax.f32 %v4438, 0.0
        %v4455 = vmax.f32 %v4439, 0.0
        %v4456 = vmax.f32 %v4440, 0.0
        %v4457 = vmax.f32 %v4441, 0.0
        %v4458 = vmax.f32 %v4442, 0.0
        %v4459 = vmax.f32 %v4443, 0.0
        %v4460 = vmax.f32 %v4444, 0.0
        %v4461 = vmax.f32 %v4445, 0.0
        %v4462 = vmax.f32 %v4446, 0.0
        %v4463 = vmax.f32 %v4447, 0.0
        %v4464 = vmax.f32 %v4448, 0.0
        %v4465 = vmax.f32 %v4449, 0.0
        %v4466 = vmax.f32 %v4450, 0.0
        %v4467 = vmax.f32 %v4451, 0.0
        %v4468 = vmax.f32 %v4452, 0.0
        %v4469 = vmax.f32 %v4453, 0.0
        %s4470 = sld [smem:[#allocation8 + $0x2]]
        %v4471 = vstv %s4470
        %v4472 = vmul.f32 %v4471, %v4454
        %v4473 = vmul.f32 %v4471, %v4455
        %v4474 = vmul.f32 %v4471, %v4456
        %v4475 = vmul.f32 %v4471, %v4457
        %v4476 = vmul.f32 %v4471, %v4458
        %v4477 = vmul.f32 %v4471, %v4459
        %v4478 = vmul.f32 %v4471, %v4460
        %v4479 = vmul.f32 %v4471, %v4461
        %v4480 = vmul.f32 %v4471, %v4462
        %v4481 = vmul.f32 %v4471, %v4463
        %v4482 = vmul.f32 %v4471, %v4464
        %v4483 = vmul.f32 %v4471, %v4465
        %v4484 = vmul.f32 %v4471, %v4466
        %v4485 = vmul.f32 %v4471, %v4467
        %v4486 = vmul.f32 %v4471, %v4468
        %v4487 = vmul.f32 %v4471, %v4469
        %v4488 = vadd.f32 %v3362, %v4472
        %v4489 = vadd.f32 %v3363, %v4473
        %v4490 = vadd.f32 %v3364, %v4474
        %v4491 = vadd.f32 %v3365, %v4475
        %v4492 = vadd.f32 %v3366, %v4476
        %v4493 = vadd.f32 %v3367, %v4477
        %v4494 = vadd.f32 %v3368, %v4478
        %v4495 = vadd.f32 %v3369, %v4479
        %v4496 = vadd.f32 %v3370, %v4480
        %v4497 = vadd.f32 %v3371, %v4481
        %v4498 = vadd.f32 %v3372, %v4482
        %v4499 = vadd.f32 %v3373, %v4483
        %v4500 = vadd.f32 %v3374, %v4484
        %v4501 = vadd.f32 %v3375, %v4485
        %v4502 = vadd.f32 %v3376, %v4486
        %v4503 = vadd.f32 %v3377, %v4487
        %4504 = vset.pattern.permute.xlu0 6
        %4505 = vperm.xlu0 %4504, %v502
        %v4506 = vpop.permute.xlu0 %4505
        %4508 = vset.pattern.permute.xlu0 6
        %4509 = vperm.xlu0 %4508, %v503
        %v4510 = vpop.permute.xlu0 %4509
        %4512 = vset.pattern.permute.xlu0 6
        %4513 = vperm.xlu0 %4512, %v504
        %v4514 = vpop.permute.xlu0 %4513
        %4516 = vset.pattern.permute.xlu0 6
        %4517 = vperm.xlu0 %4516, %v505
        %v4518 = vpop.permute.xlu0 %4517
        %4520 = vset.pattern.permute.xlu0 6
        %4521 = vperm.xlu0 %4520, %v506
        %v4522 = vpop.permute.xlu0 %4521
        %4524 = vset.pattern.permute.xlu0 6
        %4525 = vperm.xlu0 %4524, %v507
        %v4526 = vpop.permute.xlu0 %4525
        %4528 = vset.pattern.permute.xlu0 6
        %4529 = vperm.xlu0 %4528, %v508
        %v4530 = vpop.permute.xlu0 %4529
        %4532 = vset.pattern.permute.xlu0 6
        %4533 = vperm.xlu0 %4532, %v509
        %v4534 = vpop.permute.xlu0 %4533
        %4536 = vset.pattern.permute.xlu0 6
        %4537 = vperm.xlu0 %4536, %v510
        %v4538 = vpop.permute.xlu0 %4537
        %4540 = vset.pattern.permute.xlu0 6
        %4541 = vperm.xlu0 %4540, %v511
        %v4542 = vpop.permute.xlu0 %4541
        %4544 = vset.pattern.permute.xlu0 6
        %4545 = vperm.xlu0 %4544, %v512
        %v4546 = vpop.permute.xlu0 %4545
        %4548 = vset.pattern.permute.xlu0 6
        %4549 = vperm.xlu0 %4548, %v513
        %v4550 = vpop.permute.xlu0 %4549
        %4552 = vset.pattern.permute.xlu0 6
        %4553 = vperm.xlu0 %4552, %v514
        %v4554 = vpop.permute.xlu0 %4553
        %4556 = vset.pattern.permute.xlu0 6
        %4557 = vperm.xlu0 %4556, %v515
        %v4558 = vpop.permute.xlu0 %4557
        %4560 = vset.pattern.permute.xlu0 6
        %4561 = vperm.xlu0 %4560, %v516
        %v4562 = vpop.permute.xlu0 %4561
        %4564 = vset.pattern.permute.xlu0 6
        %4565 = vperm.xlu0 %4564, %v517
        %v4566 = vpop.permute.xlu0 %4565
        %v4568 = vmul.f32 %v4506, %v602
        %v4569 = vmul.f32 %v4506, %v606
        %v4570 = vmul.f32 %v4506, %v610
        %v4571 = vmul.f32 %v4506, %v614
        %v4572 = vmul.f32 %v4510, %v602
        %v4573 = vmul.f32 %v4510, %v606
        %v4574 = vmul.f32 %v4510, %v610
        %v4575 = vmul.f32 %v4510, %v614
        %v4576 = vmul.f32 %v4514, %v602
        %v4577 = vmul.f32 %v4514, %v606
        %v4578 = vmul.f32 %v4514, %v610
        %v4579 = vmul.f32 %v4514, %v614
        %v4580 = vmul.f32 %v4518, %v602
        %v4581 = vmul.f32 %v4518, %v606
        %v4582 = vmul.f32 %v4518, %v610
        %v4583 = vmul.f32 %v4518, %v614
        %v4584 = vmul.f32 %v4522, %v602
        %v4585 = vmul.f32 %v4522, %v606
        %v4586 = vmul.f32 %v4522, %v610
        %v4587 = vmul.f32 %v4522, %v614
        %v4588 = vmul.f32 %v4526, %v602
        %v4589 = vmul.f32 %v4526, %v606
        %v4590 = vmul.f32 %v4526, %v610
        %v4591 = vmul.f32 %v4526, %v614
        %v4592 = vmul.f32 %v4530, %v602
        %v4593 = vmul.f32 %v4530, %v606
        %v4594 = vmul.f32 %v4530, %v610
        %v4595 = vmul.f32 %v4530, %v614
        %v4596 = vmul.f32 %v4534, %v602
        %v4597 = vmul.f32 %v4534, %v606
        %v4598 = vmul.f32 %v4534, %v610
        %v4599 = vmul.f32 %v4534, %v614
        %v4600 = vmul.f32 %v4538, %v602
        %v4601 = vmul.f32 %v4538, %v606
        %v4602 = vmul.f32 %v4538, %v610
        %v4603 = vmul.f32 %v4538, %v614
        %v4604 = vmul.f32 %v4542, %v602
        %v4605 = vmul.f32 %v4542, %v606
        %v4606 = vmul.f32 %v4542, %v610
        %v4607 = vmul.f32 %v4542, %v614
        %v4608 = vmul.f32 %v4546, %v602
        %v4609 = vmul.f32 %v4546, %v606
        %v4610 = vmul.f32 %v4546, %v610
        %v4611 = vmul.f32 %v4546, %v614
        %v4612 = vmul.f32 %v4550, %v602
        %v4613 = vmul.f32 %v4550, %v606
        %v4614 = vmul.f32 %v4550, %v610
        %v4615 = vmul.f32 %v4550, %v614
        %v4616 = vmul.f32 %v4554, %v602
        %v4617 = vmul.f32 %v4554, %v606
        %v4618 = vmul.f32 %v4554, %v610
        %v4619 = vmul.f32 %v4554, %v614
        %v4620 = vmul.f32 %v4558, %v602
        %v4621 = vmul.f32 %v4558, %v606
        %v4622 = vmul.f32 %v4558, %v610
        %v4623 = vmul.f32 %v4558, %v614
        %v4624 = vmul.f32 %v4562, %v602
        %v4625 = vmul.f32 %v4562, %v606
        %v4626 = vmul.f32 %v4562, %v610
        %v4627 = vmul.f32 %v4562, %v614
        %v4628 = vmul.f32 %v4566, %v602
        %v4629 = vmul.f32 %v4566, %v606
        %v4630 = vmul.f32 %v4566, %v610
        %v4631 = vmul.f32 %v4566, %v614
        %4632 = vset.pattern.permute.xlu0 7
        %4633 = vperm.xlu0 %4632, %v502
        %v4634 = vpop.permute.xlu0 %4633
        %4636 = vset.pattern.permute.xlu0 7
        %4637 = vperm.xlu0 %4636, %v503
        %v4638 = vpop.permute.xlu0 %4637
        %4640 = vset.pattern.permute.xlu0 7
        %4641 = vperm.xlu0 %4640, %v504
        %v4642 = vpop.permute.xlu0 %4641
        %4644 = vset.pattern.permute.xlu0 7
        %4645 = vperm.xlu0 %4644, %v505
        %v4646 = vpop.permute.xlu0 %4645
        %4648 = vset.pattern.permute.xlu0 7
        %4649 = vperm.xlu0 %4648, %v506
        %v4650 = vpop.permute.xlu0 %4649
        %4652 = vset.pattern.permute.xlu0 7
        %4653 = vperm.xlu0 %4652, %v507
        %v4654 = vpop.permute.xlu0 %4653
        %4656 = vset.pattern.permute.xlu0 7
        %4657 = vperm.xlu0 %4656, %v508
        %v4658 = vpop.permute.xlu0 %4657
        %4660 = vset.pattern.permute.xlu0 7
        %4661 = vperm.xlu0 %4660, %v509
        %v4662 = vpop.permute.xlu0 %4661
        %4664 = vset.pattern.permute.xlu0 7
        %4665 = vperm.xlu0 %4664, %v510
        %v4666 = vpop.permute.xlu0 %4665
        %4668 = vset.pattern.permute.xlu0 7
        %4669 = vperm.xlu0 %4668, %v511
        %v4670 = vpop.permute.xlu0 %4669
        %4672 = vset.pattern.permute.xlu0 7
        %4673 = vperm.xlu0 %4672, %v512
        %v4674 = vpop.permute.xlu0 %4673
        %4676 = vset.pattern.permute.xlu0 7
        %4677 = vperm.xlu0 %4676, %v513
        %v4678 = vpop.permute.xlu0 %4677
        %4680 = vset.pattern.permute.xlu0 7
        %4681 = vperm.xlu0 %4680, %v514
        %v4682 = vpop.permute.xlu0 %4681
        %4684 = vset.pattern.permute.xlu0 7
        %4685 = vperm.xlu0 %4684, %v515
        %v4686 = vpop.permute.xlu0 %4685
        %4688 = vset.pattern.permute.xlu0 7
        %4689 = vperm.xlu0 %4688, %v516
        %v4690 = vpop.permute.xlu0 %4689
        %4692 = vset.pattern.permute.xlu0 7
        %4693 = vperm.xlu0 %4692, %v517
        %v4694 = vpop.permute.xlu0 %4693
        %v4696 = vmul.f32 %v4634, %v751
        %v4697 = vmul.f32 %v4634, %v755
        %v4698 = vmul.f32 %v4634, %v759
        %v4699 = vmul.f32 %v4634, %v763
        %v4700 = vmul.f32 %v4638, %v751
        %v4701 = vmul.f32 %v4638, %v755
        %v4702 = vmul.f32 %v4638, %v759
        %v4703 = vmul.f32 %v4638, %v763
        %v4704 = vmul.f32 %v4642, %v751
        %v4705 = vmul.f32 %v4642, %v755
        %v4706 = vmul.f32 %v4642, %v759
        %v4707 = vmul.f32 %v4642, %v763
        %v4708 = vmul.f32 %v4646, %v751
        %v4709 = vmul.f32 %v4646, %v755
        %v4710 = vmul.f32 %v4646, %v759
        %v4711 = vmul.f32 %v4646, %v763
        %v4712 = vmul.f32 %v4650, %v751
        %v4713 = vmul.f32 %v4650, %v755
        %v4714 = vmul.f32 %v4650, %v759
        %v4715 = vmul.f32 %v4650, %v763
        %v4716 = vmul.f32 %v4654, %v751
        %v4717 = vmul.f32 %v4654, %v755
        %v4718 = vmul.f32 %v4654, %v759
        %v4719 = vmul.f32 %v4654, %v763
        %v4720 = vmul.f32 %v4658, %v751
        %v4721 = vmul.f32 %v4658, %v755
        %v4722 = vmul.f32 %v4658, %v759
        %v4723 = vmul.f32 %v4658, %v763
        %v4724 = vmul.f32 %v4662, %v751
        %v4725 = vmul.f32 %v4662, %v755
        %v4726 = vmul.f32 %v4662, %v759
        %v4727 = vmul.f32 %v4662, %v763
        %v4728 = vmul.f32 %v4666, %v751
        %v4729 = vmul.f32 %v4666, %v755
        %v4730 = vmul.f32 %v4666, %v759
        %v4731 = vmul.f32 %v4666, %v763
        %v4732 = vmul.f32 %v4670, %v751
        %v4733 = vmul.f32 %v4670, %v755
        %v4734 = vmul.f32 %v4670, %v759
        %v4735 = vmul.f32 %v4670, %v763
        %v4736 = vmul.f32 %v4674, %v751
        %v4737 = vmul.f32 %v4674, %v755
        %v4738 = vmul.f32 %v4674, %v759
        %v4739 = vmul.f32 %v4674, %v763
        %v4740 = vmul.f32 %v4678, %v751
        %v4741 = vmul.f32 %v4678, %v755
        %v4742 = vmul.f32 %v4678, %v759
        %v4743 = vmul.f32 %v4678, %v763
        %v4744 = vmul.f32 %v4682, %v751
        %v4745 = vmul.f32 %v4682, %v755
        %v4746 = vmul.f32 %v4682, %v759
        %v4747 = vmul.f32 %v4682, %v763
        %v4748 = vmul.f32 %v4686, %v751
        %v4749 = vmul.f32 %v4686, %v755
        %v4750 = vmul.f32 %v4686, %v759
        %v4751 = vmul.f32 %v4686, %v763
        %v4752 = vmul.f32 %v4690, %v751
        %v4753 = vmul.f32 %v4690, %v755
        %v4754 = vmul.f32 %v4690, %v759
        %v4755 = vmul.f32 %v4690, %v763
        %v4756 = vmul.f32 %v4694, %v751
        %v4757 = vmul.f32 %v4694, %v755
        %v4758 = vmul.f32 %v4694, %v759
        %v4759 = vmul.f32 %v4694, %v763
        %v4760 = vadd.f32 %v4568, %v4696
        %v4761 = vadd.f32 %v4569, %v4697
        %v4762 = vadd.f32 %v4570, %v4698
        %v4763 = vadd.f32 %v4571, %v4699
        %v4764 = vadd.f32 %v4572, %v4700
        %v4765 = vadd.f32 %v4573, %v4701
        %v4766 = vadd.f32 %v4574, %v4702
        %v4767 = vadd.f32 %v4575, %v4703
        %v4768 = vadd.f32 %v4576, %v4704
        %v4769 = vadd.f32 %v4577, %v4705
        %v4770 = vadd.f32 %v4578, %v4706
        %v4771 = vadd.f32 %v4579, %v4707
        %v4772 = vadd.f32 %v4580, %v4708
        %v4773 = vadd.f32 %v4581, %v4709
        %v4774 = vadd.f32 %v4582, %v4710
        %v4775 = vadd.f32 %v4583, %v4711
        %v4776 = vadd.f32 %v4584, %v4712
        %v4777 = vadd.f32 %v4585, %v4713
        %v4778 = vadd.f32 %v4586, %v4714
        %v4779 = vadd.f32 %v4587, %v4715
        %v4780 = vadd.f32 %v4588, %v4716
        %v4781 = vadd.f32 %v4589, %v4717
        %v4782 = vadd.f32 %v4590, %v4718
        %v4783 = vadd.f32 %v4591, %v4719
        %v4784 = vadd.f32 %v4592, %v4720
        %v4785 = vadd.f32 %v4593, %v4721
        %v4786 = vadd.f32 %v4594, %v4722
        %v4787 = vadd.f32 %v4595, %v4723
        %v4788 = vadd.f32 %v4596, %v4724
        %v4789 = vadd.f32 %v4597, %v4725
        %v4790 = vadd.f32 %v4598, %v4726
        %v4791 = vadd.f32 %v4599, %v4727
        %v4792 = vadd.f32 %v4600, %v4728
        %v4793 = vadd.f32 %v4601, %v4729
        %v4794 = vadd.f32 %v4602, %v4730
        %v4795 = vadd.f32 %v4603, %v4731
        %v4796 = vadd.f32 %v4604, %v4732
        %v4797 = vadd.f32 %v4605, %v4733
        %v4798 = vadd.f32 %v4606, %v4734
        %v4799 = vadd.f32 %v4607, %v4735
        %v4800 = vadd.f32 %v4608, %v4736
        %v4801 = vadd.f32 %v4609, %v4737
        %v4802 = vadd.f32 %v4610, %v4738
        %v4803 = vadd.f32 %v4611, %v4739
        %v4804 = vadd.f32 %v4612, %v4740
        %v4805 = vadd.f32 %v4613, %v4741
        %v4806 = vadd.f32 %v4614, %v4742
        %v4807 = vadd.f32 %v4615, %v4743
        %v4808 = vadd.f32 %v4616, %v4744
        %v4809 = vadd.f32 %v4617, %v4745
        %v4810 = vadd.f32 %v4618, %v4746
        %v4811 = vadd.f32 %v4619, %v4747
        %v4812 = vadd.f32 %v4620, %v4748
        %v4813 = vadd.f32 %v4621, %v4749
        %v4814 = vadd.f32 %v4622, %v4750
        %v4815 = vadd.f32 %v4623, %v4751
        %v4816 = vadd.f32 %v4624, %v4752
        %v4817 = vadd.f32 %v4625, %v4753
        %v4818 = vadd.f32 %v4626, %v4754
        %v4819 = vadd.f32 %v4627, %v4755
        %v4820 = vadd.f32 %v4628, %v4756
        %v4821 = vadd.f32 %v4629, %v4757
        %v4822 = vadd.f32 %v4630, %v4758
        %v4823 = vadd.f32 %v4631, %v4759
        %v4824 = vadd.f32 %v4760, %v900
        %v4825 = vadd.f32 %v4761, %v904
        %v4826 = vadd.f32 %v4762, %v908
        %v4827 = vadd.f32 %v4763, %v912
        %v4828 = vadd.f32 %v4764, %v900
        %v4829 = vadd.f32 %v4765, %v904
        %v4830 = vadd.f32 %v4766, %v908
        %v4831 = vadd.f32 %v4767, %v912
        %v4832 = vadd.f32 %v4768, %v900
        %v4833 = vadd.f32 %v4769, %v904
        %v4834 = vadd.f32 %v4770, %v908
        %v4835 = vadd.f32 %v4771, %v912
        %v4836 = vadd.f32 %v4772, %v900
        %v4837 = vadd.f32 %v4773, %v904
        %v4838 = vadd.f32 %v4774, %v908
        %v4839 = vadd.f32 %v4775, %v912
        %v4840 = vadd.f32 %v4776, %v900
        %v4841 = vadd.f32 %v4777, %v904
        %v4842 = vadd.f32 %v4778, %v908
        %v4843 = vadd.f32 %v4779, %v912
        %v4844 = vadd.f32 %v4780, %v900
        %v4845 = vadd.f32 %v4781, %v904
        %v4846 = vadd.f32 %v4782, %v908
        %v4847 = vadd.f32 %v4783, %v912
        %v4848 = vadd.f32 %v4784, %v900
        %v4849 = vadd.f32 %v4785, %v904
        %v4850 = vadd.f32 %v4786, %v908
        %v4851 = vadd.f32 %v4787, %v912
        %v4852 = vadd.f32 %v4788, %v900
        %v4853 = vadd.f32 %v4789, %v904
        %v4854 = vadd.f32 %v4790, %v908
        %v4855 = vadd.f32 %v4791, %v912
        %v4856 = vadd.f32 %v4792, %v900
        %v4857 = vadd.f32 %v4793, %v904
        %v4858 = vadd.f32 %v4794, %v908
        %v4859 = vadd.f32 %v4795, %v912
        %v4860 = vadd.f32 %v4796, %v900
        %v4861 = vadd.f32 %v4797, %v904
        %v4862 = vadd.f32 %v4798, %v908
        %v4863 = vadd.f32 %v4799, %v912
        %v4864 = vadd.f32 %v4800, %v900
        %v4865 = vadd.f32 %v4801, %v904
        %v4866 = vadd.f32 %v4802, %v908
        %v4867 = vadd.f32 %v4803, %v912
        %v4868 = vadd.f32 %v4804, %v900
        %v4869 = vadd.f32 %v4805, %v904
        %v4870 = vadd.f32 %v4806, %v908
        %v4871 = vadd.f32 %v4807, %v912
        %v4872 = vadd.f32 %v4808, %v900
        %v4873 = vadd.f32 %v4809, %v904
        %v4874 = vadd.f32 %v4810, %v908
        %v4875 = vadd.f32 %v4811, %v912
        %v4876 = vadd.f32 %v4812, %v900
        %v4877 = vadd.f32 %v4813, %v904
        %v4878 = vadd.f32 %v4814, %v908
        %v4879 = vadd.f32 %v4815, %v912
        %v4880 = vadd.f32 %v4816, %v900
        %v4881 = vadd.f32 %v4817, %v904
        %v4882 = vadd.f32 %v4818, %v908
        %v4883 = vadd.f32 %v4819, %v912
        %v4884 = vadd.f32 %v4820, %v900
        %v4885 = vadd.f32 %v4821, %v904
        %v4886 = vadd.f32 %v4822, %v908
        %v4887 = vadd.f32 %v4823, %v912
        %v4888 = vmax.f32 %v4824, 0.0
        %v4889 = vmax.f32 %v4825, 0.0
        %v4890 = vmax.f32 %v4826, 0.0
        %v4891 = vmax.f32 %v4827, 0.0
        %v4892 = vmax.f32 %v4828, 0.0
        %v4893 = vmax.f32 %v4829, 0.0
        %v4894 = vmax.f32 %v4830, 0.0
        %v4895 = vmax.f32 %v4831, 0.0
        %v4896 = vmax.f32 %v4832, 0.0
        %v4897 = vmax.f32 %v4833, 0.0
        %v4898 = vmax.f32 %v4834, 0.0
        %v4899 = vmax.f32 %v4835, 0.0
        %v4900 = vmax.f32 %v4836, 0.0
        %v4901 = vmax.f32 %v4837, 0.0
        %v4902 = vmax.f32 %v4838, 0.0
        %v4903 = vmax.f32 %v4839, 0.0
        %v4904 = vmax.f32 %v4840, 0.0
        %v4905 = vmax.f32 %v4841, 0.0
        %v4906 = vmax.f32 %v4842, 0.0
        %v4907 = vmax.f32 %v4843, 0.0
        %v4908 = vmax.f32 %v4844, 0.0
        %v4909 = vmax.f32 %v4845, 0.0
        %v4910 = vmax.f32 %v4846, 0.0
        %v4911 = vmax.f32 %v4847, 0.0
        %v4912 = vmax.f32 %v4848, 0.0
        %v4913 = vmax.f32 %v4849, 0.0
        %v4914 = vmax.f32 %v4850, 0.0
        %v4915 = vmax.f32 %v4851, 0.0
        %v4916 = vmax.f32 %v4852, 0.0
        %v4917 = vmax.f32 %v4853, 0.0
        %v4918 = vmax.f32 %v4854, 0.0
        %v4919 = vmax.f32 %v4855, 0.0
        %v4920 = vmax.f32 %v4856, 0.0
        %v4921 = vmax.f32 %v4857, 0.0
        %v4922 = vmax.f32 %v4858, 0.0
        %v4923 = vmax.f32 %v4859, 0.0
        %v4924 = vmax.f32 %v4860, 0.0
        %v4925 = vmax.f32 %v4861, 0.0
        %v4926 = vmax.f32 %v4862, 0.0
        %v4927 = vmax.f32 %v4863, 0.0
        %v4928 = vmax.f32 %v4864, 0.0
        %v4929 = vmax.f32 %v4865, 0.0
        %v4930 = vmax.f32 %v4866, 0.0
        %v4931 = vmax.f32 %v4867, 0.0
        %v4932 = vmax.f32 %v4868, 0.0
        %v4933 = vmax.f32 %v4869, 0.0
        %v4934 = vmax.f32 %v4870, 0.0
        %v4935 = vmax.f32 %v4871, 0.0
        %v4936 = vmax.f32 %v4872, 0.0
        %v4937 = vmax.f32 %v4873, 0.0
        %v4938 = vmax.f32 %v4874, 0.0
        %v4939 = vmax.f32 %v4875, 0.0
        %v4940 = vmax.f32 %v4876, 0.0
        %v4941 = vmax.f32 %v4877, 0.0
        %v4942 = vmax.f32 %v4878, 0.0
        %v4943 = vmax.f32 %v4879, 0.0
        %v4944 = vmax.f32 %v4880, 0.0
        %v4945 = vmax.f32 %v4881, 0.0
        %v4946 = vmax.f32 %v4882, 0.0
        %v4947 = vmax.f32 %v4883, 0.0
        %v4948 = vmax.f32 %v4884, 0.0
        %v4949 = vmax.f32 %v4885, 0.0
        %v4950 = vmax.f32 %v4886, 0.0
        %v4951 = vmax.f32 %v4887, 0.0
        %v4952 = vpack.c.bf16 %v4892, %v4888
        %v4953 = vpack.c.bf16 %v4893, %v4889
        %v4954 = vpack.c.bf16 %v4894, %v4890
        %v4955 = vpack.c.bf16 %v4895, %v4891
        %v4956 = vpack.c.bf16 %v4900, %v4896
        %v4957 = vpack.c.bf16 %v4901, %v4897
        %v4958 = vpack.c.bf16 %v4902, %v4898
        %v4959 = vpack.c.bf16 %v4903, %v4899
        %v4960 = vpack.c.bf16 %v4908, %v4904
        %v4961 = vpack.c.bf16 %v4909, %v4905
        %v4962 = vpack.c.bf16 %v4910, %v4906
        %v4963 = vpack.c.bf16 %v4911, %v4907
        %v4964 = vpack.c.bf16 %v4916, %v4912
        %v4965 = vpack.c.bf16 %v4917, %v4913
        %v4966 = vpack.c.bf16 %v4918, %v4914
        %v4967 = vpack.c.bf16 %v4919, %v4915
        %v4968 = vpack.c.bf16 %v4924, %v4920
        %v4969 = vpack.c.bf16 %v4925, %v4921
        %v4970 = vpack.c.bf16 %v4926, %v4922
        %v4971 = vpack.c.bf16 %v4927, %v4923
        %v4972 = vpack.c.bf16 %v4932, %v4928
        %v4973 = vpack.c.bf16 %v4933, %v4929
        %v4974 = vpack.c.bf16 %v4934, %v4930
        %v4975 = vpack.c.bf16 %v4935, %v4931
        %v4976 = vpack.c.bf16 %v4940, %v4936
        %v4977 = vpack.c.bf16 %v4941, %v4937
        %v4978 = vpack.c.bf16 %v4942, %v4938
        %v4979 = vpack.c.bf16 %v4943, %v4939
        %v4980 = vpack.c.bf16 %v4948, %v4944
        %v4981 = vpack.c.bf16 %v4949, %v4945
        %v4982 = vpack.c.bf16 %v4950, %v4946
        %v4983 = vpack.c.bf16 %v4951, %v4947
        %4984 = vmatprep.subr.bf16.mxu0 %v1435
        %4985 = vmatpush1.bf16.msra.mxu0 %v1434
        %4986 = vmatprep.subr.bf16.mxu0 %v1432
        %4987 = vmatpush1.bf16.msra.mxu0 %v1431
        %4988 = vmatprep.subr.bf16.mxu0 %v1429
        %4989 = vmatpush1.bf16.msra.mxu0 %v1428
        %4990 = vmatprep.subr.bf16.mxu0 %v1426
        %4991 = vmatpush1.bf16.msra.mxu0 %v1425
        %4992 = vmatprep.subr.bf16.mxu0 %v1423
        %4993 = vmatpush1.bf16.msra.mxu0 %v1422
        %4994 = vmatprep.subr.bf16.mxu0 %v1420
        %4995 = vmatpush1.bf16.msra.mxu0 %v1419
        %4996 = vmatprep.subr.bf16.mxu0 %v1417
        %4997 = vmatpush1.bf16.msra.mxu0 %v1416
        %4998 = vmatprep.subr.bf16.mxu0 %v1414
        %4999 = vmatpush1.bf16.msra.mxu0 %v1413
        %5000 = vmatprep.subr.bf16.mxu0 %v1459
        %5001 = vmatpush2.bf16.msra.mxu0 %v1458
        %5002 = vmatprep.subr.bf16.mxu0 %v1456
        %5003 = vmatpush2.bf16.msra.mxu0 %v1455
        %5004 = vmatprep.subr.bf16.mxu0 %v1453
        %5005 = vmatpush2.bf16.msra.mxu0 %v1452
        %5006 = vmatprep.subr.bf16.mxu0 %v1450
        %5007 = vmatpush2.bf16.msra.mxu0 %v1449
        %5008 = vmatprep.subr.bf16.mxu0 %v1447
        %5009 = vmatpush2.bf16.msra.mxu0 %v1446
        %5010 = vmatprep.subr.bf16.mxu0 %v1444
        %5011 = vmatpush2.bf16.msra.mxu0 %v1443
        %5012 = vmatprep.subr.bf16.mxu0 %v1441
        %5013 = vmatpush2.bf16.msra.mxu0 %v1440
        %5014 = vmatprep.subr.bf16.mxu0 %v1438
        %5015 = vmatpush2.bf16.msra.mxu0 %v1437
        %5016 = vmatprep.mubr.bf16.mxu0 %v4953
        %5017 = vmatmul.mubr.bf16.gmra.mxu0 %v4952
        %v5018 = vpop.f32.mrf.mxu0
        %v5019 = vadd.f32 %v1081, %v5018
        %v5020 = vpop.f32.mrf.mxu0
        %v5021 = vadd.f32 %v1085, %v5020
        %v5022 = vpop.f32.mrf.mxu0
        %v5023 = vadd.f32 %v1081, %v5022
        %v5024 = vpop.f32.mrf.mxu0
        %v5025 = vadd.f32 %v1085, %v5024
        %5026 = vmatprep.mubr.bf16.mxu0 %v4957
        %5027 = vmatmul.mubr.bf16.gmra.mxu0 %v4956
        %v5028 = vpop.f32.mrf.mxu0
        %v5029 = vadd.f32 %v1081, %v5028
        %v5030 = vpop.f32.mrf.mxu0
        %v5031 = vadd.f32 %v1085, %v5030
        %v5032 = vpop.f32.mrf.mxu0
        %v5033 = vadd.f32 %v1081, %v5032
        %v5034 = vpop.f32.mrf.mxu0
        %v5035 = vadd.f32 %v1085, %v5034
        %5036 = vmatprep.mubr.bf16.mxu0 %v4961
        %5037 = vmatmul.mubr.bf16.gmra.mxu0 %v4960
        %v5038 = vpop.f32.mrf.mxu0
        %v5039 = vadd.f32 %v1081, %v5038
        %v5040 = vpop.f32.mrf.mxu0
        %v5041 = vadd.f32 %v1085, %v5040
        %v5042 = vpop.f32.mrf.mxu0
        %v5043 = vadd.f32 %v1081, %v5042
        %v5044 = vpop.f32.mrf.mxu0
        %v5045 = vadd.f32 %v1085, %v5044
        %5046 = vmatprep.mubr.bf16.mxu0 %v4965
        %5047 = vmatmul.mubr.bf16.gmra.mxu0 %v4964
        %v5048 = vpop.f32.mrf.mxu0
        %v5049 = vadd.f32 %v1081, %v5048
        %v5050 = vpop.f32.mrf.mxu0
        %v5051 = vadd.f32 %v1085, %v5050
        %v5052 = vpop.f32.mrf.mxu0
        %v5053 = vadd.f32 %v1081, %v5052
        %v5054 = vpop.f32.mrf.mxu0
        %v5055 = vadd.f32 %v1085, %v5054
        %5056 = vmatprep.mubr.bf16.mxu0 %v4969
        %5057 = vmatmul.mubr.bf16.gmra.mxu0 %v4968
        %v5058 = vpop.f32.mrf.mxu0
        %v5059 = vadd.f32 %v1081, %v5058
        %v5060 = vpop.f32.mrf.mxu0
        %v5061 = vadd.f32 %v1085, %v5060
        %v5062 = vpop.f32.mrf.mxu0
        %v5063 = vadd.f32 %v1081, %v5062
        %v5064 = vpop.f32.mrf.mxu0
        %v5065 = vadd.f32 %v1085, %v5064
        %5066 = vmatprep.mubr.bf16.mxu0 %v4973
        %5067 = vmatmul.mubr.bf16.gmra.mxu0 %v4972
        %v5068 = vpop.f32.mrf.mxu0
        %v5069 = vadd.f32 %v1081, %v5068
        %v5070 = vpop.f32.mrf.mxu0
        %v5071 = vadd.f32 %v1085, %v5070
        %v5072 = vpop.f32.mrf.mxu0
        %v5073 = vadd.f32 %v1081, %v5072
        %v5074 = vpop.f32.mrf.mxu0
        %v5075 = vadd.f32 %v1085, %v5074
        %5076 = vmatprep.mubr.bf16.mxu0 %v4977
        %5077 = vmatmul.mubr.bf16.gmra.mxu0 %v4976
        %v5078 = vpop.f32.mrf.mxu0
        %v5079 = vadd.f32 %v1081, %v5078
        %v5080 = vpop.f32.mrf.mxu0
        %v5081 = vadd.f32 %v1085, %v5080
        %v5082 = vpop.f32.mrf.mxu0
        %v5083 = vadd.f32 %v1081, %v5082
        %v5084 = vpop.f32.mrf.mxu0
        %v5085 = vadd.f32 %v1085, %v5084
        %5086 = vmatprep.mubr.bf16.mxu0 %v4981
        %5087 = vmatmul.mubr.bf16.gmra.mxu0 %v4980
        %v5088 = vpop.f32.mrf.mxu0
        %v5089 = vadd.f32 %v1081, %v5088
        %v5090 = vpop.f32.mrf.mxu0
        %v5091 = vadd.f32 %v1085, %v5090
        %v5092 = vpop.f32.mrf.mxu0
        %v5093 = vadd.f32 %v1081, %v5092
        %v5094 = vpop.f32.mrf.mxu0
        %v5095 = vadd.f32 %v1085, %v5094
        %5096 = vdwg.mxu0
        %5097 = vmatprep.subr.bf16.mxu0 %v1483
        %5098 = vmatpush1.bf16.msra.mxu0 %v1482
        %5099 = vmatprep.subr.bf16.mxu0 %v1480
        %5100 = vmatpush1.bf16.msra.mxu0 %v1479
        %5101 = vmatprep.subr.bf16.mxu0 %v1477
        %5102 = vmatpush1.bf16.msra.mxu0 %v1476
        %5103 = vmatprep.subr.bf16.mxu0 %v1474
        %5104 = vmatpush1.bf16.msra.mxu0 %v1473
        %5105 = vmatprep.subr.bf16.mxu0 %v1471
        %5106 = vmatpush1.bf16.msra.mxu0 %v1470
        %5107 = vmatprep.subr.bf16.mxu0 %v1468
        %5108 = vmatpush1.bf16.msra.mxu0 %v1467
        %5109 = vmatprep.subr.bf16.mxu0 %v1465
        %5110 = vmatpush1.bf16.msra.mxu0 %v1464
        %5111 = vmatprep.subr.bf16.mxu0 %v1462
        %5112 = vmatpush1.bf16.msra.mxu0 %v1461
        %5113 = vmatprep.subr.bf16.mxu0 %v1507
        %5114 = vmatpush2.bf16.msra.mxu0 %v1506
        %5115 = vmatprep.subr.bf16.mxu0 %v1504
        %5116 = vmatpush2.bf16.msra.mxu0 %v1503
        %5117 = vmatprep.subr.bf16.mxu0 %v1501
        %5118 = vmatpush2.bf16.msra.mxu0 %v1500
        %5119 = vmatprep.subr.bf16.mxu0 %v1498
        %5120 = vmatpush2.bf16.msra.mxu0 %v1497
        %5121 = vmatprep.subr.bf16.mxu0 %v1495
        %5122 = vmatpush2.bf16.msra.mxu0 %v1494
        %5123 = vmatprep.subr.bf16.mxu0 %v1492
        %5124 = vmatpush2.bf16.msra.mxu0 %v1491
        %5125 = vmatprep.subr.bf16.mxu0 %v1489
        %5126 = vmatpush2.bf16.msra.mxu0 %v1488
        %5127 = vmatprep.subr.bf16.mxu0 %v1486
        %5128 = vmatpush2.bf16.msra.mxu0 %v1485
        %5129 = vmatprep.mubr.bf16.mxu0 %v4955
        %5130 = vmatmul.mubr.bf16.gmra.mxu0 %v4954
        %v5131 = vpop.f32.mrf.mxu0
        %v5132 = vadd.f32 %v5019, %v5131
        %v5133 = vpop.f32.mrf.mxu0
        %v5134 = vadd.f32 %v5021, %v5133
        %v5135 = vpop.f32.mrf.mxu0
        %v5136 = vadd.f32 %v5023, %v5135
        %v5137 = vpop.f32.mrf.mxu0
        %v5138 = vadd.f32 %v5025, %v5137
        %5139 = vmatprep.mubr.bf16.mxu0 %v4959
        %5140 = vmatmul.mubr.bf16.gmra.mxu0 %v4958
        %v5141 = vpop.f32.mrf.mxu0
        %v5142 = vadd.f32 %v5029, %v5141
        %v5143 = vpop.f32.mrf.mxu0
        %v5144 = vadd.f32 %v5031, %v5143
        %v5145 = vpop.f32.mrf.mxu0
        %v5146 = vadd.f32 %v5033, %v5145
        %v5147 = vpop.f32.mrf.mxu0
        %v5148 = vadd.f32 %v5035, %v5147
        %5149 = vmatprep.mubr.bf16.mxu0 %v4963
        %5150 = vmatmul.mubr.bf16.gmra.mxu0 %v4962
        %v5151 = vpop.f32.mrf.mxu0
        %v5152 = vadd.f32 %v5039, %v5151
        %v5153 = vpop.f32.mrf.mxu0
        %v5154 = vadd.f32 %v5041, %v5153
        %v5155 = vpop.f32.mrf.mxu0
        %v5156 = vadd.f32 %v5043, %v5155
        %v5157 = vpop.f32.mrf.mxu0
        %v5158 = vadd.f32 %v5045, %v5157
        %5159 = vmatprep.mubr.bf16.mxu0 %v4967
        %5160 = vmatmul.mubr.bf16.gmra.mxu0 %v4966
        %v5161 = vpop.f32.mrf.mxu0
        %v5162 = vadd.f32 %v5049, %v5161
        %v5163 = vpop.f32.mrf.mxu0
        %v5164 = vadd.f32 %v5051, %v5163
        %v5165 = vpop.f32.mrf.mxu0
        %v5166 = vadd.f32 %v5053, %v5165
        %v5167 = vpop.f32.mrf.mxu0
        %v5168 = vadd.f32 %v5055, %v5167
        %5169 = vmatprep.mubr.bf16.mxu0 %v4971
        %5170 = vmatmul.mubr.bf16.gmra.mxu0 %v4970
        %v5171 = vpop.f32.mrf.mxu0
        %v5172 = vadd.f32 %v5059, %v5171
        %v5173 = vpop.f32.mrf.mxu0
        %v5174 = vadd.f32 %v5061, %v5173
        %v5175 = vpop.f32.mrf.mxu0
        %v5176 = vadd.f32 %v5063, %v5175
        %v5177 = vpop.f32.mrf.mxu0
        %v5178 = vadd.f32 %v5065, %v5177
        %5179 = vmatprep.mubr.bf16.mxu0 %v4975
        %5180 = vmatmul.mubr.bf16.gmra.mxu0 %v4974
        %v5181 = vpop.f32.mrf.mxu0
        %v5182 = vadd.f32 %v5069, %v5181
        %v5183 = vpop.f32.mrf.mxu0
        %v5184 = vadd.f32 %v5071, %v5183
        %v5185 = vpop.f32.mrf.mxu0
        %v5186 = vadd.f32 %v5073, %v5185
        %v5187 = vpop.f32.mrf.mxu0
        %v5188 = vadd.f32 %v5075, %v5187
        %5189 = vmatprep.mubr.bf16.mxu0 %v4979
        %5190 = vmatmul.mubr.bf16.gmra.mxu0 %v4978
        %v5191 = vpop.f32.mrf.mxu0
        %v5192 = vadd.f32 %v5079, %v5191
        %v5193 = vpop.f32.mrf.mxu0
        %v5194 = vadd.f32 %v5081, %v5193
        %v5195 = vpop.f32.mrf.mxu0
        %v5196 = vadd.f32 %v5083, %v5195
        %v5197 = vpop.f32.mrf.mxu0
        %v5198 = vadd.f32 %v5085, %v5197
        %5199 = vmatprep.mubr.bf16.mxu0 %v4983
        %5200 = vmatmul.mubr.bf16.gmra.mxu0 %v4982
        %v5201 = vpop.f32.mrf.mxu0
        %v5202 = vadd.f32 %v5089, %v5201
        %v5203 = vpop.f32.mrf.mxu0
        %v5204 = vadd.f32 %v5091, %v5203
        %v5205 = vpop.f32.mrf.mxu0
        %v5206 = vadd.f32 %v5093, %v5205
        %v5207 = vpop.f32.mrf.mxu0
        %v5208 = vadd.f32 %v5095, %v5207
        %5209 = vdwg.mxu0
        %5210 = vmatprep.subr.bf16.mxu0 0
        %5211 = vmatpush1.bf16.msra.mxu0 %v1436
        %5212 = vmatprep.subr.bf16.mxu0 0
        %5213 = vmatpush1.bf16.msra.mxu0 %v1433
        %5214 = vmatprep.subr.bf16.mxu0 0
        %5215 = vmatpush1.bf16.msra.mxu0 %v1430
        %5216 = vmatprep.subr.bf16.mxu0 0
        %5217 = vmatpush1.bf16.msra.mxu0 %v1427
        %5218 = vmatprep.subr.bf16.mxu0 0
        %5219 = vmatpush1.bf16.msra.mxu0 %v1424
        %5220 = vmatprep.subr.bf16.mxu0 0
        %5221 = vmatpush1.bf16.msra.mxu0 %v1421
        %5222 = vmatprep.subr.bf16.mxu0 0
        %5223 = vmatpush1.bf16.msra.mxu0 %v1418
        %5224 = vmatprep.subr.bf16.mxu0 0
        %5225 = vmatpush1.bf16.msra.mxu0 %v1415
        %5226 = vmatprep.subr.bf16.mxu0 0
        %5227 = vmatpush2.bf16.msra.mxu0 %v1460
        %5228 = vmatprep.subr.bf16.mxu0 0
        %5229 = vmatpush2.bf16.msra.mxu0 %v1457
        %5230 = vmatprep.subr.bf16.mxu0 0
        %5231 = vmatpush2.bf16.msra.mxu0 %v1454
        %5232 = vmatprep.subr.bf16.mxu0 0
        %5233 = vmatpush2.bf16.msra.mxu0 %v1451
        %5234 = vmatprep.subr.bf16.mxu0 0
        %5235 = vmatpush2.bf16.msra.mxu0 %v1448
        %5236 = vmatprep.subr.bf16.mxu0 0
        %5237 = vmatpush2.bf16.msra.mxu0 %v1445
        %5238 = vmatprep.subr.bf16.mxu0 0
        %5239 = vmatpush2.bf16.msra.mxu0 %v1442
        %5240 = vmatprep.subr.bf16.mxu0 0
        %5241 = vmatpush2.bf16.msra.mxu0 %v1439
        %5242 = vmatprep.mubr.bf16.mxu0 %v4953
        %5243 = vmatmul.mubr.bf16.gmra.mxu0 %v4952
        %v5244 = vpop.f32.mrf.mxu0
        %v5245 = vadd.f32 %v1089, %v5244
        %v5246 = vpop.f32.mrf.mxu0
        %v5247 = vpop.f32.mrf.mxu0
        %v5248 = vadd.f32 %v1089, %v5247
        %v5249 = vpop.f32.mrf.mxu0
        %5250 = vmatprep.mubr.bf16.mxu0 %v4957
        %5251 = vmatmul.mubr.bf16.gmra.mxu0 %v4956
        %v5252 = vpop.f32.mrf.mxu0
        %v5253 = vadd.f32 %v1089, %v5252
        %v5254 = vpop.f32.mrf.mxu0
        %v5255 = vpop.f32.mrf.mxu0
        %v5256 = vadd.f32 %v1089, %v5255
        %v5257 = vpop.f32.mrf.mxu0
        %5258 = vmatprep.mubr.bf16.mxu0 %v4961
        %5259 = vmatmul.mubr.bf16.gmra.mxu0 %v4960
        %v5260 = vpop.f32.mrf.mxu0
        %v5261 = vadd.f32 %v1089, %v5260
        %v5262 = vpop.f32.mrf.mxu0
        %v5263 = vpop.f32.mrf.mxu0
        %v5264 = vadd.f32 %v1089, %v5263
        %v5265 = vpop.f32.mrf.mxu0
        %5266 = vmatprep.mubr.bf16.mxu0 %v4965
        %5267 = vmatmul.mubr.bf16.gmra.mxu0 %v4964
        %v5268 = vpop.f32.mrf.mxu0
        %v5269 = vadd.f32 %v1089, %v5268
        %v5270 = vpop.f32.mrf.mxu0
        %v5271 = vpop.f32.mrf.mxu0
        %v5272 = vadd.f32 %v1089, %v5271
        %v5273 = vpop.f32.mrf.mxu0
        %5274 = vmatprep.mubr.bf16.mxu0 %v4969
        %5275 = vmatmul.mubr.bf16.gmra.mxu0 %v4968
        %v5276 = vpop.f32.mrf.mxu0
        %v5277 = vadd.f32 %v1089, %v5276
        %v5278 = vpop.f32.mrf.mxu0
        %v5279 = vpop.f32.mrf.mxu0
        %v5280 = vadd.f32 %v1089, %v5279
        %v5281 = vpop.f32.mrf.mxu0
        %5282 = vmatprep.mubr.bf16.mxu0 %v4973
        %5283 = vmatmul.mubr.bf16.gmra.mxu0 %v4972
        %v5284 = vpop.f32.mrf.mxu0
        %v5285 = vadd.f32 %v1089, %v5284
        %v5286 = vpop.f32.mrf.mxu0
        %v5287 = vpop.f32.mrf.mxu0
        %v5288 = vadd.f32 %v1089, %v5287
        %v5289 = vpop.f32.mrf.mxu0
        %5290 = vmatprep.mubr.bf16.mxu0 %v4977
        %5291 = vmatmul.mubr.bf16.gmra.mxu0 %v4976
        %v5292 = vpop.f32.mrf.mxu0
        %v5293 = vadd.f32 %v1089, %v5292
        %v5294 = vpop.f32.mrf.mxu0
        %v5295 = vpop.f32.mrf.mxu0
        %v5296 = vadd.f32 %v1089, %v5295
        %v5297 = vpop.f32.mrf.mxu0
        %5298 = vmatprep.mubr.bf16.mxu0 %v4981
        %5299 = vmatmul.mubr.bf16.gmra.mxu0 %v4980
        %v5300 = vpop.f32.mrf.mxu0
        %v5301 = vadd.f32 %v1089, %v5300
        %v5302 = vpop.f32.mrf.mxu0
        %v5303 = vpop.f32.mrf.mxu0
        %v5304 = vadd.f32 %v1089, %v5303
        %v5305 = vpop.f32.mrf.mxu0
        %5306 = vdwg.mxu0
        %5307 = vmatprep.subr.bf16.mxu0 0
        %5308 = vmatpush1.bf16.msra.mxu0 %v1484
        %5309 = vmatprep.subr.bf16.mxu0 0
        %5310 = vmatpush1.bf16.msra.mxu0 %v1481
        %5311 = vmatprep.subr.bf16.mxu0 0
        %5312 = vmatpush1.bf16.msra.mxu0 %v1478
        %5313 = vmatprep.subr.bf16.mxu0 0
        %5314 = vmatpush1.bf16.msra.mxu0 %v1475
        %5315 = vmatprep.subr.bf16.mxu0 0
        %5316 = vmatpush1.bf16.msra.mxu0 %v1472
        %5317 = vmatprep.subr.bf16.mxu0 0
        %5318 = vmatpush1.bf16.msra.mxu0 %v1469
        %5319 = vmatprep.subr.bf16.mxu0 0
        %5320 = vmatpush1.bf16.msra.mxu0 %v1466
        %5321 = vmatprep.subr.bf16.mxu0 0
        %5322 = vmatpush1.bf16.msra.mxu0 %v1463
        %5323 = vmatprep.subr.bf16.mxu0 0
        %5324 = vmatpush2.bf16.msra.mxu0 %v1508
        %5325 = vmatprep.subr.bf16.mxu0 0
        %5326 = vmatpush2.bf16.msra.mxu0 %v1505
        %5327 = vmatprep.subr.bf16.mxu0 0
        %5328 = vmatpush2.bf16.msra.mxu0 %v1502
        %5329 = vmatprep.subr.bf16.mxu0 0
        %5330 = vmatpush2.bf16.msra.mxu0 %v1499
        %5331 = vmatprep.subr.bf16.mxu0 0
        %5332 = vmatpush2.bf16.msra.mxu0 %v1496
        %5333 = vmatprep.subr.bf16.mxu0 0
        %5334 = vmatpush2.bf16.msra.mxu0 %v1493
        %5335 = vmatprep.subr.bf16.mxu0 0
        %5336 = vmatpush2.bf16.msra.mxu0 %v1490
        %5337 = vmatprep.subr.bf16.mxu0 0
        %5338 = vmatpush2.bf16.msra.mxu0 %v1487
        %5339 = vmatprep.mubr.bf16.mxu0 %v4955
        %5340 = vmatmul.mubr.bf16.gmra.mxu0 %v4954
        %v5341 = vpop.f32.mrf.mxu0
        %v5342 = vadd.f32 %v5245, %v5341
        %v5343 = vpop.f32.mrf.mxu0
        %v5344 = vpop.f32.mrf.mxu0
        %v5345 = vadd.f32 %v5248, %v5344
        %v5346 = vpop.f32.mrf.mxu0
        %5347 = vmatprep.mubr.bf16.mxu0 %v4959
        %5348 = vmatmul.mubr.bf16.gmra.mxu0 %v4958
        %v5349 = vpop.f32.mrf.mxu0
        %v5350 = vadd.f32 %v5253, %v5349
        %v5351 = vpop.f32.mrf.mxu0
        %v5352 = vpop.f32.mrf.mxu0
        %v5353 = vadd.f32 %v5256, %v5352
        %v5354 = vpop.f32.mrf.mxu0
        %5355 = vmatprep.mubr.bf16.mxu0 %v4963
        %5356 = vmatmul.mubr.bf16.gmra.mxu0 %v4962
        %v5357 = vpop.f32.mrf.mxu0
        %v5358 = vadd.f32 %v5261, %v5357
        %v5359 = vpop.f32.mrf.mxu0
        %v5360 = vpop.f32.mrf.mxu0
        %v5361 = vadd.f32 %v5264, %v5360
        %v5362 = vpop.f32.mrf.mxu0
        %5363 = vmatprep.mubr.bf16.mxu0 %v4967
        %5364 = vmatmul.mubr.bf16.gmra.mxu0 %v4966
        %v5365 = vpop.f32.mrf.mxu0
        %v5366 = vadd.f32 %v5269, %v5365
        %v5367 = vpop.f32.mrf.mxu0
        %v5368 = vpop.f32.mrf.mxu0
        %v5369 = vadd.f32 %v5272, %v5368
        %v5370 = vpop.f32.mrf.mxu0
        %5371 = vmatprep.mubr.bf16.mxu0 %v4971
        %5372 = vmatmul.mubr.bf16.gmra.mxu0 %v4970
        %v5373 = vpop.f32.mrf.mxu0
        %v5374 = vadd.f32 %v5277, %v5373
        %v5375 = vpop.f32.mrf.mxu0
        %v5376 = vpop.f32.mrf.mxu0
        %v5377 = vadd.f32 %v5280, %v5376
        %v5378 = vpop.f32.mrf.mxu0
        %5379 = vmatprep.mubr.bf16.mxu0 %v4975
        %5380 = vmatmul.mubr.bf16.gmra.mxu0 %v4974
        %v5381 = vpop.f32.mrf.mxu0
        %v5382 = vadd.f32 %v5285, %v5381
        %v5383 = vpop.f32.mrf.mxu0
        %v5384 = vpop.f32.mrf.mxu0
        %v5385 = vadd.f32 %v5288, %v5384
        %v5386 = vpop.f32.mrf.mxu0
        %5387 = vmatprep.mubr.bf16.mxu0 %v4979
        %5388 = vmatmul.mubr.bf16.gmra.mxu0 %v4978
        %v5389 = vpop.f32.mrf.mxu0
        %v5390 = vadd.f32 %v5293, %v5389
        %v5391 = vpop.f32.mrf.mxu0
        %v5392 = vpop.f32.mrf.mxu0
        %v5393 = vadd.f32 %v5296, %v5392
        %v5394 = vpop.f32.mrf.mxu0
        %5395 = vmatprep.mubr.bf16.mxu0 %v4983
        %5396 = vmatmul.mubr.bf16.gmra.mxu0 %v4982
        %v5397 = vpop.f32.mrf.mxu0
        %v5398 = vadd.f32 %v5301, %v5397
        %v5399 = vpop.f32.mrf.mxu0
        %v5400 = vpop.f32.mrf.mxu0
        %v5401 = vadd.f32 %v5304, %v5400
        %v5402 = vpop.f32.mrf.mxu0
        %5403 = vdwg.mxu0
        %v5404 = vmax.f32 %v5132, 0.0
        %v5405 = vmax.f32 %v5134, 0.0
        %v5406 = vmax.f32 %v5342, 0.0
        %v5407 = vmax.f32 %v5136, 0.0
        %v5408 = vmax.f32 %v5138, 0.0
        %v5409 = vmax.f32 %v5345, 0.0
        %v5410 = vmax.f32 %v5142, 0.0
        %v5411 = vmax.f32 %v5144, 0.0
        %v5412 = vmax.f32 %v5350, 0.0
        %v5413 = vmax.f32 %v5146, 0.0
        %v5414 = vmax.f32 %v5148, 0.0
        %v5415 = vmax.f32 %v5353, 0.0
        %v5416 = vmax.f32 %v5152, 0.0
        %v5417 = vmax.f32 %v5154, 0.0
        %v5418 = vmax.f32 %v5358, 0.0
        %v5419 = vmax.f32 %v5156, 0.0
        %v5420 = vmax.f32 %v5158, 0.0
        %v5421 = vmax.f32 %v5361, 0.0
        %v5422 = vmax.f32 %v5162, 0.0
        %v5423 = vmax.f32 %v5164, 0.0
        %v5424 = vmax.f32 %v5366, 0.0
        %v5425 = vmax.f32 %v5166, 0.0
        %v5426 = vmax.f32 %v5168, 0.0
        %v5427 = vmax.f32 %v5369, 0.0
        %v5428 = vmax.f32 %v5172, 0.0
        %v5429 = vmax.f32 %v5174, 0.0
        %v5430 = vmax.f32 %v5374, 0.0
        %v5431 = vmax.f32 %v5176, 0.0
        %v5432 = vmax.f32 %v5178, 0.0
        %v5433 = vmax.f32 %v5377, 0.0
        %v5434 = vmax.f32 %v5182, 0.0
        %v5435 = vmax.f32 %v5184, 0.0
        %v5436 = vmax.f32 %v5382, 0.0
        %v5437 = vmax.f32 %v5186, 0.0
        %v5438 = vmax.f32 %v5188, 0.0
        %v5439 = vmax.f32 %v5385, 0.0
        %v5440 = vmax.f32 %v5192, 0.0
        %v5441 = vmax.f32 %v5194, 0.0
        %v5442 = vmax.f32 %v5390, 0.0
        %v5443 = vmax.f32 %v5196, 0.0
        %v5444 = vmax.f32 %v5198, 0.0
        %v5445 = vmax.f32 %v5393, 0.0
        %v5446 = vmax.f32 %v5202, 0.0
        %v5447 = vmax.f32 %v5204, 0.0
        %v5448 = vmax.f32 %v5398, 0.0
        %v5449 = vmax.f32 %v5206, 0.0
        %v5450 = vmax.f32 %v5208, 0.0
        %v5451 = vmax.f32 %v5401, 0.0
        %v5452 = vmul.f32 %v5404, %v2077
        %v5453 = vmul.f32 %v5405, %v2081
        %v5454 = vmul.f32 %v5406, %v2085
        %v5455 = vmul.f32 %v5407, %v2077
        %v5456 = vmul.f32 %v5408, %v2081
        %v5457 = vmul.f32 %v5409, %v2085
        %v5458 = vmul.f32 %v5410, %v2077
        %v5459 = vmul.f32 %v5411, %v2081
        %v5460 = vmul.f32 %v5412, %v2085
        %v5461 = vmul.f32 %v5413, %v2077
        %v5462 = vmul.f32 %v5414, %v2081
        %v5463 = vmul.f32 %v5415, %v2085
        %v5464 = vmul.f32 %v5416, %v2077
        %v5465 = vmul.f32 %v5417, %v2081
        %v5466 = vmul.f32 %v5418, %v2085
        %v5467 = vmul.f32 %v5419, %v2077
        %v5468 = vmul.f32 %v5420, %v2081
        %v5469 = vmul.f32 %v5421, %v2085
        %v5470 = vmul.f32 %v5422, %v2077
        %v5471 = vmul.f32 %v5423, %v2081
        %v5472 = vmul.f32 %v5424, %v2085
        %v5473 = vmul.f32 %v5425, %v2077
        %v5474 = vmul.f32 %v5426, %v2081
        %v5475 = vmul.f32 %v5427, %v2085
        %v5476 = vmul.f32 %v5428, %v2077
        %v5477 = vmul.f32 %v5429, %v2081
        %v5478 = vmul.f32 %v5430, %v2085
        %v5479 = vmul.f32 %v5431, %v2077
        %v5480 = vmul.f32 %v5432, %v2081
        %v5481 = vmul.f32 %v5433, %v2085
        %v5482 = vmul.f32 %v5434, %v2077
        %v5483 = vmul.f32 %v5435, %v2081
        %v5484 = vmul.f32 %v5436, %v2085
        %v5485 = vmul.f32 %v5437, %v2077
        %v5486 = vmul.f32 %v5438, %v2081
        %v5487 = vmul.f32 %v5439, %v2085
        %v5488 = vmul.f32 %v5440, %v2077
        %v5489 = vmul.f32 %v5441, %v2081
        %v5490 = vmul.f32 %v5442, %v2085
        %v5491 = vmul.f32 %v5443, %v2077
        %v5492 = vmul.f32 %v5444, %v2081
        %v5493 = vmul.f32 %v5445, %v2085
        %v5494 = vmul.f32 %v5446, %v2077
        %v5495 = vmul.f32 %v5447, %v2081
        %v5496 = vmul.f32 %v5448, %v2085
        %v5497 = vmul.f32 %v5449, %v2077
        %v5498 = vmul.f32 %v5450, %v2081
        %v5499 = vmul.f32 %v5451, %v2085
        %v5500 = vadd.f32 %v5452, %v5453
        %v5501 = vadd.f32 %v5500, %v5454
        %5502 = vadd.xlane.f32.xlu0 %v5501
        %v5503 = vpop.xlane.xlu0 %5502
        %v5504 = vadd.f32 %v5455, %v5456
        %v5505 = vadd.f32 %v5504, %v5457
        %5506 = vadd.xlane.f32.xlu0 %v5505
        %v5507 = vpop.xlane.xlu0 %5506
        %v5508 = vadd.f32 %v5458, %v5459
        %v5509 = vadd.f32 %v5508, %v5460
        %5510 = vadd.xlane.f32.xlu0 %v5509
        %v5511 = vpop.xlane.xlu0 %5510
        %v5512 = vadd.f32 %v5461, %v5462
        %v5513 = vadd.f32 %v5512, %v5463
        %5514 = vadd.xlane.f32.xlu0 %v5513
        %v5515 = vpop.xlane.xlu0 %5514
        %v5516 = vadd.f32 %v5464, %v5465
        %v5517 = vadd.f32 %v5516, %v5466
        %5518 = vadd.xlane.f32.xlu0 %v5517
        %v5519 = vpop.xlane.xlu0 %5518
        %v5520 = vadd.f32 %v5467, %v5468
        %v5521 = vadd.f32 %v5520, %v5469
        %5522 = vadd.xlane.f32.xlu0 %v5521
        %v5523 = vpop.xlane.xlu0 %5522
        %v5524 = vadd.f32 %v5470, %v5471
        %v5525 = vadd.f32 %v5524, %v5472
        %5526 = vadd.xlane.f32.xlu0 %v5525
        %v5527 = vpop.xlane.xlu0 %5526
        %v5528 = vadd.f32 %v5473, %v5474
        %v5529 = vadd.f32 %v5528, %v5475
        %5530 = vadd.xlane.f32.xlu0 %v5529
        %v5531 = vpop.xlane.xlu0 %5530
        %v5532 = vadd.f32 %v5476, %v5477
        %v5533 = vadd.f32 %v5532, %v5478
        %5534 = vadd.xlane.f32.xlu0 %v5533
        %v5535 = vpop.xlane.xlu0 %5534
        %v5536 = vadd.f32 %v5479, %v5480
        %v5537 = vadd.f32 %v5536, %v5481
        %5538 = vadd.xlane.f32.xlu0 %v5537
        %v5539 = vpop.xlane.xlu0 %5538
        %v5540 = vadd.f32 %v5482, %v5483
        %v5541 = vadd.f32 %v5540, %v5484
        %5542 = vadd.xlane.f32.xlu0 %v5541
        %v5543 = vpop.xlane.xlu0 %5542
        %v5544 = vadd.f32 %v5485, %v5486
        %v5545 = vadd.f32 %v5544, %v5487
        %5546 = vadd.xlane.f32.xlu0 %v5545
        %v5547 = vpop.xlane.xlu0 %5546
        %v5548 = vadd.f32 %v5488, %v5489
        %v5549 = vadd.f32 %v5548, %v5490
        %5550 = vadd.xlane.f32.xlu0 %v5549
        %v5551 = vpop.xlane.xlu0 %5550
        %v5552 = vadd.f32 %v5491, %v5492
        %v5553 = vadd.f32 %v5552, %v5493
        %5554 = vadd.xlane.f32.xlu0 %v5553
        %v5555 = vpop.xlane.xlu0 %5554
        %v5556 = vadd.f32 %v5494, %v5495
        %v5557 = vadd.f32 %v5556, %v5496
        %5558 = vadd.xlane.f32.xlu0 %v5557
        %v5559 = vpop.xlane.xlu0 %5558
        %v5560 = vadd.f32 %v5497, %v5498
        %v5561 = vadd.f32 %v5560, %v5499
        %5562 = vadd.xlane.f32.xlu0 %v5561
        %v5563 = vpop.xlane.xlu0 %5562
        %v5564 = vadd.f32 %v5503, %v2201
        %v5565 = vadd.f32 %v5507, %v2201
        %v5566 = vadd.f32 %v5511, %v2201
        %v5567 = vadd.f32 %v5515, %v2201
        %v5568 = vadd.f32 %v5519, %v2201
        %v5569 = vadd.f32 %v5523, %v2201
        %v5570 = vadd.f32 %v5527, %v2201
        %v5571 = vadd.f32 %v5531, %v2201
        %v5572 = vadd.f32 %v5535, %v2201
        %v5573 = vadd.f32 %v5539, %v2201
        %v5574 = vadd.f32 %v5543, %v2201
        %v5575 = vadd.f32 %v5547, %v2201
        %v5576 = vadd.f32 %v5551, %v2201
        %v5577 = vadd.f32 %v5555, %v2201
        %v5578 = vadd.f32 %v5559, %v2201
        %v5579 = vadd.f32 %v5563, %v2201
        %v5580 = vmax.f32 %v5564, 0.0
        %v5581 = vmax.f32 %v5565, 0.0
        %v5582 = vmax.f32 %v5566, 0.0
        %v5583 = vmax.f32 %v5567, 0.0
        %v5584 = vmax.f32 %v5568, 0.0
        %v5585 = vmax.f32 %v5569, 0.0
        %v5586 = vmax.f32 %v5570, 0.0
        %v5587 = vmax.f32 %v5571, 0.0
        %v5588 = vmax.f32 %v5572, 0.0
        %v5589 = vmax.f32 %v5573, 0.0
        %v5590 = vmax.f32 %v5574, 0.0
        %v5591 = vmax.f32 %v5575, 0.0
        %v5592 = vmax.f32 %v5576, 0.0
        %v5593 = vmax.f32 %v5577, 0.0
        %v5594 = vmax.f32 %v5578, 0.0
        %v5595 = vmax.f32 %v5579, 0.0
        %s5596 = sld [smem:[#allocation8 + $0x3]]
        %v5597 = vstv %s5596
        %v5598 = vmul.f32 %v5597, %v5580
        %v5599 = vmul.f32 %v5597, %v5581
        %v5600 = vmul.f32 %v5597, %v5582
        %v5601 = vmul.f32 %v5597, %v5583
        %v5602 = vmul.f32 %v5597, %v5584
        %v5603 = vmul.f32 %v5597, %v5585
        %v5604 = vmul.f32 %v5597, %v5586
        %v5605 = vmul.f32 %v5597, %v5587
        %v5606 = vmul.f32 %v5597, %v5588
        %v5607 = vmul.f32 %v5597, %v5589
        %v5608 = vmul.f32 %v5597, %v5590
        %v5609 = vmul.f32 %v5597, %v5591
        %v5610 = vmul.f32 %v5597, %v5592
        %v5611 = vmul.f32 %v5597, %v5593
        %v5612 = vmul.f32 %v5597, %v5594
        %v5613 = vmul.f32 %v5597, %v5595
        %v5614 = vadd.f32 %v4488, %v5598
        %v5615 = vadd.f32 %v4489, %v5599
        %v5616 = vadd.f32 %v4490, %v5600
        %v5617 = vadd.f32 %v4491, %v5601
        %v5618 = vadd.f32 %v4492, %v5602
        %v5619 = vadd.f32 %v4493, %v5603
        %v5620 = vadd.f32 %v4494, %v5604
        %v5621 = vadd.f32 %v4495, %v5605
        %v5622 = vadd.f32 %v4496, %v5606
        %v5623 = vadd.f32 %v4497, %v5607
        %v5624 = vadd.f32 %v4498, %v5608
        %v5625 = vadd.f32 %v4499, %v5609
        %v5626 = vadd.f32 %v4500, %v5610
        %v5627 = vadd.f32 %v4501, %v5611
        %v5628 = vadd.f32 %v4502, %v5612
        %v5629 = vadd.f32 %v4503, %v5613
        %v5630 = vstv %s501
        %v5631 = vadd.f32 %v5614, %v5630
        %v5632 = vadd.f32 %v5615, %v5630
        %v5633 = vadd.f32 %v5616, %v5630
        %v5634 = vadd.f32 %v5617, %v5630
        %v5635 = vadd.f32 %v5618, %v5630
        %v5636 = vadd.f32 %v5619, %v5630
        %v5637 = vadd.f32 %v5620, %v5630
        %v5638 = vadd.f32 %v5621, %v5630
        %v5639 = vadd.f32 %v5622, %v5630
        %v5640 = vadd.f32 %v5623, %v5630
        %v5641 = vadd.f32 %v5624, %v5630
        %v5642 = vadd.f32 %v5625, %v5630
        %v5643 = vadd.f32 %v5626, %v5630
        %v5644 = vadd.f32 %v5627, %v5630
        %v5645 = vadd.f32 %v5628, %v5630
        %v5646 = vadd.f32 %v5629, %v5630
        %5647 = vst [vmem:[%s357] sm:$0xff] %v5631
        %5648 = vst [vmem:[%s357 + $0x8] sm:$0xff] %v5632
        %5649 = vst [vmem:[%s357 + $0x10] sm:$0xff] %v5633
        %5650 = vst [vmem:[%s357 + $0x18] sm:$0xff] %v5634
        %5651 = vst [vmem:[%s357 + $0x20] sm:$0xff] %v5635
        %5652 = vst [vmem:[%s357 + $0x28] sm:$0xff] %v5636
        %5653 = vst [vmem:[%s357 + $0x30] sm:$0xff] %v5637
        %5654 = vst [vmem:[%s357 + $0x38] sm:$0xff] %v5638
        %5655 = vst [vmem:[%s357 + $0x40] sm:$0xff] %v5639
        %5656 = vst [vmem:[%s357 + $0x48] sm:$0xff] %v5640
        %5657 = vst [vmem:[%s357 + $0x50] sm:$0xff] %v5641
        %5658 = vst [vmem:[%s357 + $0x58] sm:$0xff] %v5642
        %5659 = vst [vmem:[%s357 + $0x60] sm:$0xff] %v5643
        %5660 = vst [vmem:[%s357 + $0x68] sm:$0xff] %v5644
        %5661 = vst [vmem:[%s357 + $0x70] sm:$0xff] %v5645
        %5662 = vst [vmem:[%s357 + $0x78] sm:$0xff] %v5646
        %s5663 = sand.u32 %s229, 1
        %s5664 = scalar_lea.sflag [#allocation6], %s5663
        %s5665 = sand.u32 %s229, 1
        %s5666 = smul.addr %s5665, 128
        %s5667 = scalar_lea.vmem [#allocation9], %s5666
        // Predicated region
        $region65: #{tpu_custom_call.1} parent=55 // pred_check
          %p5668 = pneg %p239
        $region66: #{tpu_custom_call.1} parent=55 // pred_check_branch
          %5670 = sbr.rel (%p5668) target = $region68
        $region67: #{tpu_custom_call.1} parent=55 // pred_region
          %s5671 = smul.u32 16, %s27
          %s5673 = ssub.s32 2048, 2048
          %5674 = vsyncadd %s5664, %s5673
          %s5675 = smul.addr %s5671, 128
          %s5676 = scalar_lea.hbm %s9, %s5675
          %s5677 = sshll.u32 %s5667, 4
          %s5678 = int_to_ptr.vmem [resolvable:$true] %s5677
          %5683 = dma.vmem_to_hbm [thread:$0]  %s5678, 2048, %s5676, %s5664, 128, 128, 8
        $region68: #{tpu_custom_call.1} parent=55 // pred_fallthru
          _
      $region56: #{tpu_custom_call.1} parent=5 // pred_fallthru
        _
      %p5684 = scmp.le.s32.totalorder 2, %s22
      // Predicated region
      $region69: #{tpu_custom_call.1} parent=5 // pred_check
        %p5685 = pneg %p5684
      $region70: #{tpu_custom_call.1} parent=5 // pred_check_branch
        %5687 = sbr.rel (%p5685) target = $region72
      $region71: #{tpu_custom_call.1} parent=5 // pred_region
        %s5688 = ssub.s32 %s22, 2
        // Predicated region
        $region73: #{tpu_custom_call.1} parent=71 // pred_check
          %p5689 = pneg %p245
        $region74: #{tpu_custom_call.1} parent=71 // pred_check_branch
          %5691 = sbr.rel (%p5689) target = $region76
        $region75: #{tpu_custom_call.1} parent=71 // pred_region
          %s5692 = sand.u32 %s230, 1
          %s5693 = scalar_lea.sflag [#allocation6], %s5692
          %s5694 = sand.u32 %s230, 1
          %s5695 = smul.addr %s5694, 128
          %s5696 = scalar_lea.vmem [#allocation9], %s5695
          %5697 = dma.done %s5693, 2048
        $region76: #{tpu_custom_call.1} parent=71 // pred_fallthru
          _
      $region72: #{tpu_custom_call.1} parent=5 // pred_fallthru
        _
    $region6: #{tpu_custom_call.1} parent=1 // loop_footer
      %s26 = sadd.s32 1, %s22
    $region7: #{tpu_custom_call.1} parent=1 // loop_footer_branch
      %21 = sbr.rel target = $region3
    $region8: #{tpu_custom_call.1} parent=1 // loop_exit
      _
    %5698 = vsyncpa [#allocation5], 1
    %s5699 = scalar_lea.sflag [#allocation5], 1
    %5700 = vsyncpa %s5699, 1
    %5701 = vsyncpa [#allocation6], 1
    %s5702 = scalar_lea.sflag [#allocation6], 1
    %5703 = vsyncpa %s5702, 1
    %5704 = vsyncpa [#allocation7], 1
    %s5705 = scalar_lea.sflag [#allocation7], 1
    %5706 = vsyncpa %s5705, 1

</llo_original>
